<compile_context>
chip_gen: v5e
topology: v5e:2x2
jax: 0.10.0
libtpu: 0.0.40
codegen_flags: <defaults>
</compile_context>

<pallas_src>
import jax
import jax.numpy as jnp
from jax.experimental import pallas as pl
from jax.experimental.pallas import tpu as pltpu

K = 3          # conv kernel size implied by padding=1 (same-size output)
BN_EPS = 1e-5


# ---------------------------------------------------------------------------
# Fused kernel: NCHW->NHWC -> pad -> conv1 (im2col matmul) -> pad -> conv2
# (channel-major im2col matmul) -> BatchNorm2d(train) -> NCHW-ordered store.
# ---------------------------------------------------------------------------
def _bottle_fused_kernel(x_ref, w1_ref, b1_ref, w2_ref, g_ref, bt_ref,
                         o_ref, xp1_ref, xp2_ref):
    # x_ref  : (N, Cin, H*W)       flat NCHW input (no edge transpose)
    # w1_ref : (9*Cin, C1)         conv1 weight, rows ordered (dy, dx, cin)
    # b1_ref : (1, C1)             conv1 bias
    # w2_ref : (9*C1, C2)          conv2 weight, rows ordered (dy, dx, c1)
    # g_ref  : (C2, 1), bt_ref: (C2, 1)   BN gamma / beta, channel-major
    # o_ref  : (N*C2, H*W)         output; row=(n,c), col=(h,w) == flat NCHW
    # xp1_ref: (N, H+2, W+2, Cin)  VMEM scratch: zero-padded NHWC input
    # xp2_ref: (N, H+2, W+2, C1)   VMEM scratch: zero-padded conv1 output
    N, Hp2, Wp2, Cin = xp1_ref.shape
    H, W = Hp2 - 2, Wp2 - 2
    C1 = xp2_ref.shape[-1]
    C2 = w2_ref.shape[1]
    HW = H * W
    M = N * HW

    # ---- in-kernel NCHW -> NHWC (keeps the XLA graph free of edge kernels) --
    x_nhwc = jnp.transpose(x_ref[...], (0, 2, 1)).reshape(N, H, W, Cin)

    # ---- 'same' padding entirely in VMEM (no jnp.pad / extra HBM pass) -----
    xp1_ref[...] = jnp.zeros(xp1_ref.shape, xp1_ref.dtype)
    xp1_ref[:, 1:H + 1, 1:W + 1, :] = x_nhwc

    # ---- conv1: one im2col matmul (M, 9*Cin) @ (9*Cin, C1) -----------------
    taps1 = [xp1_ref[:, dy:dy + H, dx:dx + W, :].reshape(M, Cin)
             for dy in range(K) for dx in range(K)]
    p1 = jnp.concatenate(taps1, axis=1)                          # (M, 9*Cin)
    h1 = jnp.dot(p1, w1_ref[...], preferred_element_type=jnp.float32)
    h1 = h1 + b1_ref[...]                                        # (M, C1)

    # ---- pad the conv1 activation in VMEM (intermediate never hits HBM) ----
    xp2_ref[...] = jnp.zeros(xp2_ref.shape, xp2_ref.dtype)
    xp2_ref[:, 1:H + 1, 1:W + 1, :] = h1.reshape(N, H, W, C1)

    # ---- conv2: im2col matmul, channel-major so M (= N*H*W) is the lane ----
    # dim: dense vregs/stores and free NHWC->NCHW at the output.
    taps2 = [xp2_ref[:, dy:dy + H, dx:dx + W, :].reshape(M, C1)
             for dy in range(K) for dx in range(K)]
    p2 = jnp.concatenate(taps2, axis=1)                          # (M, 9*C1)
    w2t = jnp.transpose(w2_ref[...])                             # (C2, 9*C1), tiny
    # contract the last dim of both operands (the q @ k.T pattern) -> (C2, M)
    h2 = jax.lax.dot_general(w2t, p2,
                             dimension_numbers=(((1,), (1,)), ((), ())),
                             preferred_element_type=jnp.float32)
    # NOTE: conv2's bias is intentionally omitted — training-mode BatchNorm
    # subtracts the per-channel batch mean immediately after, so it cancels.

    # ---- BatchNorm2d (training mode): biased batch stats over N*H*W --------
    mean = jnp.mean(h2, axis=1, keepdims=True)                   # (C2, 1)
    var = jnp.mean((h2 - mean) ** 2, axis=1, keepdims=True)      # biased var
    scale = jax.lax.rsqrt(var + BN_EPS) * g_ref[...]             # (C2, 1)
    y = (h2 - mean) * scale + bt_ref[...]                        # (C2, M)

    # ---- lane-dense store; rows (n, c), cols (h, w): already NCHW order ----
    for n in range(N):                                           # N small & static
        o_ref[n * C2:(n + 1) * C2, :] = (
            y[:, n * HW:(n + 1) * HW].astype(o_ref.dtype))


# ---------------------------------------------------------------------------
# Bottle forward (wrapper): NCHW in -> NCHW out, matching the PyTorch module.
# Every edge op around the pallas_call is a metadata-only reshape: the whole
# forward is exactly one TPU kernel launch.
# ---------------------------------------------------------------------------
@jax.jit
def bottle_forward(x_nchw, params):
    N, Cin, H, W = x_nchw.shape
    C1 = params["w1"].shape[-1]
    C2 = params["w2"].shape[-1]

    x_flat = x_nchw.reshape(N, Cin, H * W)               # metadata-only
    w1f = params["w1"].reshape(K * K * Cin, C1)          # (9*Cin, C1), metadata-only
    w2f = params["w2"].reshape(K * K * C1, C2)           # (9*C1, C2), metadata-only
    b1 = params["b1"].reshape(1, C1)
    gamma = params["gamma"].reshape(C2, 1)
    beta = params["beta"].reshape(C2, 1)
    # params["b2"] is deliberately not passed: exactly cancelled by BN's mean
    # subtraction in training mode (dead compute + dead DMA otherwise).

    flops = 2 * N * H * W * (K * K * Cin * C1 + K * K * C1 * C2)
    bytes_accessed = 4 * (x_flat.size + w1f.size + w2f.size + b1.size
                          + gamma.size + beta.size + N * C2 * H * W)

    vmem = pltpu.MemorySpace.VMEM
    out_flat = pl.pallas_call(
        _bottle_fused_kernel,
        out_shape=jax.ShapeDtypeStruct((N * C2, H * W), jnp.float32),
        in_specs=[pl.BlockSpec(memory_space=vmem)] * 6,
        out_specs=pl.BlockSpec(memory_space=vmem),
        scratch_shapes=[
            pltpu.VMEM((N, H + 2, W + 2, Cin), jnp.float32),
            pltpu.VMEM((N, H + 2, W + 2, C1), jnp.float32),
        ],
        cost_estimate=pl.CostEstimate(flops=flops, transcendentals=C2,
                                      bytes_accessed=bytes_accessed),
    )(x_flat, w1f, b1, w2f, gamma, beta)

    # (n*C2 + c, h*W + w) is flat NCHW order -> metadata-only reshape.
    return out_flat.reshape(N, C2, H, W)


def init_params(key, complex_=1):
    c_in = complex_ * 2 ** 3      # 8
    c_out = complex_ * 2 ** 4     # 16
    k1, k2, k3, k4, _ = jax.random.split(key, 5)
    # Deterministic synthetic init; conv weights in HWIO layout (PyTorch's OIHW
    # maps to this via transpose(2, 3, 1, 0)); BN params mirror BatchNorm2d.
    return {
        "w1": 0.1 * jax.random.normal(k1, (K, K, c_in, c_out), jnp.float32),
        "b1": 0.1 * jax.random.normal(k2, (c_out,), jnp.float32),
        "w2": 0.1 * jax.random.normal(k3, (K, K, c_out, c_out), jnp.float32),
        "b2": 0.1 * jax.random.normal(k4, (c_out,), jnp.float32),
        "gamma": jnp.ones((c_out,), jnp.float32),   # BatchNorm2d default weight
        "beta": jnp.zeros((c_out,), jnp.float32),   # BatchNorm2d default bias
    }


def _reference(x_nchw, params):
    """Pure-JAX reference (lax.conv + batch-stats BN), includes b2."""
    x = jnp.transpose(x_nchw, (0, 2, 3, 1))
    dn = jax.lax.conv_dimension_numbers(x.shape, params["w1"].shape,
                                        ("NHWC", "HWIO", "NHWC"))
    h = jax.lax.conv_general_dilated(x, params["w1"], (1, 1), "SAME",
                                     dimension_numbers=dn) + params["b1"]
    dn2 = jax.lax.conv_dimension_numbers(h.shape, params["w2"].shape,
                                         ("NHWC", "HWIO", "NHWC"))
    h = jax.lax.conv_general_dilated(h, params["w2"], (1, 1), "SAME",
                                     dimension_numbers=dn2) + params["b2"]
    mean = jnp.mean(h, axis=(0, 1, 2), keepdims=True)
    var = jnp.mean((h - mean) ** 2, axis=(0, 1, 2), keepdims=True)
    h = (h - mean) * jax.lax.rsqrt(var + BN_EPS) * params["gamma"] + params["beta"]
    return jnp.transpose(h, (0, 3, 1, 2))


if __name__ == "__main__":
    key = jax.random.PRNGKey(0)
    kx, kp = jax.random.split(key)

    complex_ = 1                                   # conv1: 8 -> 16 channels
    N, C_in, Hs, Ws = 2, complex_ * 8, 16, 16
    x = jax.random.normal(kx, (N, C_in, Hs, Ws), jnp.float32)   # NCHW, like PyTorch
    params = init_params(kp, complex_)

    out = jax.block_until_ready(bottle_forward(x, params))

    ref = _reference(x, params)
    assert out.shape == (N, complex_ * 16, Hs, Ws)
    assert jnp.allclose(out, ref, rtol=1e-3, atol=1e-3), "mismatch vs reference"

    print("KERNEL_OK")
</pallas_src>

<mosaic_0001>
module attributes {stable_mosaic.version = 11 : i64} {
  func.func @_bottle_fused_kernel(%arg0: memref<2x8x256xf32, #tpu.memory_space<vmem>>, %arg1: memref<72x16xf32, #tpu.memory_space<vmem>>, %arg2: memref<1x16xf32, #tpu.memory_space<vmem>>, %arg3: memref<144x16xf32, #tpu.memory_space<vmem>>, %arg4: memref<16x1xf32, #tpu.memory_space<vmem>>, %arg5: memref<16x1xf32, #tpu.memory_space<vmem>>, %arg6: memref<32x256xf32, #tpu.memory_space<vmem>>, %arg7: memref<2x18x18x8xf32, #tpu.memory_space<vmem>>, %arg8: memref<2x18x18x16xf32, #tpu.memory_space<vmem>>) attributes {dimension_semantics = [], scalar_prefetch = 0 : i64, scratch_operands = 2 : i64, tpu.core_type = #tpu.core_type<tc>} {
    %c0 = arith.constant 0 : index
    %c0_0 = arith.constant 0 : index
    %c0_1 = arith.constant 0 : index
    %0 = vector.load %arg0[%c0, %c0_0, %c0_1] : memref<2x8x256xf32, #tpu.memory_space<vmem>>, vector<2x8x256xf32>
    %1 = tpu.transpose %0, [0, 2, 1] : vector<2x8x256xf32> -> vector<2x256x8xf32>
    %2 = vector.shape_cast %1 : vector<2x256x8xf32> to vector<2x16x16x8xf32>
    %cst = arith.constant 0.000000e+00 : f32
    %3 = vector.broadcast %cst : f32 to vector<2x18x18x8xf32>
    %c0_2 = arith.constant 0 : index
    %c0_3 = arith.constant 0 : index
    %c0_4 = arith.constant 0 : index
    %c0_5 = arith.constant 0 : index
    %4 = vector.load %arg7[%c0_2, %c0_3, %c0_4, %c0_5] : memref<2x18x18x8xf32, #tpu.memory_space<vmem>>, vector<2x18x18x8xf32>
    tpu.vector_store %arg7[%c0_2, %c0_3, %c0_4, %c0_5], %3 {strides = array<i32>} : memref<2x18x18x8xf32, #tpu.memory_space<vmem>>, vector<2x18x18x8xf32>,
    %c0_6 = arith.constant 0 : index
    %c1 = arith.constant 1 : index
    %c1_7 = arith.constant 1 : index
    %c0_8 = arith.constant 0 : index
    %5 = vector.load %arg7[%c0_6, %c1, %c1_7, %c0_8] : memref<2x18x18x8xf32, #tpu.memory_space<vmem>>, vector<2x16x16x8xf32>
    tpu.vector_store %arg7[%c0_6, %c1, %c1_7, %c0_8], %2 {strides = array<i32>} : memref<2x18x18x8xf32, #tpu.memory_space<vmem>>, vector<2x16x16x8xf32>,
    %c0_9 = arith.constant 0 : index
    %c0_10 = arith.constant 0 : index
    %c0_11 = arith.constant 0 : index
    %c0_12 = arith.constant 0 : index
    %6 = vector.load %arg7[%c0_9, %c0_10, %c0_11, %c0_12] : memref<2x18x18x8xf32, #tpu.memory_space<vmem>>, vector<2x16x16x8xf32>
    %7 = vector.shape_cast %6 : vector<2x16x16x8xf32> to vector<512x8xf32>
    %c0_13 = arith.constant 0 : index
    %c0_14 = arith.constant 0 : index
    %c1_15 = arith.constant 1 : index
    %c0_16 = arith.constant 0 : index
    %8 = vector.load %arg7[%c0_13, %c0_14, %c1_15, %c0_16] : memref<2x18x18x8xf32, #tpu.memory_space<vmem>>, vector<2x16x16x8xf32>
    %9 = vector.shape_cast %8 : vector<2x16x16x8xf32> to vector<512x8xf32>
    %c0_17 = arith.constant 0 : index
    %c0_18 = arith.constant 0 : index
    %c2 = arith.constant 2 : index
    %c0_19 = arith.constant 0 : index
    %10 = vector.load %arg7[%c0_17, %c0_18, %c2, %c0_19] : memref<2x18x18x8xf32, #tpu.memory_space<vmem>>, vector<2x16x16x8xf32>
    %11 = vector.shape_cast %10 : vector<2x16x16x8xf32> to vector<512x8xf32>
    %c0_20 = arith.constant 0 : index
    %c1_21 = arith.constant 1 : index
    %c0_22 = arith.constant 0 : index
    %c0_23 = arith.constant 0 : index
    %12 = vector.load %arg7[%c0_20, %c1_21, %c0_22, %c0_23] : memref<2x18x18x8xf32, #tpu.memory_space<vmem>>, vector<2x16x16x8xf32>
    %13 = vector.shape_cast %12 : vector<2x16x16x8xf32> to vector<512x8xf32>
    %c0_24 = arith.constant 0 : index
    %c1_25 = arith.constant 1 : index
    %c1_26 = arith.constant 1 : index
    %c0_27 = arith.constant 0 : index
    %14 = vector.load %arg7[%c0_24, %c1_25, %c1_26, %c0_27] : memref<2x18x18x8xf32, #tpu.memory_space<vmem>>, vector<2x16x16x8xf32>
    %15 = vector.shape_cast %14 : vector<2x16x16x8xf32> to vector<512x8xf32>
    %c0_28 = arith.constant 0 : index
    %c1_29 = arith.constant 1 : index
    %c2_30 = arith.constant 2 : index
    %c0_31 = arith.constant 0 : index
    %16 = vector.load %arg7[%c0_28, %c1_29, %c2_30, %c0_31] : memref<2x18x18x8xf32, #tpu.memory_space<vmem>>, vector<2x16x16x8xf32>
    %17 = vector.shape_cast %16 : vector<2x16x16x8xf32> to vector<512x8xf32>
    %c0_32 = arith.constant 0 : index
    %c2_33 = arith.constant 2 : index
    %c0_34 = arith.constant 0 : index
    %c0_35 = arith.constant 0 : index
    %18 = vector.load %arg7[%c0_32, %c2_33, %c0_34, %c0_35] : memref<2x18x18x8xf32, #tpu.memory_space<vmem>>, vector<2x16x16x8xf32>
    %19 = vector.shape_cast %18 : vector<2x16x16x8xf32> to vector<512x8xf32>
    %c0_36 = arith.constant 0 : index
    %c2_37 = arith.constant 2 : index
    %c1_38 = arith.constant 1 : index
    %c0_39 = arith.constant 0 : index
    %20 = vector.load %arg7[%c0_36, %c2_37, %c1_38, %c0_39] : memref<2x18x18x8xf32, #tpu.memory_space<vmem>>, vector<2x16x16x8xf32>
    %21 = vector.shape_cast %20 : vector<2x16x16x8xf32> to vector<512x8xf32>
    %c0_40 = arith.constant 0 : index
    %c2_41 = arith.constant 2 : index
    %c2_42 = arith.constant 2 : index
    %c0_43 = arith.constant 0 : index
    %22 = vector.load %arg7[%c0_40, %c2_41, %c2_42, %c0_43] : memref<2x18x18x8xf32, #tpu.memory_space<vmem>>, vector<2x16x16x8xf32>
    %23 = vector.shape_cast %22 : vector<2x16x16x8xf32> to vector<512x8xf32>
    %24 = tpu.concatenate %7, %9, %11, %13, %15, %17, %19, %21, %23 in 1 : vector<512x8xf32>, vector<512x8xf32>, vector<512x8xf32>, vector<512x8xf32>, vector<512x8xf32>, vector<512x8xf32>, vector<512x8xf32>, vector<512x8xf32>, vector<512x8xf32> -> vector<512x72xf32>
    %c0_44 = arith.constant 0 : index
    %c0_45 = arith.constant 0 : index
    %25 = vector.load %arg1[%c0_44, %c0_45] : memref<72x16xf32, #tpu.memory_space<vmem>>, vector<72x16xf32>
    %cst_46 = arith.constant dense<0.000000e+00> : vector<512x16xf32>
    %26 = tpu.matmul %24, %25, %cst_46 {dimension_numbers = #tpu.dot_dimension_numbers<[1], [0], [0], [1], [0, 0, 1, 1], [], []>} : vector<512x72xf32>, vector<72x16xf32>, vector<512x16xf32> -> vector<512x16xf32>
    %c0_47 = arith.constant 0 : index
    %c0_48 = arith.constant 0 : index
    %27 = vector.load %arg2[%c0_47, %c0_48] : memref<1x16xf32, #tpu.memory_space<vmem>>, vector<1x16xf32>
    %28 = vector.broadcast %27 : vector<1x16xf32> to vector<512x16xf32>
    %29 = arith.addf %26, %28 : vector<512x16xf32>
    %cst_49 = arith.constant 0.000000e+00 : f32
    %30 = vector.broadcast %cst_49 : f32 to vector<2x18x18x16xf32>
    %c0_50 = arith.constant 0 : index
    %c0_51 = arith.constant 0 : index
    %c0_52 = arith.constant 0 : index
    %c0_53 = arith.constant 0 : index
    %31 = vector.load %arg8[%c0_50, %c0_51, %c0_52, %c0_53] : memref<2x18x18x16xf32, #tpu.memory_space<vmem>>, vector<2x18x18x16xf32>
    tpu.vector_store %arg8[%c0_50, %c0_51, %c0_52, %c0_53], %30 {strides = array<i32>} : memref<2x18x18x16xf32, #tpu.memory_space<vmem>>, vector<2x18x18x16xf32>,
    %32 = vector.shape_cast %29 : vector<512x16xf32> to vector<2x16x16x16xf32>
    %c0_54 = arith.constant 0 : index
    %c1_55 = arith.constant 1 : index
    %c1_56 = arith.constant 1 : index
    %c0_57 = arith.constant 0 : index
    %33 = vector.load %arg8[%c0_54, %c1_55, %c1_56, %c0_57] : memref<2x18x18x16xf32, #tpu.memory_space<vmem>>, vector<2x16x16x16xf32>
    tpu.vector_store %arg8[%c0_54, %c1_55, %c1_56, %c0_57], %32 {strides = array<i32>} : memref<2x18x18x16xf32, #tpu.memory_space<vmem>>, vector<2x16x16x16xf32>,
    %c0_58 = arith.constant 0 : index
    %c0_59 = arith.constant 0 : index
    %c0_60 = arith.constant 0 : index
    %c0_61 = arith.constant 0 : index
    %34 = vector.load %arg8[%c0_58, %c0_59, %c0_60, %c0_61] : memref<2x18x18x16xf32, #tpu.memory_space<vmem>>, vector<2x16x16x16xf32>
    %35 = vector.shape_cast %34 : vector<2x16x16x16xf32> to vector<512x16xf32>
    %c0_62 = arith.constant 0 : index
    %c0_63 = arith.constant 0 : index
    %c1_64 = arith.constant 1 : index
    %c0_65 = arith.constant 0 : index
    %36 = vector.load %arg8[%c0_62, %c0_63, %c1_64, %c0_65] : memref<2x18x18x16xf32, #tpu.memory_space<vmem>>, vector<2x16x16x16xf32>
    %37 = vector.shape_cast %36 : vector<2x16x16x16xf32> to vector<512x16xf32>
    %c0_66 = arith.constant 0 : index
    %c0_67 = arith.constant 0 : index
    %c2_68 = arith.constant 2 : index
    %c0_69 = arith.constant 0 : index
    %38 = vector.load %arg8[%c0_66, %c0_67, %c2_68, %c0_69] : memref<2x18x18x16xf32, #tpu.memory_space<vmem>>, vector<2x16x16x16xf32>
    %39 = vector.shape_cast %38 : vector<2x16x16x16xf32> to vector<512x16xf32>
    %c0_70 = arith.constant 0 : index
    %c1_71 = arith.constant 1 : index
    %c0_72 = arith.constant 0 : index
    %c0_73 = arith.constant 0 : index
    %40 = vector.load %arg8[%c0_70, %c1_71, %c0_72, %c0_73] : memref<2x18x18x16xf32, #tpu.memory_space<vmem>>, vector<2x16x16x16xf32>
    %41 = vector.shape_cast %40 : vector<2x16x16x16xf32> to vector<512x16xf32>
    %c0_74 = arith.constant 0 : index
    %c1_75 = arith.constant 1 : index
    %c1_76 = arith.constant 1 : index
    %c0_77 = arith.constant 0 : index
    %42 = vector.load %arg8[%c0_74, %c1_75, %c1_76, %c0_77] : memref<2x18x18x16xf32, #tpu.memory_space<vmem>>, vector<2x16x16x16xf32>
    %43 = vector.shape_cast %42 : vector<2x16x16x16xf32> to vector<512x16xf32>
    %c0_78 = arith.constant 0 : index
    %c1_79 = arith.constant 1 : index
    %c2_80 = arith.constant 2 : index
    %c0_81 = arith.constant 0 : index
    %44 = vector.load %arg8[%c0_78, %c1_79, %c2_80, %c0_81] : memref<2x18x18x16xf32, #tpu.memory_space<vmem>>, vector<2x16x16x16xf32>
    %45 = vector.shape_cast %44 : vector<2x16x16x16xf32> to vector<512x16xf32>
    %c0_82 = arith.constant 0 : index
    %c2_83 = arith.constant 2 : index
    %c0_84 = arith.constant 0 : index
    %c0_85 = arith.constant 0 : index
    %46 = vector.load %arg8[%c0_82, %c2_83, %c0_84, %c0_85] : memref<2x18x18x16xf32, #tpu.memory_space<vmem>>, vector<2x16x16x16xf32>
    %47 = vector.shape_cast %46 : vector<2x16x16x16xf32> to vector<512x16xf32>
    %c0_86 = arith.constant 0 : index
    %c2_87 = arith.constant 2 : index
    %c1_88 = arith.constant 1 : index
    %c0_89 = arith.constant 0 : index
    %48 = vector.load %arg8[%c0_86, %c2_87, %c1_88, %c0_89] : memref<2x18x18x16xf32, #tpu.memory_space<vmem>>, vector<2x16x16x16xf32>
    %49 = vector.shape_cast %48 : vector<2x16x16x16xf32> to vector<512x16xf32>
    %c0_90 = arith.constant 0 : index
    %c2_91 = arith.constant 2 : index
    %c2_92 = arith.constant 2 : index
    %c0_93 = arith.constant 0 : index
    %50 = vector.load %arg8[%c0_90, %c2_91, %c2_92, %c0_93] : memref<2x18x18x16xf32, #tpu.memory_space<vmem>>, vector<2x16x16x16xf32>
    %51 = vector.shape_cast %50 : vector<2x16x16x16xf32> to vector<512x16xf32>
    %52 = tpu.concatenate %35, %37, %39, %41, %43, %45, %47, %49, %51 in 1 : vector<512x16xf32>, vector<512x16xf32>, vector<512x16xf32>, vector<512x16xf32>, vector<512x16xf32>, vector<512x16xf32>, vector<512x16xf32>, vector<512x16xf32>, vector<512x16xf32> -> vector<512x144xf32>
    %c0_94 = arith.constant 0 : index
    %c0_95 = arith.constant 0 : index
    %53 = vector.load %arg3[%c0_94, %c0_95] : memref<144x16xf32, #tpu.memory_space<vmem>>, vector<144x16xf32>
    %54 = tpu.transpose %53, [1, 0] : vector<144x16xf32> -> vector<16x144xf32>
    %cst_96 = arith.constant dense<0.000000e+00> : vector<16x512xf32>
    %55 = tpu.matmul %54, %52, %cst_96 {dimension_numbers = #tpu.dot_dimension_numbers<[1], [1], [0], [0], [0, 0, 1, 0], [], []>} : vector<16x144xf32>, vector<512x144xf32>, vector<16x512xf32> -> vector<16x512xf32>
    %cst_97 = arith.constant dense<0.000000e+00> : vector<16xf32>
    %56 = vector.multi_reduction <add>, %55, %cst_97 [1] : vector<16x512xf32> to vector<16xf32>
    %57 = vector.shape_cast %56 : vector<16xf32> to vector<16x1xf32>
    %cst_98 = arith.constant 5.120000e+02 : f32
    %58 = vector.broadcast %cst_98 : f32 to vector<16x1xf32>
    %59 = arith.divf %57, %58 : vector<16x1xf32>
    %60 = vector.broadcast %59 : vector<16x1xf32> to vector<16x512xf32>
    %61 = arith.subf %55, %60 : vector<16x512xf32>
    %62 = arith.mulf %61, %61 : vector<16x512xf32>
    %cst_99 = arith.constant dense<0.000000e+00> : vector<16xf32>
    %63 = vector.multi_reduction <add>, %62, %cst_99 [1] : vector<16x512xf32> to vector<16xf32>
    %64 = vector.shape_cast %63 : vector<16xf32> to vector<16x1xf32>
    %cst_100 = arith.constant 5.120000e+02 : f32
    %65 = vector.broadcast %cst_100 : f32 to vector<16x1xf32>
    %66 = arith.divf %64, %65 : vector<16x1xf32>
    %cst_101 = arith.constant 9.99999974E-6 : f32
    %67 = vector.broadcast %cst_101 : f32 to vector<16x1xf32>
    %68 = arith.addf %66, %67 : vector<16x1xf32>
    %69 = math.rsqrt %68 : vector<16x1xf32>
    %c0_102 = arith.constant 0 : index
    %c0_103 = arith.constant 0 : index
    %70 = vector.load %arg4[%c0_102, %c0_103] : memref<16x1xf32, #tpu.memory_space<vmem>>, vector<16x1xf32>
    %71 = arith.mulf %69, %70 : vector<16x1xf32>
    %72 = vector.broadcast %59 : vector<16x1xf32> to vector<16x512xf32>
    %73 = arith.subf %55, %72 : vector<16x512xf32>
    %74 = vector.broadcast %71 : vector<16x1xf32> to vector<16x512xf32>
    %75 = arith.mulf %73, %74 : vector<16x512xf32>
    %c0_104 = arith.constant 0 : index
    %c0_105 = arith.constant 0 : index
    %76 = vector.load %arg5[%c0_104, %c0_105] : memref<16x1xf32, #tpu.memory_space<vmem>>, vector<16x1xf32>
    %77 = vector.broadcast %76 : vector<16x1xf32> to vector<16x512xf32>
    %78 = arith.addf %75, %77 : vector<16x512xf32>
    %79 = vector.extract_strided_slice %78 {offsets = [0, 0], sizes = [16, 256], strides = [1, 1]} : vector<16x512xf32> to vector<16x256xf32>
    %c0_106 = arith.constant 0 : index
    %c0_107 = arith.constant 0 : index
    %80 = vector.load %arg6[%c0_106, %c0_107] : memref<32x256xf32, #tpu.memory_space<vmem>>, vector<16x256xf32>
    tpu.vector_store %arg6[%c0_106, %c0_107], %79 {strides = array<i32>} : memref<32x256xf32, #tpu.memory_space<vmem>>, vector<16x256xf32>,
    %81 = vector.extract_strided_slice %78 {offsets = [0, 256], sizes = [16, 256], strides = [1, 1]} : vector<16x512xf32> to vector<16x256xf32>
    %c16 = arith.constant 16 : index
    %c0_108 = arith.constant 0 : index
    %82 = vector.load %arg6[%c16, %c0_108] : memref<32x256xf32, #tpu.memory_space<vmem>>, vector<16x256xf32>
    tpu.vector_store %arg6[%c16, %c0_108], %81 {strides = array<i32>} : memref<32x256xf32, #tpu.memory_space<vmem>>, vector<16x256xf32>,
    return
  }
}

</mosaic_0001>

<llo_original>
// kernel: bottle_forward.1
$region0: #{bottle_forward.1}
  #allocation0 [shape = 'u32[]', space=smem, size = 0x4, offset = 0x4, fixed_abs, tag = 'smem constant byte address 0x4 - core index']
  #allocation1 [shape = 'u32[72,128]{1,0:T(1,128)}', space=vmem, size = 0x9000, scoped, tag = 'internal scratch']
  #allocation2 [shape = 'f32[2,18,18,8]{3,2,1,0:T(8,128)}', space=vmem, size = 0x6c000, scoped, tag = 'scratch operand']
  #allocation3 [shape = 'f32[2,18,18,16]{3,2,1,0:T(8,128)}', space=vmem, size = 0x6c000, scoped, tag = 'scratch operand']
  %s0 = inlined_call_operand.vmem [shape: f32[2,8,256], index: 0, kind: input, shape index: {}]
  %s1 = inlined_call_operand.vmem [shape: f32[72,16], index: 1, kind: input, shape index: {}]
  %s2 = inlined_call_operand.vmem [shape: f32[1,16], index: 2, kind: input, shape index: {}]
  %s3 = inlined_call_operand.vmem [shape: f32[144,16], index: 3, kind: input, shape index: {}]
  %s4 = inlined_call_operand.vmem [shape: f32[16,1], index: 4, kind: input, shape index: {}]
  %s5 = inlined_call_operand.vmem [shape: f32[16,1], index: 5, kind: input, shape index: {}]
  %s6 = inlined_call_operand.vmem [shape: f32[32,256], index: 6, kind: output, shape index: {}]
  %s7 = sld [smem:[#allocation0]]
  $region34: #{bottle_forward.1} parent=0
    _
  %s9 = ssub.s32 1, %s7
  %s10 = scalar_select 0, %s9, %s7
  // Predicated region
  $region2: #{bottle_forward.1} parent=0 // pred_check
    _
  $region3: #{bottle_forward.1} parent=0 // pred_check_branch
    %12 = sbr.rel (0) target = $region5
  $region4: #{bottle_forward.1} parent=0 // pred_region
    _
  $region5: #{bottle_forward.1} parent=0 // pred_fallthru
    _
  // Predicated region
  $region6: #{bottle_forward.1} parent=0 // pred_check
    _
  $region7: #{bottle_forward.1} parent=0 // pred_check_branch
    %14 = sbr.rel (0) target = $region9
  $region8: #{bottle_forward.1} parent=0 // pred_region
    _
  $region9: #{bottle_forward.1} parent=0 // pred_fallthru
    _
  // Predicated region
  $region10: #{bottle_forward.1} parent=0 // pred_check
    _
  $region11: #{bottle_forward.1} parent=0 // pred_check_branch
    %16 = sbr.rel (0) target = $region13
  $region12: #{bottle_forward.1} parent=0 // pred_region
    _
  $region13: #{bottle_forward.1} parent=0 // pred_fallthru
    _
  // Predicated region
  $region14: #{bottle_forward.1} parent=0 // pred_check
    _
  $region15: #{bottle_forward.1} parent=0 // pred_check_branch
    %18 = sbr.rel (0) target = $region17
  $region16: #{bottle_forward.1} parent=0 // pred_region
    _
  $region17: #{bottle_forward.1} parent=0 // pred_fallthru
    _
  // Predicated region
  $region18: #{bottle_forward.1} parent=0 // pred_check
    _
  $region19: #{bottle_forward.1} parent=0 // pred_check_branch
    %20 = sbr.rel (0) target = $region21
  $region20: #{bottle_forward.1} parent=0 // pred_region
    _
  $region21: #{bottle_forward.1} parent=0 // pred_fallthru
    _
  // Predicated region
  $region22: #{bottle_forward.1} parent=0 // pred_check
    _
  $region23: #{bottle_forward.1} parent=0 // pred_check_branch
    %22 = sbr.rel (0) target = $region25
  $region24: #{bottle_forward.1} parent=0 // pred_region
    _
  $region25: #{bottle_forward.1} parent=0 // pred_fallthru
    _
  %v23 = vld [vmem:[%s0] sm:$0xff]
  %v24 = vld [vmem:[%s0 + $0x8] sm:$0xff]
  %v25 = vld [vmem:[%s0 + $0x10] sm:$0xff]
  %v26 = vld [vmem:[%s0 + $0x18] sm:$0xff]
  %27 = vxpose.xlu0.b32.start [1/16] %v23, 128
  %28 = vxpose.xlu0.b32.cont [2/16] 0.0, 128
  %29 = vxpose.xlu0.b32.cont [3/16] 0.0, 128
  %30 = vxpose.xlu0.b32.cont [4/16] 0.0, 128
  %31 = vxpose.xlu0.b32.cont [5/16] 0.0, 128
  %32 = vxpose.xlu0.b32.cont [6/16] 0.0, 128
  %33 = vxpose.xlu0.b32.cont [7/16] 0.0, 128
  %34 = vxpose.xlu0.b32.cont [8/16] 0.0, 128
  %35 = vxpose.xlu0.b32.cont [9/16] 0.0, 128
  %36 = vxpose.xlu0.b32.cont [10/16] 0.0, 128
  %37 = vxpose.xlu0.b32.cont [11/16] 0.0, 128
  %38 = vxpose.xlu0.b32.cont [12/16] 0.0, 128
  %39 = vxpose.xlu0.b32.cont [13/16] 0.0, 128
  %40 = vxpose.xlu0.b32.cont [14/16] 0.0, 128
  %41 = vxpose.xlu0.b32.cont [15/16] 0.0, 128
  %42 = vxpose.xlu0.b32.end [16/16] 0.0, 128
  %v43 = vpop.trf.xlu0
  %v44 = vpop.trf.xlu0
  %v45 = vpop.trf.xlu0
  %v46 = vpop.trf.xlu0
  %v47 = vpop.trf.xlu0
  %v48 = vpop.trf.xlu0
  %v49 = vpop.trf.xlu0
  %v50 = vpop.trf.xlu0
  %v51 = vpop.trf.xlu0
  %v52 = vpop.trf.xlu0
  %v53 = vpop.trf.xlu0
  %v54 = vpop.trf.xlu0
  %v55 = vpop.trf.xlu0
  %v56 = vpop.trf.xlu0
  %v57 = vpop.trf.xlu0
  %v58 = vpop.trf.xlu0
  %59 = vxpose.xlu0.b32.start [1/16] %v24, 128
  %60 = vxpose.xlu0.b32.cont [2/16] 0.0, 128
  %61 = vxpose.xlu0.b32.cont [3/16] 0.0, 128
  %62 = vxpose.xlu0.b32.cont [4/16] 0.0, 128
  %63 = vxpose.xlu0.b32.cont [5/16] 0.0, 128
  %64 = vxpose.xlu0.b32.cont [6/16] 0.0, 128
  %65 = vxpose.xlu0.b32.cont [7/16] 0.0, 128
  %66 = vxpose.xlu0.b32.cont [8/16] 0.0, 128
  %67 = vxpose.xlu0.b32.cont [9/16] 0.0, 128
  %68 = vxpose.xlu0.b32.cont [10/16] 0.0, 128
  %69 = vxpose.xlu0.b32.cont [11/16] 0.0, 128
  %70 = vxpose.xlu0.b32.cont [12/16] 0.0, 128
  %71 = vxpose.xlu0.b32.cont [13/16] 0.0, 128
  %72 = vxpose.xlu0.b32.cont [14/16] 0.0, 128
  %73 = vxpose.xlu0.b32.cont [15/16] 0.0, 128
  %74 = vxpose.xlu0.b32.end [16/16] 0.0, 128
  %v75 = vpop.trf.xlu0
  %v76 = vpop.trf.xlu0
  %v77 = vpop.trf.xlu0
  %v78 = vpop.trf.xlu0
  %v79 = vpop.trf.xlu0
  %v80 = vpop.trf.xlu0
  %v81 = vpop.trf.xlu0
  %v82 = vpop.trf.xlu0
  %v83 = vpop.trf.xlu0
  %v84 = vpop.trf.xlu0
  %v85 = vpop.trf.xlu0
  %v86 = vpop.trf.xlu0
  %v87 = vpop.trf.xlu0
  %v88 = vpop.trf.xlu0
  %v89 = vpop.trf.xlu0
  %v90 = vpop.trf.xlu0
  %91 = vxpose.xlu0.b32.start [1/16] %v25, 128
  %92 = vxpose.xlu0.b32.cont [2/16] 0.0, 128
  %93 = vxpose.xlu0.b32.cont [3/16] 0.0, 128
  %94 = vxpose.xlu0.b32.cont [4/16] 0.0, 128
  %95 = vxpose.xlu0.b32.cont [5/16] 0.0, 128
  %96 = vxpose.xlu0.b32.cont [6/16] 0.0, 128
  %97 = vxpose.xlu0.b32.cont [7/16] 0.0, 128
  %98 = vxpose.xlu0.b32.cont [8/16] 0.0, 128
  %99 = vxpose.xlu0.b32.cont [9/16] 0.0, 128
  %100 = vxpose.xlu0.b32.cont [10/16] 0.0, 128
  %101 = vxpose.xlu0.b32.cont [11/16] 0.0, 128
  %102 = vxpose.xlu0.b32.cont [12/16] 0.0, 128
  %103 = vxpose.xlu0.b32.cont [13/16] 0.0, 128
  %104 = vxpose.xlu0.b32.cont [14/16] 0.0, 128
  %105 = vxpose.xlu0.b32.cont [15/16] 0.0, 128
  %106 = vxpose.xlu0.b32.end [16/16] 0.0, 128
  %v107 = vpop.trf.xlu0
  %v108 = vpop.trf.xlu0
  %v109 = vpop.trf.xlu0
  %v110 = vpop.trf.xlu0
  %v111 = vpop.trf.xlu0
  %v112 = vpop.trf.xlu0
  %v113 = vpop.trf.xlu0
  %v114 = vpop.trf.xlu0
  %v115 = vpop.trf.xlu0
  %v116 = vpop.trf.xlu0
  %v117 = vpop.trf.xlu0
  %v118 = vpop.trf.xlu0
  %v119 = vpop.trf.xlu0
  %v120 = vpop.trf.xlu0
  %v121 = vpop.trf.xlu0
  %v122 = vpop.trf.xlu0
  %123 = vxpose.xlu0.b32.start [1/16] %v26, 128
  %124 = vxpose.xlu0.b32.cont [2/16] 0.0, 128
  %125 = vxpose.xlu0.b32.cont [3/16] 0.0, 128
  %126 = vxpose.xlu0.b32.cont [4/16] 0.0, 128
  %127 = vxpose.xlu0.b32.cont [5/16] 0.0, 128
  %128 = vxpose.xlu0.b32.cont [6/16] 0.0, 128
  %129 = vxpose.xlu0.b32.cont [7/16] 0.0, 128
  %130 = vxpose.xlu0.b32.cont [8/16] 0.0, 128
  %131 = vxpose.xlu0.b32.cont [9/16] 0.0, 128
  %132 = vxpose.xlu0.b32.cont [10/16] 0.0, 128
  %133 = vxpose.xlu0.b32.cont [11/16] 0.0, 128
  %134 = vxpose.xlu0.b32.cont [12/16] 0.0, 128
  %135 = vxpose.xlu0.b32.cont [13/16] 0.0, 128
  %136 = vxpose.xlu0.b32.cont [14/16] 0.0, 128
  %137 = vxpose.xlu0.b32.cont [15/16] 0.0, 128
  %138 = vxpose.xlu0.b32.end [16/16] 0.0, 128
  %v139 = vpop.trf.xlu0
  %v140 = vpop.trf.xlu0
  %v141 = vpop.trf.xlu0
  %v142 = vpop.trf.xlu0
  %v143 = vpop.trf.xlu0
  %v144 = vpop.trf.xlu0
  %v145 = vpop.trf.xlu0
  %v146 = vpop.trf.xlu0
  %v147 = vpop.trf.xlu0
  %v148 = vpop.trf.xlu0
  %v149 = vpop.trf.xlu0
  %v150 = vpop.trf.xlu0
  %v151 = vpop.trf.xlu0
  %v152 = vpop.trf.xlu0
  %v153 = vpop.trf.xlu0
  %v154 = vpop.trf.xlu0
  %vm155 = vcmask 64512
  %156 = vst.msk [vmem:[#allocation2] sm:$0xff] %vm155, 0.0
  %157 = vst.msk [vmem:[#allocation2 + $0x8] sm:$0xff] %vm155, 0.0
  %vm158 = vcmask 58368
  %159 = vst.msk [vmem:[#allocation2 + $0x10] sm:$0x3] %vm158, 0.0
  %160 = vst.msk [vmem:[#allocation2 + $0x18] sm:$0xff] %vm155, 0.0
  %161 = vst.msk [vmem:[#allocation2 + $0x20] sm:$0xff] %vm155, 0.0
  %162 = vst.msk [vmem:[#allocation2 + $0x28] sm:$0x3] %vm158, 0.0
  %163 = vst.msk [vmem:[#allocation2 + $0x30] sm:$0xff] %vm155, 0.0
  %164 = vst.msk [vmem:[#allocation2 + $0x38] sm:$0xff] %vm155, 0.0
  %165 = vst.msk [vmem:[#allocation2 + $0x40] sm:$0x3] %vm158, 0.0
  %166 = vst.msk [vmem:[#allocation2 + $0x48] sm:$0xff] %vm155, 0.0
  %167 = vst.msk [vmem:[#allocation2 + $0x50] sm:$0xff] %vm155, 0.0
  %168 = vst.msk [vmem:[#allocation2 + $0x58] sm:$0x3] %vm158, 0.0
  %169 = vst.msk [vmem:[#allocation2 + $0x60] sm:$0xff] %vm155, 0.0
  %170 = vst.msk [vmem:[#allocation2 + $0x68] sm:$0xff] %vm155, 0.0
  %171 = vst.msk [vmem:[#allocation2 + $0x70] sm:$0x3] %vm158, 0.0
  %172 = vst.msk [vmem:[#allocation2 + $0x78] sm:$0xff] %vm155, 0.0
  %173 = vst.msk [vmem:[#allocation2 + $0x80] sm:$0xff] %vm155, 0.0
  %174 = vst.msk [vmem:[#allocation2 + $0x88] sm:$0x3] %vm158, 0.0
  %175 = vst.msk [vmem:[#allocation2 + $0x90] sm:$0xff] %vm155, 0.0
  %176 = vst.msk [vmem:[#allocation2 + $0x98] sm:$0xff] %vm155, 0.0
  %177 = vst.msk [vmem:[#allocation2 + $0xa0] sm:$0x3] %vm158, 0.0
  %178 = vst.msk [vmem:[#allocation2 + $0xa8] sm:$0xff] %vm155, 0.0
  %179 = vst.msk [vmem:[#allocation2 + $0xb0] sm:$0xff] %vm155, 0.0
  %180 = vst.msk [vmem:[#allocation2 + $0xb8] sm:$0x3] %vm158, 0.0
  %181 = vst.msk [vmem:[#allocation2 + $0xc0] sm:$0xff] %vm155, 0.0
  %182 = vst.msk [vmem:[#allocation2 + $0xc8] sm:$0xff] %vm155, 0.0
  %183 = vst.msk [vmem:[#allocation2 + $0xd0] sm:$0x3] %vm158, 0.0
  %184 = vst.msk [vmem:[#allocation2 + $0xd8] sm:$0xff] %vm155, 0.0
  %185 = vst.msk [vmem:[#allocation2 + $0xe0] sm:$0xff] %vm155, 0.0
  %186 = vst.msk [vmem:[#allocation2 + $0xe8] sm:$0x3] %vm158, 0.0
  %187 = vst.msk [vmem:[#allocation2 + $0xf0] sm:$0xff] %vm155, 0.0
  %188 = vst.msk [vmem:[#allocation2 + $0xf8] sm:$0xff] %vm155, 0.0
  %189 = vst.msk [vmem:[#allocation2 + $0x100] sm:$0x3] %vm158, 0.0
  %190 = vst.msk [vmem:[#allocation2 + $0x108] sm:$0xff] %vm155, 0.0
  %191 = vst.msk [vmem:[#allocation2 + $0x110] sm:$0xff] %vm155, 0.0
  %192 = vst.msk [vmem:[#allocation2 + $0x118] sm:$0x3] %vm158, 0.0
  %193 = vst.msk [vmem:[#allocation2 + $0x120] sm:$0xff] %vm155, 0.0
  %194 = vst.msk [vmem:[#allocation2 + $0x128] sm:$0xff] %vm155, 0.0
  %195 = vst.msk [vmem:[#allocation2 + $0x130] sm:$0x3] %vm158, 0.0
  %196 = vst.msk [vmem:[#allocation2 + $0x138] sm:$0xff] %vm155, 0.0
  %197 = vst.msk [vmem:[#allocation2 + $0x140] sm:$0xff] %vm155, 0.0
  %198 = vst.msk [vmem:[#allocation2 + $0x148] sm:$0x3] %vm158, 0.0
  %199 = vst.msk [vmem:[#allocation2 + $0x150] sm:$0xff] %vm155, 0.0
  %200 = vst.msk [vmem:[#allocation2 + $0x158] sm:$0xff] %vm155, 0.0
  %201 = vst.msk [vmem:[#allocation2 + $0x160] sm:$0x3] %vm158, 0.0
  %202 = vst.msk [vmem:[#allocation2 + $0x168] sm:$0xff] %vm155, 0.0
  %203 = vst.msk [vmem:[#allocation2 + $0x170] sm:$0xff] %vm155, 0.0
  %204 = vst.msk [vmem:[#allocation2 + $0x178] sm:$0x3] %vm158, 0.0
  %205 = vst.msk [vmem:[#allocation2 + $0x180] sm:$0xff] %vm155, 0.0
  %206 = vst.msk [vmem:[#allocation2 + $0x188] sm:$0xff] %vm155, 0.0
  %207 = vst.msk [vmem:[#allocation2 + $0x190] sm:$0x3] %vm158, 0.0
  %208 = vst.msk [vmem:[#allocation2 + $0x198] sm:$0xff] %vm155, 0.0
  %209 = vst.msk [vmem:[#allocation2 + $0x1a0] sm:$0xff] %vm155, 0.0
  %210 = vst.msk [vmem:[#allocation2 + $0x1a8] sm:$0x3] %vm158, 0.0
  %211 = vst.msk [vmem:[#allocation2 + $0x1b0] sm:$0xff] %vm155, 0.0
  %212 = vst.msk [vmem:[#allocation2 + $0x1b8] sm:$0xff] %vm155, 0.0
  %213 = vst.msk [vmem:[#allocation2 + $0x1c0] sm:$0x3] %vm158, 0.0
  %214 = vst.msk [vmem:[#allocation2 + $0x1c8] sm:$0xff] %vm155, 0.0
  %215 = vst.msk [vmem:[#allocation2 + $0x1d0] sm:$0xff] %vm155, 0.0
  %216 = vst.msk [vmem:[#allocation2 + $0x1d8] sm:$0x3] %vm158, 0.0
  %217 = vst.msk [vmem:[#allocation2 + $0x1e0] sm:$0xff] %vm155, 0.0
  %218 = vst.msk [vmem:[#allocation2 + $0x1e8] sm:$0xff] %vm155, 0.0
  %219 = vst.msk [vmem:[#allocation2 + $0x1f0] sm:$0x3] %vm158, 0.0
  %220 = vst.msk [vmem:[#allocation2 + $0x1f8] sm:$0xff] %vm155, 0.0
  %221 = vst.msk [vmem:[#allocation2 + $0x200] sm:$0xff] %vm155, 0.0
  %222 = vst.msk [vmem:[#allocation2 + $0x208] sm:$0x3] %vm158, 0.0
  %223 = vst.msk [vmem:[#allocation2 + $0x210] sm:$0xff] %vm155, 0.0
  %224 = vst.msk [vmem:[#allocation2 + $0x218] sm:$0xff] %vm155, 0.0
  %225 = vst.msk [vmem:[#allocation2 + $0x220] sm:$0x3] %vm158, 0.0
  %226 = vst.msk [vmem:[#allocation2 + $0x228] sm:$0xff] %vm155, 0.0
  %227 = vst.msk [vmem:[#allocation2 + $0x230] sm:$0xff] %vm155, 0.0
  %228 = vst.msk [vmem:[#allocation2 + $0x238] sm:$0x3] %vm158, 0.0
  %229 = vst.msk [vmem:[#allocation2 + $0x240] sm:$0xff] %vm155, 0.0
  %230 = vst.msk [vmem:[#allocation2 + $0x248] sm:$0xff] %vm155, 0.0
  %231 = vst.msk [vmem:[#allocation2 + $0x250] sm:$0x3] %vm158, 0.0
  %232 = vst.msk [vmem:[#allocation2 + $0x258] sm:$0xff] %vm155, 0.0
  %233 = vst.msk [vmem:[#allocation2 + $0x260] sm:$0xff] %vm155, 0.0
  %234 = vst.msk [vmem:[#allocation2 + $0x268] sm:$0x3] %vm158, 0.0
  %235 = vst.msk [vmem:[#allocation2 + $0x270] sm:$0xff] %vm155, 0.0
  %236 = vst.msk [vmem:[#allocation2 + $0x278] sm:$0xff] %vm155, 0.0
  %237 = vst.msk [vmem:[#allocation2 + $0x280] sm:$0x3] %vm158, 0.0
  %238 = vst.msk [vmem:[#allocation2 + $0x288] sm:$0xff] %vm155, 0.0
  %239 = vst.msk [vmem:[#allocation2 + $0x290] sm:$0xff] %vm155, 0.0
  %240 = vst.msk [vmem:[#allocation2 + $0x298] sm:$0x3] %vm158, 0.0
  %241 = vst.msk [vmem:[#allocation2 + $0x2a0] sm:$0xff] %vm155, 0.0
  %242 = vst.msk [vmem:[#allocation2 + $0x2a8] sm:$0xff] %vm155, 0.0
  %243 = vst.msk [vmem:[#allocation2 + $0x2b0] sm:$0x3] %vm158, 0.0
  %244 = vst.msk [vmem:[#allocation2 + $0x2b8] sm:$0xff] %vm155, 0.0
  %245 = vst.msk [vmem:[#allocation2 + $0x2c0] sm:$0xff] %vm155, 0.0
  %246 = vst.msk [vmem:[#allocation2 + $0x2c8] sm:$0x3] %vm158, 0.0
  %247 = vst.msk [vmem:[#allocation2 + $0x2d0] sm:$0xff] %vm155, 0.0
  %248 = vst.msk [vmem:[#allocation2 + $0x2d8] sm:$0xff] %vm155, 0.0
  %249 = vst.msk [vmem:[#allocation2 + $0x2e0] sm:$0x3] %vm158, 0.0
  %250 = vst.msk [vmem:[#allocation2 + $0x2e8] sm:$0xff] %vm155, 0.0
  %251 = vst.msk [vmem:[#allocation2 + $0x2f0] sm:$0xff] %vm155, 0.0
  %252 = vst.msk [vmem:[#allocation2 + $0x2f8] sm:$0x3] %vm158, 0.0
  %253 = vst.msk [vmem:[#allocation2 + $0x300] sm:$0xff] %vm155, 0.0
  %254 = vst.msk [vmem:[#allocation2 + $0x308] sm:$0xff] %vm155, 0.0
  %255 = vst.msk [vmem:[#allocation2 + $0x310] sm:$0x3] %vm158, 0.0
  %256 = vst.msk [vmem:[#allocation2 + $0x318] sm:$0xff] %vm155, 0.0
  %257 = vst.msk [vmem:[#allocation2 + $0x320] sm:$0xff] %vm155, 0.0
  %258 = vst.msk [vmem:[#allocation2 + $0x328] sm:$0x3] %vm158, 0.0
  %259 = vst.msk [vmem:[#allocation2 + $0x330] sm:$0xff] %vm155, 0.0
  %260 = vst.msk [vmem:[#allocation2 + $0x338] sm:$0xff] %vm155, 0.0
  %261 = vst.msk [vmem:[#allocation2 + $0x340] sm:$0x3] %vm158, 0.0
  %262 = vst.msk [vmem:[#allocation2 + $0x348] sm:$0xff] %vm155, 0.0
  %263 = vst.msk [vmem:[#allocation2 + $0x350] sm:$0xff] %vm155, 0.0
  %264 = vst.msk [vmem:[#allocation2 + $0x358] sm:$0x3] %vm158, 0.0
  %s265 = scalar_lea.vmem [#allocation2], 24
  %266 = vst.msk [vmem:[%s265 + $0x1] sm:$0xff] %vm155, %v43
  %267 = vst.msk [vmem:[%s265 + $0x9] sm:$0xff] %vm155, %v44
  %268 = vst.msk [vmem:[%s265 + $0x19] sm:$0xff] %vm155, %v45
  %269 = vst.msk [vmem:[%s265 + $0x21] sm:$0xff] %vm155, %v46
  %270 = vst.msk [vmem:[%s265 + $0x31] sm:$0xff] %vm155, %v47
  %271 = vst.msk [vmem:[%s265 + $0x39] sm:$0xff] %vm155, %v48
  %272 = vst.msk [vmem:[%s265 + $0x49] sm:$0xff] %vm155, %v49
  %273 = vst.msk [vmem:[%s265 + $0x51] sm:$0xff] %vm155, %v50
  %274 = vst.msk [vmem:[%s265 + $0x61] sm:$0xff] %vm155, %v51
  %275 = vst.msk [vmem:[%s265 + $0x69] sm:$0xff] %vm155, %v52
  %276 = vst.msk [vmem:[%s265 + $0x79] sm:$0xff] %vm155, %v53
  %277 = vst.msk [vmem:[%s265 + $0x81] sm:$0xff] %vm155, %v54
  %278 = vst.msk [vmem:[%s265 + $0x91] sm:$0xff] %vm155, %v55
  %279 = vst.msk [vmem:[%s265 + $0x99] sm:$0xff] %vm155, %v56
  %280 = vst.msk [vmem:[%s265 + $0xa9] sm:$0xff] %vm155, %v57
  %281 = vst.msk [vmem:[%s265 + $0xb1] sm:$0xff] %vm155, %v58
  %282 = vst.msk [vmem:[%s265 + $0xc1] sm:$0xff] %vm155, %v75
  %283 = vst.msk [vmem:[%s265 + $0xc9] sm:$0xff] %vm155, %v76
  %284 = vst.msk [vmem:[%s265 + $0xd9] sm:$0xff] %vm155, %v77
  %285 = vst.msk [vmem:[%s265 + $0xe1] sm:$0xff] %vm155, %v78
  %286 = vst.msk [vmem:[%s265 + $0xf1] sm:$0xff] %vm155, %v79
  %287 = vst.msk [vmem:[%s265 + $0xf9] sm:$0xff] %vm155, %v80
  %288 = vst.msk [vmem:[%s265 + $0x109] sm:$0xff] %vm155, %v81
  %289 = vst.msk [vmem:[%s265 + $0x111] sm:$0xff] %vm155, %v82
  %290 = vst.msk [vmem:[%s265 + $0x121] sm:$0xff] %vm155, %v83
  %291 = vst.msk [vmem:[%s265 + $0x129] sm:$0xff] %vm155, %v84
  %292 = vst.msk [vmem:[%s265 + $0x139] sm:$0xff] %vm155, %v85
  %293 = vst.msk [vmem:[%s265 + $0x141] sm:$0xff] %vm155, %v86
  %294 = vst.msk [vmem:[%s265 + $0x151] sm:$0xff] %vm155, %v87
  %295 = vst.msk [vmem:[%s265 + $0x159] sm:$0xff] %vm155, %v88
  %296 = vst.msk [vmem:[%s265 + $0x169] sm:$0xff] %vm155, %v89
  %297 = vst.msk [vmem:[%s265 + $0x171] sm:$0xff] %vm155, %v90
  %298 = vst.msk [vmem:[%s265 + $0x1b1] sm:$0xff] %vm155, %v107
  %299 = vst.msk [vmem:[%s265 + $0x1b9] sm:$0xff] %vm155, %v108
  %300 = vst.msk [vmem:[%s265 + $0x1c9] sm:$0xff] %vm155, %v109
  %301 = vst.msk [vmem:[%s265 + $0x1d1] sm:$0xff] %vm155, %v110
  %302 = vst.msk [vmem:[%s265 + $0x1e1] sm:$0xff] %vm155, %v111
  %303 = vst.msk [vmem:[%s265 + $0x1e9] sm:$0xff] %vm155, %v112
  %304 = vst.msk [vmem:[%s265 + $0x1f9] sm:$0xff] %vm155, %v113
  %305 = vst.msk [vmem:[%s265 + $0x201] sm:$0xff] %vm155, %v114
  %306 = vst.msk [vmem:[%s265 + $0x211] sm:$0xff] %vm155, %v115
  %307 = vst.msk [vmem:[%s265 + $0x219] sm:$0xff] %vm155, %v116
  %308 = vst.msk [vmem:[%s265 + $0x229] sm:$0xff] %vm155, %v117
  %309 = vst.msk [vmem:[%s265 + $0x231] sm:$0xff] %vm155, %v118
  %310 = vst.msk [vmem:[%s265 + $0x241] sm:$0xff] %vm155, %v119
  %311 = vst.msk [vmem:[%s265 + $0x249] sm:$0xff] %vm155, %v120
  %312 = vst.msk [vmem:[%s265 + $0x259] sm:$0xff] %vm155, %v121
  %313 = vst.msk [vmem:[%s265 + $0x261] sm:$0xff] %vm155, %v122
  %314 = vst.msk [vmem:[%s265 + $0x271] sm:$0xff] %vm155, %v139
  %315 = vst.msk [vmem:[%s265 + $0x279] sm:$0xff] %vm155, %v140
  %316 = vst.msk [vmem:[%s265 + $0x289] sm:$0xff] %vm155, %v141
  %317 = vst.msk [vmem:[%s265 + $0x291] sm:$0xff] %vm155, %v142
  %318 = vst.msk [vmem:[%s265 + $0x2a1] sm:$0xff] %vm155, %v143
  %319 = vst.msk [vmem:[%s265 + $0x2a9] sm:$0xff] %vm155, %v144
  %320 = vst.msk [vmem:[%s265 + $0x2b9] sm:$0xff] %vm155, %v145
  %321 = vst.msk [vmem:[%s265 + $0x2c1] sm:$0xff] %vm155, %v146
  %322 = vst.msk [vmem:[%s265 + $0x2d1] sm:$0xff] %vm155, %v147
  %323 = vst.msk [vmem:[%s265 + $0x2d9] sm:$0xff] %vm155, %v148
  %324 = vst.msk [vmem:[%s265 + $0x2e9] sm:$0xff] %vm155, %v149
  %325 = vst.msk [vmem:[%s265 + $0x2f1] sm:$0xff] %vm155, %v150
  %326 = vst.msk [vmem:[%s265 + $0x301] sm:$0xff] %vm155, %v151
  %327 = vst.msk [vmem:[%s265 + $0x309] sm:$0xff] %vm155, %v152
  %328 = vst.msk [vmem:[%s265 + $0x319] sm:$0xff] %vm155, %v153
  %329 = vst.msk [vmem:[%s265 + $0x321] sm:$0xff] %vm155, %v154
  %v330 = vld [vmem:[#allocation2] sm:$0xff]
  %v331 = vld [vmem:[#allocation2 + $0x8] sm:$0xff]
  %v332 = vld [vmem:[#allocation2 + $0x18] sm:$0xff]
  %v333 = vld [vmem:[#allocation2 + $0x20] sm:$0xff]
  %v334 = vld [vmem:[#allocation2 + $0x30] sm:$0xff]
  %v335 = vld [vmem:[#allocation2 + $0x38] sm:$0xff]
  %v336 = vld [vmem:[#allocation2 + $0x48] sm:$0xff]
  %v337 = vld [vmem:[#allocation2 + $0x50] sm:$0xff]
  %v338 = vld [vmem:[#allocation2 + $0x60] sm:$0xff]
  %v339 = vld [vmem:[#allocation2 + $0x68] sm:$0xff]
  %v340 = vld [vmem:[#allocation2 + $0x78] sm:$0xff]
  %v341 = vld [vmem:[#allocation2 + $0x80] sm:$0xff]
  %v342 = vld [vmem:[#allocation2 + $0x90] sm:$0xff]
  %v343 = vld [vmem:[#allocation2 + $0x98] sm:$0xff]
  %v344 = vld [vmem:[#allocation2 + $0xa8] sm:$0xff]
  %v345 = vld [vmem:[#allocation2 + $0xb0] sm:$0xff]
  %v346 = vld [vmem:[#allocation2 + $0xc0] sm:$0xff]
  %v347 = vld [vmem:[#allocation2 + $0xc8] sm:$0xff]
  %v348 = vld [vmem:[#allocation2 + $0xd8] sm:$0xff]
  %v349 = vld [vmem:[#allocation2 + $0xe0] sm:$0xff]
  %v350 = vld [vmem:[#allocation2 + $0xf0] sm:$0xff]
  %v351 = vld [vmem:[#allocation2 + $0xf8] sm:$0xff]
  %v352 = vld [vmem:[#allocation2 + $0x108] sm:$0xff]
  %v353 = vld [vmem:[#allocation2 + $0x110] sm:$0xff]
  %v354 = vld [vmem:[#allocation2 + $0x120] sm:$0xff]
  %v355 = vld [vmem:[#allocation2 + $0x128] sm:$0xff]
  %v356 = vld [vmem:[#allocation2 + $0x138] sm:$0xff]
  %v357 = vld [vmem:[#allocation2 + $0x140] sm:$0xff]
  %v358 = vld [vmem:[#allocation2 + $0x150] sm:$0xff]
  %v359 = vld [vmem:[#allocation2 + $0x158] sm:$0xff]
  %v360 = vld [vmem:[#allocation2 + $0x168] sm:$0xff]
  %v361 = vld [vmem:[#allocation2 + $0x170] sm:$0xff]
  %v362 = vld [vmem:[#allocation2 + $0x1b0] sm:$0xff]
  %v363 = vld [vmem:[#allocation2 + $0x1b8] sm:$0xff]
  %v364 = vld [vmem:[#allocation2 + $0x1c8] sm:$0xff]
  %v365 = vld [vmem:[#allocation2 + $0x1d0] sm:$0xff]
  %v366 = vld [vmem:[#allocation2 + $0x1e0] sm:$0xff]
  %v367 = vld [vmem:[#allocation2 + $0x1e8] sm:$0xff]
  %v368 = vld [vmem:[#allocation2 + $0x1f8] sm:$0xff]
  %v369 = vld [vmem:[#allocation2 + $0x200] sm:$0xff]
  %v370 = vld [vmem:[#allocation2 + $0x210] sm:$0xff]
  %v371 = vld [vmem:[#allocation2 + $0x218] sm:$0xff]
  %v372 = vld [vmem:[#allocation2 + $0x228] sm:$0xff]
  %v373 = vld [vmem:[#allocation2 + $0x230] sm:$0xff]
  %v374 = vld [vmem:[#allocation2 + $0x240] sm:$0xff]
  %v375 = vld [vmem:[#allocation2 + $0x248] sm:$0xff]
  %v376 = vld [vmem:[#allocation2 + $0x258] sm:$0xff]
  %v377 = vld [vmem:[#allocation2 + $0x260] sm:$0xff]
  %v378 = vld [vmem:[#allocation2 + $0x270] sm:$0xff]
  %v379 = vld [vmem:[#allocation2 + $0x278] sm:$0xff]
  %v380 = vld [vmem:[#allocation2 + $0x288] sm:$0xff]
  %v381 = vld [vmem:[#allocation2 + $0x290] sm:$0xff]
  %v382 = vld [vmem:[#allocation2 + $0x2a0] sm:$0xff]
  %v383 = vld [vmem:[#allocation2 + $0x2a8] sm:$0xff]
  %v384 = vld [vmem:[#allocation2 + $0x2b8] sm:$0xff]
  %v385 = vld [vmem:[#allocation2 + $0x2c0] sm:$0xff]
  %v386 = vld [vmem:[#allocation2 + $0x2d0] sm:$0xff]
  %v387 = vld [vmem:[#allocation2 + $0x2d8] sm:$0xff]
  %v388 = vld [vmem:[#allocation2 + $0x2e8] sm:$0xff]
  %v389 = vld [vmem:[#allocation2 + $0x2f0] sm:$0xff]
  %v390 = vld [vmem:[#allocation2 + $0x300] sm:$0xff]
  %v391 = vld [vmem:[#allocation2 + $0x308] sm:$0xff]
  %v392 = vld [vmem:[#allocation2 + $0x318] sm:$0xff]
  %v393 = vld [vmem:[#allocation2 + $0x320] sm:$0xff]
  %v394 = vld [vmem:[#allocation2 + $0x1] sm:$0xff]
  %v395 = vld [vmem:[#allocation2 + $0x9] sm:$0xff]
  %v396 = vld [vmem:[#allocation2 + $0x19] sm:$0xff]
  %v397 = vld [vmem:[#allocation2 + $0x21] sm:$0xff]
  %v398 = vld [vmem:[#allocation2 + $0x31] sm:$0xff]
  %v399 = vld [vmem:[#allocation2 + $0x39] sm:$0xff]
  %v400 = vld [vmem:[#allocation2 + $0x49] sm:$0xff]
  %v401 = vld [vmem:[#allocation2 + $0x51] sm:$0xff]
  %v402 = vld [vmem:[#allocation2 + $0x61] sm:$0xff]
  %v403 = vld [vmem:[#allocation2 + $0x69] sm:$0xff]
  %v404 = vld [vmem:[#allocation2 + $0x79] sm:$0xff]
  %v405 = vld [vmem:[#allocation2 + $0x81] sm:$0xff]
  %v406 = vld [vmem:[#allocation2 + $0x91] sm:$0xff]
  %v407 = vld [vmem:[#allocation2 + $0x99] sm:$0xff]
  %v408 = vld [vmem:[#allocation2 + $0xa9] sm:$0xff]
  %v409 = vld [vmem:[#allocation2 + $0xb1] sm:$0xff]
  %v410 = vld [vmem:[#allocation2 + $0xc1] sm:$0xff]
  %v411 = vld [vmem:[#allocation2 + $0xc9] sm:$0xff]
  %v412 = vld [vmem:[#allocation2 + $0xd9] sm:$0xff]
  %v413 = vld [vmem:[#allocation2 + $0xe1] sm:$0xff]
  %v414 = vld [vmem:[#allocation2 + $0xf1] sm:$0xff]
  %v415 = vld [vmem:[#allocation2 + $0xf9] sm:$0xff]
  %v416 = vld [vmem:[#allocation2 + $0x109] sm:$0xff]
  %v417 = vld [vmem:[#allocation2 + $0x111] sm:$0xff]
  %v418 = vld [vmem:[#allocation2 + $0x121] sm:$0xff]
  %v419 = vld [vmem:[#allocation2 + $0x129] sm:$0xff]
  %v420 = vld [vmem:[#allocation2 + $0x139] sm:$0xff]
  %v421 = vld [vmem:[#allocation2 + $0x141] sm:$0xff]
  %v422 = vld [vmem:[#allocation2 + $0x151] sm:$0xff]
  %v423 = vld [vmem:[#allocation2 + $0x159] sm:$0xff]
  %v424 = vld [vmem:[#allocation2 + $0x169] sm:$0xff]
  %v425 = vld [vmem:[#allocation2 + $0x171] sm:$0xff]
  %v426 = vld [vmem:[#allocation2 + $0x1b1] sm:$0xff]
  %v427 = vld [vmem:[#allocation2 + $0x1b9] sm:$0xff]
  %v428 = vld [vmem:[#allocation2 + $0x1c9] sm:$0xff]
  %v429 = vld [vmem:[#allocation2 + $0x1d1] sm:$0xff]
  %v430 = vld [vmem:[#allocation2 + $0x1e1] sm:$0xff]
  %v431 = vld [vmem:[#allocation2 + $0x1e9] sm:$0xff]
  %v432 = vld [vmem:[#allocation2 + $0x1f9] sm:$0xff]
  %v433 = vld [vmem:[#allocation2 + $0x201] sm:$0xff]
  %v434 = vld [vmem:[#allocation2 + $0x211] sm:$0xff]
  %v435 = vld [vmem:[#allocation2 + $0x219] sm:$0xff]
  %v436 = vld [vmem:[#allocation2 + $0x229] sm:$0xff]
  %v437 = vld [vmem:[#allocation2 + $0x231] sm:$0xff]
  %v438 = vld [vmem:[#allocation2 + $0x241] sm:$0xff]
  %v439 = vld [vmem:[#allocation2 + $0x249] sm:$0xff]
  %v440 = vld [vmem:[#allocation2 + $0x259] sm:$0xff]
  %v441 = vld [vmem:[#allocation2 + $0x261] sm:$0xff]
  %v442 = vld [vmem:[#allocation2 + $0x271] sm:$0xff]
  %v443 = vld [vmem:[#allocation2 + $0x279] sm:$0xff]
  %v444 = vld [vmem:[#allocation2 + $0x289] sm:$0xff]
  %v445 = vld [vmem:[#allocation2 + $0x291] sm:$0xff]
  %v446 = vld [vmem:[#allocation2 + $0x2a1] sm:$0xff]
  %v447 = vld [vmem:[#allocation2 + $0x2a9] sm:$0xff]
  %v448 = vld [vmem:[#allocation2 + $0x2b9] sm:$0xff]
  %v449 = vld [vmem:[#allocation2 + $0x2c1] sm:$0xff]
  %v450 = vld [vmem:[#allocation2 + $0x2d1] sm:$0xff]
  %v451 = vld [vmem:[#allocation2 + $0x2d9] sm:$0xff]
  %v452 = vld [vmem:[#allocation2 + $0x2e9] sm:$0xff]
  %v453 = vld [vmem:[#allocation2 + $0x2f1] sm:$0xff]
  %v454 = vld [vmem:[#allocation2 + $0x301] sm:$0xff]
  %v455 = vld [vmem:[#allocation2 + $0x309] sm:$0xff]
  %v456 = vld [vmem:[#allocation2 + $0x319] sm:$0xff]
  %v457 = vld [vmem:[#allocation2 + $0x321] sm:$0xff]
  %v458 = vld [vmem:[#allocation2 + $0x2] sm:$0xff]
  %v459 = vld [vmem:[#allocation2 + $0xa] sm:$0xff]
  %v460 = vld [vmem:[#allocation2 + $0x1a] sm:$0xff]
  %v461 = vld [vmem:[#allocation2 + $0x22] sm:$0xff]
  %v462 = vld [vmem:[#allocation2 + $0x32] sm:$0xff]
  %v463 = vld [vmem:[#allocation2 + $0x3a] sm:$0xff]
  %v464 = vld [vmem:[#allocation2 + $0x4a] sm:$0xff]
  %v465 = vld [vmem:[#allocation2 + $0x52] sm:$0xff]
  %v466 = vld [vmem:[#allocation2 + $0x62] sm:$0xff]
  %v467 = vld [vmem:[#allocation2 + $0x6a] sm:$0xff]
  %v468 = vld [vmem:[#allocation2 + $0x7a] sm:$0xff]
  %v469 = vld [vmem:[#allocation2 + $0x82] sm:$0xff]
  %v470 = vld [vmem:[#allocation2 + $0x92] sm:$0xff]
  %v471 = vld [vmem:[#allocation2 + $0x9a] sm:$0xff]
  %v472 = vld [vmem:[#allocation2 + $0xaa] sm:$0xff]
  %v473 = vld [vmem:[#allocation2 + $0xb2] sm:$0xff]
  %v474 = vld [vmem:[#allocation2 + $0xc2] sm:$0xff]
  %v475 = vld [vmem:[#allocation2 + $0xca] sm:$0xff]
  %v476 = vld [vmem:[#allocation2 + $0xda] sm:$0xff]
  %v477 = vld [vmem:[#allocation2 + $0xe2] sm:$0xff]
  %v478 = vld [vmem:[#allocation2 + $0xf2] sm:$0xff]
  %v479 = vld [vmem:[#allocation2 + $0xfa] sm:$0xff]
  %v480 = vld [vmem:[#allocation2 + $0x10a] sm:$0xff]
  %v481 = vld [vmem:[#allocation2 + $0x112] sm:$0xff]
  %v482 = vld [vmem:[#allocation2 + $0x122] sm:$0xff]
  %v483 = vld [vmem:[#allocation2 + $0x12a] sm:$0xff]
  %v484 = vld [vmem:[#allocation2 + $0x13a] sm:$0xff]
  %v485 = vld [vmem:[#allocation2 + $0x142] sm:$0xff]
  %v486 = vld [vmem:[#allocation2 + $0x152] sm:$0xff]
  %v487 = vld [vmem:[#allocation2 + $0x15a] sm:$0xff]
  %v488 = vld [vmem:[#allocation2 + $0x16a] sm:$0xff]
  %v489 = vld [vmem:[#allocation2 + $0x172] sm:$0xff]
  %v490 = vld [vmem:[#allocation2 + $0x1b2] sm:$0xff]
  %v491 = vld [vmem:[#allocation2 + $0x1ba] sm:$0xff]
  %v492 = vld [vmem:[#allocation2 + $0x1ca] sm:$0xff]
  %v493 = vld [vmem:[#allocation2 + $0x1d2] sm:$0xff]
  %v494 = vld [vmem:[#allocation2 + $0x1e2] sm:$0xff]
  %v495 = vld [vmem:[#allocation2 + $0x1ea] sm:$0xff]
  %v496 = vld [vmem:[#allocation2 + $0x1fa] sm:$0xff]
  %v497 = vld [vmem:[#allocation2 + $0x202] sm:$0xff]
  %v498 = vld [vmem:[#allocation2 + $0x212] sm:$0xff]
  %v499 = vld [vmem:[#allocation2 + $0x21a] sm:$0xff]
  %v500 = vld [vmem:[#allocation2 + $0x22a] sm:$0xff]
  %v501 = vld [vmem:[#allocation2 + $0x232] sm:$0xff]
  %v502 = vld [vmem:[#allocation2 + $0x242] sm:$0xff]
  %v503 = vld [vmem:[#allocation2 + $0x24a] sm:$0xff]
  %v504 = vld [vmem:[#allocation2 + $0x25a] sm:$0xff]
  %v505 = vld [vmem:[#allocation2 + $0x262] sm:$0xff]
  %v506 = vld [vmem:[#allocation2 + $0x272] sm:$0xff]
  %v507 = vld [vmem:[#allocation2 + $0x27a] sm:$0xff]
  %v508 = vld [vmem:[#allocation2 + $0x28a] sm:$0xff]
  %v509 = vld [vmem:[#allocation2 + $0x292] sm:$0xff]
  %v510 = vld [vmem:[#allocation2 + $0x2a2] sm:$0xff]
  %v511 = vld [vmem:[#allocation2 + $0x2aa] sm:$0xff]
  %v512 = vld [vmem:[#allocation2 + $0x2ba] sm:$0xff]
  %v513 = vld [vmem:[#allocation2 + $0x2c2] sm:$0xff]
  %v514 = vld [vmem:[#allocation2 + $0x2d2] sm:$0xff]
  %v515 = vld [vmem:[#allocation2 + $0x2da] sm:$0xff]
  %v516 = vld [vmem:[#allocation2 + $0x2ea] sm:$0xff]
  %v517 = vld [vmem:[#allocation2 + $0x2f2] sm:$0xff]
  %v518 = vld [vmem:[#allocation2 + $0x302] sm:$0xff]
  %v519 = vld [vmem:[#allocation2 + $0x30a] sm:$0xff]
  %v520 = vld [vmem:[#allocation2 + $0x31a] sm:$0xff]
  %v521 = vld [vmem:[#allocation2 + $0x322] sm:$0xff]
  %v522 = vld [vmem:[%s265] sm:$0xff]
  %v523 = vld [vmem:[%s265 + $0x8] sm:$0xff]
  %v524 = vld [vmem:[%s265 + $0x18] sm:$0xff]
  %v525 = vld [vmem:[%s265 + $0x20] sm:$0xff]
  %v526 = vld [vmem:[%s265 + $0x30] sm:$0xff]
  %v527 = vld [vmem:[%s265 + $0x38] sm:$0xff]
  %v528 = vld [vmem:[%s265 + $0x48] sm:$0xff]
  %v529 = vld [vmem:[%s265 + $0x50] sm:$0xff]
  %v530 = vld [vmem:[%s265 + $0x60] sm:$0xff]
  %v531 = vld [vmem:[%s265 + $0x68] sm:$0xff]
  %v532 = vld [vmem:[%s265 + $0x78] sm:$0xff]
  %v533 = vld [vmem:[%s265 + $0x80] sm:$0xff]
  %v534 = vld [vmem:[%s265 + $0x90] sm:$0xff]
  %v535 = vld [vmem:[%s265 + $0x98] sm:$0xff]
  %v536 = vld [vmem:[%s265 + $0xa8] sm:$0xff]
  %v537 = vld [vmem:[%s265 + $0xb0] sm:$0xff]
  %v538 = vld [vmem:[%s265 + $0xc0] sm:$0xff]
  %v539 = vld [vmem:[%s265 + $0xc8] sm:$0xff]
  %v540 = vld [vmem:[%s265 + $0xd8] sm:$0xff]
  %v541 = vld [vmem:[%s265 + $0xe0] sm:$0xff]
  %v542 = vld [vmem:[%s265 + $0xf0] sm:$0xff]
  %v543 = vld [vmem:[%s265 + $0xf8] sm:$0xff]
  %v544 = vld [vmem:[%s265 + $0x108] sm:$0xff]
  %v545 = vld [vmem:[%s265 + $0x110] sm:$0xff]
  %v546 = vld [vmem:[%s265 + $0x120] sm:$0xff]
  %v547 = vld [vmem:[%s265 + $0x128] sm:$0xff]
  %v548 = vld [vmem:[%s265 + $0x138] sm:$0xff]
  %v549 = vld [vmem:[%s265 + $0x140] sm:$0xff]
  %v550 = vld [vmem:[%s265 + $0x150] sm:$0xff]
  %v551 = vld [vmem:[%s265 + $0x158] sm:$0xff]
  %v552 = vld [vmem:[%s265 + $0x168] sm:$0xff]
  %v553 = vld [vmem:[%s265 + $0x170] sm:$0xff]
  %v554 = vld [vmem:[%s265 + $0x1b0] sm:$0xff]
  %v555 = vld [vmem:[%s265 + $0x1b8] sm:$0xff]
  %v556 = vld [vmem:[%s265 + $0x1c8] sm:$0xff]
  %v557 = vld [vmem:[%s265 + $0x1d0] sm:$0xff]
  %v558 = vld [vmem:[%s265 + $0x1e0] sm:$0xff]
  %v559 = vld [vmem:[%s265 + $0x1e8] sm:$0xff]
  %v560 = vld [vmem:[%s265 + $0x1f8] sm:$0xff]
  %v561 = vld [vmem:[%s265 + $0x200] sm:$0xff]
  %v562 = vld [vmem:[%s265 + $0x210] sm:$0xff]
  %v563 = vld [vmem:[%s265 + $0x218] sm:$0xff]
  %v564 = vld [vmem:[%s265 + $0x228] sm:$0xff]
  %v565 = vld [vmem:[%s265 + $0x230] sm:$0xff]
  %v566 = vld [vmem:[%s265 + $0x240] sm:$0xff]
  %v567 = vld [vmem:[%s265 + $0x248] sm:$0xff]
  %v568 = vld [vmem:[%s265 + $0x258] sm:$0xff]
  %v569 = vld [vmem:[%s265 + $0x260] sm:$0xff]
  %v570 = vld [vmem:[%s265 + $0x270] sm:$0xff]
  %v571 = vld [vmem:[%s265 + $0x278] sm:$0xff]
  %v572 = vld [vmem:[%s265 + $0x288] sm:$0xff]
  %v573 = vld [vmem:[%s265 + $0x290] sm:$0xff]
  %v574 = vld [vmem:[%s265 + $0x2a0] sm:$0xff]
  %v575 = vld [vmem:[%s265 + $0x2a8] sm:$0xff]
  %v576 = vld [vmem:[%s265 + $0x2b8] sm:$0xff]
  %v577 = vld [vmem:[%s265 + $0x2c0] sm:$0xff]
  %v578 = vld [vmem:[%s265 + $0x2d0] sm:$0xff]
  %v579 = vld [vmem:[%s265 + $0x2d8] sm:$0xff]
  %v580 = vld [vmem:[%s265 + $0x2e8] sm:$0xff]
  %v581 = vld [vmem:[%s265 + $0x2f0] sm:$0xff]
  %v582 = vld [vmem:[%s265 + $0x300] sm:$0xff]
  %v583 = vld [vmem:[%s265 + $0x308] sm:$0xff]
  %v584 = vld [vmem:[%s265 + $0x318] sm:$0xff]
  %v585 = vld [vmem:[%s265 + $0x320] sm:$0xff]
  %v586 = vld [vmem:[%s265 + $0x1] sm:$0xff]
  %v587 = vld [vmem:[%s265 + $0x9] sm:$0xff]
  %v588 = vld [vmem:[%s265 + $0x19] sm:$0xff]
  %v589 = vld [vmem:[%s265 + $0x21] sm:$0xff]
  %v590 = vld [vmem:[%s265 + $0x31] sm:$0xff]
  %v591 = vld [vmem:[%s265 + $0x39] sm:$0xff]
  %v592 = vld [vmem:[%s265 + $0x49] sm:$0xff]
  %v593 = vld [vmem:[%s265 + $0x51] sm:$0xff]
  %v594 = vld [vmem:[%s265 + $0x61] sm:$0xff]
  %v595 = vld [vmem:[%s265 + $0x69] sm:$0xff]
  %v596 = vld [vmem:[%s265 + $0x79] sm:$0xff]
  %v597 = vld [vmem:[%s265 + $0x81] sm:$0xff]
  %v598 = vld [vmem:[%s265 + $0x91] sm:$0xff]
  %v599 = vld [vmem:[%s265 + $0x99] sm:$0xff]
  %v600 = vld [vmem:[%s265 + $0xa9] sm:$0xff]
  %v601 = vld [vmem:[%s265 + $0xb1] sm:$0xff]
  %v602 = vld [vmem:[%s265 + $0xc1] sm:$0xff]
  %v603 = vld [vmem:[%s265 + $0xc9] sm:$0xff]
  %v604 = vld [vmem:[%s265 + $0xd9] sm:$0xff]
  %v605 = vld [vmem:[%s265 + $0xe1] sm:$0xff]
  %v606 = vld [vmem:[%s265 + $0xf1] sm:$0xff]
  %v607 = vld [vmem:[%s265 + $0xf9] sm:$0xff]
  %v608 = vld [vmem:[%s265 + $0x109] sm:$0xff]
  %v609 = vld [vmem:[%s265 + $0x111] sm:$0xff]
  %v610 = vld [vmem:[%s265 + $0x121] sm:$0xff]
  %v611 = vld [vmem:[%s265 + $0x129] sm:$0xff]
  %v612 = vld [vmem:[%s265 + $0x139] sm:$0xff]
  %v613 = vld [vmem:[%s265 + $0x141] sm:$0xff]
  %v614 = vld [vmem:[%s265 + $0x151] sm:$0xff]
  %v615 = vld [vmem:[%s265 + $0x159] sm:$0xff]
  %v616 = vld [vmem:[%s265 + $0x169] sm:$0xff]
  %v617 = vld [vmem:[%s265 + $0x171] sm:$0xff]
  %v618 = vld [vmem:[%s265 + $0x1b1] sm:$0xff]
  %v619 = vld [vmem:[%s265 + $0x1b9] sm:$0xff]
  %v620 = vld [vmem:[%s265 + $0x1c9] sm:$0xff]
  %v621 = vld [vmem:[%s265 + $0x1d1] sm:$0xff]
  %v622 = vld [vmem:[%s265 + $0x1e1] sm:$0xff]
  %v623 = vld [vmem:[%s265 + $0x1e9] sm:$0xff]
  %v624 = vld [vmem:[%s265 + $0x1f9] sm:$0xff]
  %v625 = vld [vmem:[%s265 + $0x201] sm:$0xff]
  %v626 = vld [vmem:[%s265 + $0x211] sm:$0xff]
  %v627 = vld [vmem:[%s265 + $0x219] sm:$0xff]
  %v628 = vld [vmem:[%s265 + $0x229] sm:$0xff]
  %v629 = vld [vmem:[%s265 + $0x231] sm:$0xff]
  %v630 = vld [vmem:[%s265 + $0x241] sm:$0xff]
  %v631 = vld [vmem:[%s265 + $0x249] sm:$0xff]
  %v632 = vld [vmem:[%s265 + $0x259] sm:$0xff]
  %v633 = vld [vmem:[%s265 + $0x261] sm:$0xff]
  %v634 = vld [vmem:[%s265 + $0x271] sm:$0xff]
  %v635 = vld [vmem:[%s265 + $0x279] sm:$0xff]
  %v636 = vld [vmem:[%s265 + $0x289] sm:$0xff]
  %v637 = vld [vmem:[%s265 + $0x291] sm:$0xff]
  %v638 = vld [vmem:[%s265 + $0x2a1] sm:$0xff]
  %v639 = vld [vmem:[%s265 + $0x2a9] sm:$0xff]
  %v640 = vld [vmem:[%s265 + $0x2b9] sm:$0xff]
  %v641 = vld [vmem:[%s265 + $0x2c1] sm:$0xff]
  %v642 = vld [vmem:[%s265 + $0x2d1] sm:$0xff]
  %v643 = vld [vmem:[%s265 + $0x2d9] sm:$0xff]
  %v644 = vld [vmem:[%s265 + $0x2e9] sm:$0xff]
  %v645 = vld [vmem:[%s265 + $0x2f1] sm:$0xff]
  %v646 = vld [vmem:[%s265 + $0x301] sm:$0xff]
  %v647 = vld [vmem:[%s265 + $0x309] sm:$0xff]
  %v648 = vld [vmem:[%s265 + $0x319] sm:$0xff]
  %v649 = vld [vmem:[%s265 + $0x321] sm:$0xff]
  %v650 = vld [vmem:[%s265 + $0x2] sm:$0xff]
  %v651 = vld [vmem:[%s265 + $0xa] sm:$0xff]
  %v652 = vld [vmem:[%s265 + $0x1a] sm:$0xff]
  %v653 = vld [vmem:[%s265 + $0x22] sm:$0xff]
  %v654 = vld [vmem:[%s265 + $0x32] sm:$0xff]
  %v655 = vld [vmem:[%s265 + $0x3a] sm:$0xff]
  %v656 = vld [vmem:[%s265 + $0x4a] sm:$0xff]
  %v657 = vld [vmem:[%s265 + $0x52] sm:$0xff]
  %v658 = vld [vmem:[%s265 + $0x62] sm:$0xff]
  %v659 = vld [vmem:[%s265 + $0x6a] sm:$0xff]
  %v660 = vld [vmem:[%s265 + $0x7a] sm:$0xff]
  %v661 = vld [vmem:[%s265 + $0x82] sm:$0xff]
  %v662 = vld [vmem:[%s265 + $0x92] sm:$0xff]
  %v663 = vld [vmem:[%s265 + $0x9a] sm:$0xff]
  %v664 = vld [vmem:[%s265 + $0xaa] sm:$0xff]
  %v665 = vld [vmem:[%s265 + $0xb2] sm:$0xff]
  %v666 = vld [vmem:[%s265 + $0xc2] sm:$0xff]
  %v667 = vld [vmem:[%s265 + $0xca] sm:$0xff]
  %v668 = vld [vmem:[%s265 + $0xda] sm:$0xff]
  %v669 = vld [vmem:[%s265 + $0xe2] sm:$0xff]
  %v670 = vld [vmem:[%s265 + $0xf2] sm:$0xff]
  %v671 = vld [vmem:[%s265 + $0xfa] sm:$0xff]
  %v672 = vld [vmem:[%s265 + $0x10a] sm:$0xff]
  %v673 = vld [vmem:[%s265 + $0x112] sm:$0xff]
  %v674 = vld [vmem:[%s265 + $0x122] sm:$0xff]
  %v675 = vld [vmem:[%s265 + $0x12a] sm:$0xff]
  %v676 = vld [vmem:[%s265 + $0x13a] sm:$0xff]
  %v677 = vld [vmem:[%s265 + $0x142] sm:$0xff]
  %v678 = vld [vmem:[%s265 + $0x152] sm:$0xff]
  %v679 = vld [vmem:[%s265 + $0x15a] sm:$0xff]
  %v680 = vld [vmem:[%s265 + $0x16a] sm:$0xff]
  %v681 = vld [vmem:[%s265 + $0x172] sm:$0xff]
  %v682 = vld [vmem:[%s265 + $0x1b2] sm:$0xff]
  %v683 = vld [vmem:[%s265 + $0x1ba] sm:$0xff]
  %v684 = vld [vmem:[%s265 + $0x1ca] sm:$0xff]
  %v685 = vld [vmem:[%s265 + $0x1d2] sm:$0xff]
  %v686 = vld [vmem:[%s265 + $0x1e2] sm:$0xff]
  %v687 = vld [vmem:[%s265 + $0x1ea] sm:$0xff]
  %v688 = vld [vmem:[%s265 + $0x1fa] sm:$0xff]
  %v689 = vld [vmem:[%s265 + $0x202] sm:$0xff]
  %v690 = vld [vmem:[%s265 + $0x212] sm:$0xff]
  %v691 = vld [vmem:[%s265 + $0x21a] sm:$0xff]
  %v692 = vld [vmem:[%s265 + $0x22a] sm:$0xff]
  %v693 = vld [vmem:[%s265 + $0x232] sm:$0xff]
  %v694 = vld [vmem:[%s265 + $0x242] sm:$0xff]
  %v695 = vld [vmem:[%s265 + $0x24a] sm:$0xff]
  %v696 = vld [vmem:[%s265 + $0x25a] sm:$0xff]
  %v697 = vld [vmem:[%s265 + $0x262] sm:$0xff]
  %v698 = vld [vmem:[%s265 + $0x272] sm:$0xff]
  %v699 = vld [vmem:[%s265 + $0x27a] sm:$0xff]
  %v700 = vld [vmem:[%s265 + $0x28a] sm:$0xff]
  %v701 = vld [vmem:[%s265 + $0x292] sm:$0xff]
  %v702 = vld [vmem:[%s265 + $0x2a2] sm:$0xff]
  %v703 = vld [vmem:[%s265 + $0x2aa] sm:$0xff]
  %v704 = vld [vmem:[%s265 + $0x2ba] sm:$0xff]
  %v705 = vld [vmem:[%s265 + $0x2c2] sm:$0xff]
  %v706 = vld [vmem:[%s265 + $0x2d2] sm:$0xff]
  %v707 = vld [vmem:[%s265 + $0x2da] sm:$0xff]
  %v708 = vld [vmem:[%s265 + $0x2ea] sm:$0xff]
  %v709 = vld [vmem:[%s265 + $0x2f2] sm:$0xff]
  %v710 = vld [vmem:[%s265 + $0x302] sm:$0xff]
  %v711 = vld [vmem:[%s265 + $0x30a] sm:$0xff]
  %v712 = vld [vmem:[%s265 + $0x31a] sm:$0xff]
  %v713 = vld [vmem:[%s265 + $0x322] sm:$0xff]
  %s714 = scalar_lea.vmem [#allocation2], 48
  %v715 = vld [vmem:[%s714] sm:$0xff]
  %v716 = vld [vmem:[%s714 + $0x8] sm:$0xff]
  %v717 = vld [vmem:[%s714 + $0x18] sm:$0xff]
  %v718 = vld [vmem:[%s714 + $0x20] sm:$0xff]
  %v719 = vld [vmem:[%s714 + $0x30] sm:$0xff]
  %v720 = vld [vmem:[%s714 + $0x38] sm:$0xff]
  %v721 = vld [vmem:[%s714 + $0x48] sm:$0xff]
  %v722 = vld [vmem:[%s714 + $0x50] sm:$0xff]
  %v723 = vld [vmem:[%s714 + $0x60] sm:$0xff]
  %v724 = vld [vmem:[%s714 + $0x68] sm:$0xff]
  %v725 = vld [vmem:[%s714 + $0x78] sm:$0xff]
  %v726 = vld [vmem:[%s714 + $0x80] sm:$0xff]
  %v727 = vld [vmem:[%s714 + $0x90] sm:$0xff]
  %v728 = vld [vmem:[%s714 + $0x98] sm:$0xff]
  %v729 = vld [vmem:[%s714 + $0xa8] sm:$0xff]
  %v730 = vld [vmem:[%s714 + $0xb0] sm:$0xff]
  %v731 = vld [vmem:[%s714 + $0xc0] sm:$0xff]
  %v732 = vld [vmem:[%s714 + $0xc8] sm:$0xff]
  %v733 = vld [vmem:[%s714 + $0xd8] sm:$0xff]
  %v734 = vld [vmem:[%s714 + $0xe0] sm:$0xff]
  %v735 = vld [vmem:[%s714 + $0xf0] sm:$0xff]
  %v736 = vld [vmem:[%s714 + $0xf8] sm:$0xff]
  %v737 = vld [vmem:[%s714 + $0x108] sm:$0xff]
  %v738 = vld [vmem:[%s714 + $0x110] sm:$0xff]
  %v739 = vld [vmem:[%s714 + $0x120] sm:$0xff]
  %v740 = vld [vmem:[%s714 + $0x128] sm:$0xff]
  %v741 = vld [vmem:[%s714 + $0x138] sm:$0xff]
  %v742 = vld [vmem:[%s714 + $0x140] sm:$0xff]
  %v743 = vld [vmem:[%s714 + $0x150] sm:$0xff]
  %v744 = vld [vmem:[%s714 + $0x158] sm:$0xff]
  %v745 = vld [vmem:[%s714 + $0x168] sm:$0xff]
  %v746 = vld [vmem:[%s714 + $0x170] sm:$0xff]
  %v747 = vld [vmem:[%s714 + $0x1b0] sm:$0xff]
  %v748 = vld [vmem:[%s714 + $0x1b8] sm:$0xff]
  %v749 = vld [vmem:[%s714 + $0x1c8] sm:$0xff]
  %v750 = vld [vmem:[%s714 + $0x1d0] sm:$0xff]
  %v751 = vld [vmem:[%s714 + $0x1e0] sm:$0xff]
  %v752 = vld [vmem:[%s714 + $0x1e8] sm:$0xff]
  %v753 = vld [vmem:[%s714 + $0x1f8] sm:$0xff]
  %v754 = vld [vmem:[%s714 + $0x200] sm:$0xff]
  %v755 = vld [vmem:[%s714 + $0x210] sm:$0xff]
  %v756 = vld [vmem:[%s714 + $0x218] sm:$0xff]
  %v757 = vld [vmem:[%s714 + $0x228] sm:$0xff]
  %v758 = vld [vmem:[%s714 + $0x230] sm:$0xff]
  %v759 = vld [vmem:[%s714 + $0x240] sm:$0xff]
  %v760 = vld [vmem:[%s714 + $0x248] sm:$0xff]
  %v761 = vld [vmem:[%s714 + $0x258] sm:$0xff]
  %v762 = vld [vmem:[%s714 + $0x260] sm:$0xff]
  %v763 = vld [vmem:[%s714 + $0x270] sm:$0xff]
  %v764 = vld [vmem:[%s714 + $0x278] sm:$0xff]
  %v765 = vld [vmem:[%s714 + $0x288] sm:$0xff]
  %v766 = vld [vmem:[%s714 + $0x290] sm:$0xff]
  %v767 = vld [vmem:[%s714 + $0x2a0] sm:$0xff]
  %v768 = vld [vmem:[%s714 + $0x2a8] sm:$0xff]
  %v769 = vld [vmem:[%s714 + $0x2b8] sm:$0xff]
  %v770 = vld [vmem:[%s714 + $0x2c0] sm:$0xff]
  %v771 = vld [vmem:[%s714 + $0x2d0] sm:$0xff]
  %v772 = vld [vmem:[%s714 + $0x2d8] sm:$0xff]
  %v773 = vld [vmem:[%s714 + $0x2e8] sm:$0xff]
  %v774 = vld [vmem:[%s714 + $0x2f0] sm:$0xff]
  %v775 = vld [vmem:[%s714 + $0x300] sm:$0xff]
  %v776 = vld [vmem:[%s714 + $0x308] sm:$0xff]
  %v777 = vld [vmem:[%s714 + $0x318] sm:$0xff]
  %v778 = vld [vmem:[%s714 + $0x320] sm:$0xff]
  %v779 = vld [vmem:[%s714 + $0x1] sm:$0xff]
  %v780 = vld [vmem:[%s714 + $0x9] sm:$0xff]
  %v781 = vld [vmem:[%s714 + $0x19] sm:$0xff]
  %v782 = vld [vmem:[%s714 + $0x21] sm:$0xff]
  %v783 = vld [vmem:[%s714 + $0x31] sm:$0xff]
  %v784 = vld [vmem:[%s714 + $0x39] sm:$0xff]
  %v785 = vld [vmem:[%s714 + $0x49] sm:$0xff]
  %v786 = vld [vmem:[%s714 + $0x51] sm:$0xff]
  %v787 = vld [vmem:[%s714 + $0x61] sm:$0xff]
  %v788 = vld [vmem:[%s714 + $0x69] sm:$0xff]
  %v789 = vld [vmem:[%s714 + $0x79] sm:$0xff]
  %v790 = vld [vmem:[%s714 + $0x81] sm:$0xff]
  %v791 = vld [vmem:[%s714 + $0x91] sm:$0xff]
  %v792 = vld [vmem:[%s714 + $0x99] sm:$0xff]
  %v793 = vld [vmem:[%s714 + $0xa9] sm:$0xff]
  %v794 = vld [vmem:[%s714 + $0xb1] sm:$0xff]
  %v795 = vld [vmem:[%s714 + $0xc1] sm:$0xff]
  %v796 = vld [vmem:[%s714 + $0xc9] sm:$0xff]
  %v797 = vld [vmem:[%s714 + $0xd9] sm:$0xff]
  %v798 = vld [vmem:[%s714 + $0xe1] sm:$0xff]
  %v799 = vld [vmem:[%s714 + $0xf1] sm:$0xff]
  %v800 = vld [vmem:[%s714 + $0xf9] sm:$0xff]
  %v801 = vld [vmem:[%s714 + $0x109] sm:$0xff]
  %v802 = vld [vmem:[%s714 + $0x111] sm:$0xff]
  %v803 = vld [vmem:[%s714 + $0x121] sm:$0xff]
  %v804 = vld [vmem:[%s714 + $0x129] sm:$0xff]
  %v805 = vld [vmem:[%s714 + $0x139] sm:$0xff]
  %v806 = vld [vmem:[%s714 + $0x141] sm:$0xff]
  %v807 = vld [vmem:[%s714 + $0x151] sm:$0xff]
  %v808 = vld [vmem:[%s714 + $0x159] sm:$0xff]
  %v809 = vld [vmem:[%s714 + $0x169] sm:$0xff]
  %v810 = vld [vmem:[%s714 + $0x171] sm:$0xff]
  %v811 = vld [vmem:[%s714 + $0x1b1] sm:$0xff]
  %v812 = vld [vmem:[%s714 + $0x1b9] sm:$0xff]
  %v813 = vld [vmem:[%s714 + $0x1c9] sm:$0xff]
  %v814 = vld [vmem:[%s714 + $0x1d1] sm:$0xff]
  %v815 = vld [vmem:[%s714 + $0x1e1] sm:$0xff]
  %v816 = vld [vmem:[%s714 + $0x1e9] sm:$0xff]
  %v817 = vld [vmem:[%s714 + $0x1f9] sm:$0xff]
  %v818 = vld [vmem:[%s714 + $0x201] sm:$0xff]
  %v819 = vld [vmem:[%s714 + $0x211] sm:$0xff]
  %v820 = vld [vmem:[%s714 + $0x219] sm:$0xff]
  %v821 = vld [vmem:[%s714 + $0x229] sm:$0xff]
  %v822 = vld [vmem:[%s714 + $0x231] sm:$0xff]
  %v823 = vld [vmem:[%s714 + $0x241] sm:$0xff]
  %v824 = vld [vmem:[%s714 + $0x249] sm:$0xff]
  %v825 = vld [vmem:[%s714 + $0x259] sm:$0xff]
  %v826 = vld [vmem:[%s714 + $0x261] sm:$0xff]
  %v827 = vld [vmem:[%s714 + $0x271] sm:$0xff]
  %v828 = vld [vmem:[%s714 + $0x279] sm:$0xff]
  %v829 = vld [vmem:[%s714 + $0x289] sm:$0xff]
  %v830 = vld [vmem:[%s714 + $0x291] sm:$0xff]
  %v831 = vld [vmem:[%s714 + $0x2a1] sm:$0xff]
  %v832 = vld [vmem:[%s714 + $0x2a9] sm:$0xff]
  %v833 = vld [vmem:[%s714 + $0x2b9] sm:$0xff]
  %v834 = vld [vmem:[%s714 + $0x2c1] sm:$0xff]
  %v835 = vld [vmem:[%s714 + $0x2d1] sm:$0xff]
  %v836 = vld [vmem:[%s714 + $0x2d9] sm:$0xff]
  %v837 = vld [vmem:[%s714 + $0x2e9] sm:$0xff]
  %v838 = vld [vmem:[%s714 + $0x2f1] sm:$0xff]
  %v839 = vld [vmem:[%s714 + $0x301] sm:$0xff]
  %v840 = vld [vmem:[%s714 + $0x309] sm:$0xff]
  %v841 = vld [vmem:[%s714 + $0x319] sm:$0xff]
  %v842 = vld [vmem:[%s714 + $0x321] sm:$0xff]
  %v843 = vld [vmem:[%s714 + $0x2] sm:$0xff]
  %v844 = vld [vmem:[%s714 + $0xa] sm:$0xff]
  %v845 = vld [vmem:[%s714 + $0x1a] sm:$0xff]
  %v846 = vld [vmem:[%s714 + $0x22] sm:$0xff]
  %v847 = vld [vmem:[%s714 + $0x32] sm:$0xff]
  %v848 = vld [vmem:[%s714 + $0x3a] sm:$0xff]
  %v849 = vld [vmem:[%s714 + $0x4a] sm:$0xff]
  %v850 = vld [vmem:[%s714 + $0x52] sm:$0xff]
  %v851 = vld [vmem:[%s714 + $0x62] sm:$0xff]
  %v852 = vld [vmem:[%s714 + $0x6a] sm:$0xff]
  %v853 = vld [vmem:[%s714 + $0x7a] sm:$0xff]
  %v854 = vld [vmem:[%s714 + $0x82] sm:$0xff]
  %v855 = vld [vmem:[%s714 + $0x92] sm:$0xff]
  %v856 = vld [vmem:[%s714 + $0x9a] sm:$0xff]
  %v857 = vld [vmem:[%s714 + $0xaa] sm:$0xff]
  %v858 = vld [vmem:[%s714 + $0xb2] sm:$0xff]
  %v859 = vld [vmem:[%s714 + $0xc2] sm:$0xff]
  %v860 = vld [vmem:[%s714 + $0xca] sm:$0xff]
  %v861 = vld [vmem:[%s714 + $0xda] sm:$0xff]
  %v862 = vld [vmem:[%s714 + $0xe2] sm:$0xff]
  %v863 = vld [vmem:[%s714 + $0xf2] sm:$0xff]
  %v864 = vld [vmem:[%s714 + $0xfa] sm:$0xff]
  %v865 = vld [vmem:[%s714 + $0x10a] sm:$0xff]
  %v866 = vld [vmem:[%s714 + $0x112] sm:$0xff]
  %v867 = vld [vmem:[%s714 + $0x122] sm:$0xff]
  %v868 = vld [vmem:[%s714 + $0x12a] sm:$0xff]
  %v869 = vld [vmem:[%s714 + $0x13a] sm:$0xff]
  %v870 = vld [vmem:[%s714 + $0x142] sm:$0xff]
  %v871 = vld [vmem:[%s714 + $0x152] sm:$0xff]
  %v872 = vld [vmem:[%s714 + $0x15a] sm:$0xff]
  %v873 = vld [vmem:[%s714 + $0x16a] sm:$0xff]
  %v874 = vld [vmem:[%s714 + $0x172] sm:$0xff]
  %v875 = vld [vmem:[%s714 + $0x1b2] sm:$0xff]
  %v876 = vld [vmem:[%s714 + $0x1ba] sm:$0xff]
  %v877 = vld [vmem:[%s714 + $0x1ca] sm:$0xff]
  %v878 = vld [vmem:[%s714 + $0x1d2] sm:$0xff]
  %v879 = vld [vmem:[%s714 + $0x1e2] sm:$0xff]
  %v880 = vld [vmem:[%s714 + $0x1ea] sm:$0xff]
  %v881 = vld [vmem:[%s714 + $0x1fa] sm:$0xff]
  %v882 = vld [vmem:[%s714 + $0x202] sm:$0xff]
  %v883 = vld [vmem:[%s714 + $0x212] sm:$0xff]
  %v884 = vld [vmem:[%s714 + $0x21a] sm:$0xff]
  %v885 = vld [vmem:[%s714 + $0x22a] sm:$0xff]
  %v886 = vld [vmem:[%s714 + $0x232] sm:$0xff]
  %v887 = vld [vmem:[%s714 + $0x242] sm:$0xff]
  %v888 = vld [vmem:[%s714 + $0x24a] sm:$0xff]
  %v889 = vld [vmem:[%s714 + $0x25a] sm:$0xff]
  %v890 = vld [vmem:[%s714 + $0x262] sm:$0xff]
  %v891 = vld [vmem:[%s714 + $0x272] sm:$0xff]
  %v892 = vld [vmem:[%s714 + $0x27a] sm:$0xff]
  %v893 = vld [vmem:[%s714 + $0x28a] sm:$0xff]
  %v894 = vld [vmem:[%s714 + $0x292] sm:$0xff]
  %v895 = vld [vmem:[%s714 + $0x2a2] sm:$0xff]
  %v896 = vld [vmem:[%s714 + $0x2aa] sm:$0xff]
  %v897 = vld [vmem:[%s714 + $0x2ba] sm:$0xff]
  %v898 = vld [vmem:[%s714 + $0x2c2] sm:$0xff]
  %v899 = vld [vmem:[%s714 + $0x2d2] sm:$0xff]
  %v900 = vld [vmem:[%s714 + $0x2da] sm:$0xff]
  %v901 = vld [vmem:[%s714 + $0x2ea] sm:$0xff]
  %v902 = vld [vmem:[%s714 + $0x2f2] sm:$0xff]
  %v903 = vld [vmem:[%s714 + $0x302] sm:$0xff]
  %v904 = vld [vmem:[%s714 + $0x30a] sm:$0xff]
  %v905 = vld [vmem:[%s714 + $0x31a] sm:$0xff]
  %v906 = vld [vmem:[%s714 + $0x322] sm:$0xff]
  %971 = vrot.lane.b32.xlu0 %v394, 8
  %v972 = vpop.permute.xlu0 %971
  %973 = vrot.lane.b32.xlu0 %v395, 8
  %v974 = vpop.permute.xlu0 %973
  %975 = vrot.lane.b32.xlu0 %v396, 8
  %v976 = vpop.permute.xlu0 %975
  %977 = vrot.lane.b32.xlu0 %v397, 8
  %v978 = vpop.permute.xlu0 %977
  %979 = vrot.lane.b32.xlu0 %v398, 8
  %v980 = vpop.permute.xlu0 %979
  %981 = vrot.lane.b32.xlu0 %v399, 8
  %v982 = vpop.permute.xlu0 %981
  %983 = vrot.lane.b32.xlu0 %v400, 8
  %v984 = vpop.permute.xlu0 %983
  %985 = vrot.lane.b32.xlu0 %v401, 8
  %v986 = vpop.permute.xlu0 %985
  %987 = vrot.lane.b32.xlu0 %v402, 8
  %v988 = vpop.permute.xlu0 %987
  %989 = vrot.lane.b32.xlu0 %v403, 8
  %v990 = vpop.permute.xlu0 %989
  %991 = vrot.lane.b32.xlu0 %v404, 8
  %v992 = vpop.permute.xlu0 %991
  %993 = vrot.lane.b32.xlu0 %v405, 8
  %v994 = vpop.permute.xlu0 %993
  %995 = vrot.lane.b32.xlu0 %v406, 8
  %v996 = vpop.permute.xlu0 %995
  %997 = vrot.lane.b32.xlu0 %v407, 8
  %v998 = vpop.permute.xlu0 %997
  %999 = vrot.lane.b32.xlu0 %v408, 8
  %v1000 = vpop.permute.xlu0 %999
  %1001 = vrot.lane.b32.xlu0 %v409, 8
  %v1002 = vpop.permute.xlu0 %1001
  %1003 = vrot.lane.b32.xlu0 %v410, 8
  %v1004 = vpop.permute.xlu0 %1003
  %1005 = vrot.lane.b32.xlu0 %v411, 8
  %v1006 = vpop.permute.xlu0 %1005
  %1007 = vrot.lane.b32.xlu0 %v412, 8
  %v1008 = vpop.permute.xlu0 %1007
  %1009 = vrot.lane.b32.xlu0 %v413, 8
  %v1010 = vpop.permute.xlu0 %1009
  %1011 = vrot.lane.b32.xlu0 %v414, 8
  %v1012 = vpop.permute.xlu0 %1011
  %1013 = vrot.lane.b32.xlu0 %v415, 8
  %v1014 = vpop.permute.xlu0 %1013
  %1015 = vrot.lane.b32.xlu0 %v416, 8
  %v1016 = vpop.permute.xlu0 %1015
  %1017 = vrot.lane.b32.xlu0 %v417, 8
  %v1018 = vpop.permute.xlu0 %1017
  %1019 = vrot.lane.b32.xlu0 %v418, 8
  %v1020 = vpop.permute.xlu0 %1019
  %1021 = vrot.lane.b32.xlu0 %v419, 8
  %v1022 = vpop.permute.xlu0 %1021
  %1023 = vrot.lane.b32.xlu0 %v420, 8
  %v1024 = vpop.permute.xlu0 %1023
  %1025 = vrot.lane.b32.xlu0 %v421, 8
  %v1026 = vpop.permute.xlu0 %1025
  %1027 = vrot.lane.b32.xlu0 %v422, 8
  %v1028 = vpop.permute.xlu0 %1027
  %1029 = vrot.lane.b32.xlu0 %v423, 8
  %v1030 = vpop.permute.xlu0 %1029
  %1031 = vrot.lane.b32.xlu0 %v424, 8
  %v1032 = vpop.permute.xlu0 %1031
  %1033 = vrot.lane.b32.xlu0 %v425, 8
  %v1034 = vpop.permute.xlu0 %1033
  %1035 = vrot.lane.b32.xlu0 %v426, 8
  %v1036 = vpop.permute.xlu0 %1035
  %1037 = vrot.lane.b32.xlu0 %v427, 8
  %v1038 = vpop.permute.xlu0 %1037
  %1039 = vrot.lane.b32.xlu0 %v428, 8
  %v1040 = vpop.permute.xlu0 %1039
  %1041 = vrot.lane.b32.xlu0 %v429, 8
  %v1042 = vpop.permute.xlu0 %1041
  %1043 = vrot.lane.b32.xlu0 %v430, 8
  %v1044 = vpop.permute.xlu0 %1043
  %1045 = vrot.lane.b32.xlu0 %v431, 8
  %v1046 = vpop.permute.xlu0 %1045
  %1047 = vrot.lane.b32.xlu0 %v432, 8
  %v1048 = vpop.permute.xlu0 %1047
  %1049 = vrot.lane.b32.xlu0 %v433, 8
  %v1050 = vpop.permute.xlu0 %1049
  %1051 = vrot.lane.b32.xlu0 %v434, 8
  %v1052 = vpop.permute.xlu0 %1051
  %1053 = vrot.lane.b32.xlu0 %v435, 8
  %v1054 = vpop.permute.xlu0 %1053
  %1055 = vrot.lane.b32.xlu0 %v436, 8
  %v1056 = vpop.permute.xlu0 %1055
  %1057 = vrot.lane.b32.xlu0 %v437, 8
  %v1058 = vpop.permute.xlu0 %1057
  %1059 = vrot.lane.b32.xlu0 %v438, 8
  %v1060 = vpop.permute.xlu0 %1059
  %1061 = vrot.lane.b32.xlu0 %v439, 8
  %v1062 = vpop.permute.xlu0 %1061
  %1063 = vrot.lane.b32.xlu0 %v440, 8
  %v1064 = vpop.permute.xlu0 %1063
  %1065 = vrot.lane.b32.xlu0 %v441, 8
  %v1066 = vpop.permute.xlu0 %1065
  %1067 = vrot.lane.b32.xlu0 %v442, 8
  %v1068 = vpop.permute.xlu0 %1067
  %1069 = vrot.lane.b32.xlu0 %v443, 8
  %v1070 = vpop.permute.xlu0 %1069
  %1071 = vrot.lane.b32.xlu0 %v444, 8
  %v1072 = vpop.permute.xlu0 %1071
  %1073 = vrot.lane.b32.xlu0 %v445, 8
  %v1074 = vpop.permute.xlu0 %1073
  %1075 = vrot.lane.b32.xlu0 %v446, 8
  %v1076 = vpop.permute.xlu0 %1075
  %1077 = vrot.lane.b32.xlu0 %v447, 8
  %v1078 = vpop.permute.xlu0 %1077
  %1079 = vrot.lane.b32.xlu0 %v448, 8
  %v1080 = vpop.permute.xlu0 %1079
  %1081 = vrot.lane.b32.xlu0 %v449, 8
  %v1082 = vpop.permute.xlu0 %1081
  %1083 = vrot.lane.b32.xlu0 %v450, 8
  %v1084 = vpop.permute.xlu0 %1083
  %1085 = vrot.lane.b32.xlu0 %v451, 8
  %v1086 = vpop.permute.xlu0 %1085
  %1087 = vrot.lane.b32.xlu0 %v452, 8
  %v1088 = vpop.permute.xlu0 %1087
  %1089 = vrot.lane.b32.xlu0 %v453, 8
  %v1090 = vpop.permute.xlu0 %1089
  %1091 = vrot.lane.b32.xlu0 %v454, 8
  %v1092 = vpop.permute.xlu0 %1091
  %1093 = vrot.lane.b32.xlu0 %v455, 8
  %v1094 = vpop.permute.xlu0 %1093
  %1095 = vrot.lane.b32.xlu0 %v456, 8
  %v1096 = vpop.permute.xlu0 %1095
  %1097 = vrot.lane.b32.xlu0 %v457, 8
  %v1098 = vpop.permute.xlu0 %1097
  %1227 = vrot.lane.b32.xlu0 %v458, 16
  %v1228 = vpop.permute.xlu0 %1227
  %1229 = vrot.lane.b32.xlu0 %v459, 16
  %v1230 = vpop.permute.xlu0 %1229
  %1231 = vrot.lane.b32.xlu0 %v460, 16
  %v1232 = vpop.permute.xlu0 %1231
  %1233 = vrot.lane.b32.xlu0 %v461, 16
  %v1234 = vpop.permute.xlu0 %1233
  %1235 = vrot.lane.b32.xlu0 %v462, 16
  %v1236 = vpop.permute.xlu0 %1235
  %1237 = vrot.lane.b32.xlu0 %v463, 16
  %v1238 = vpop.permute.xlu0 %1237
  %1239 = vrot.lane.b32.xlu0 %v464, 16
  %v1240 = vpop.permute.xlu0 %1239
  %1241 = vrot.lane.b32.xlu0 %v465, 16
  %v1242 = vpop.permute.xlu0 %1241
  %1243 = vrot.lane.b32.xlu0 %v466, 16
  %v1244 = vpop.permute.xlu0 %1243
  %1245 = vrot.lane.b32.xlu0 %v467, 16
  %v1246 = vpop.permute.xlu0 %1245
  %1247 = vrot.lane.b32.xlu0 %v468, 16
  %v1248 = vpop.permute.xlu0 %1247
  %1249 = vrot.lane.b32.xlu0 %v469, 16
  %v1250 = vpop.permute.xlu0 %1249
  %1251 = vrot.lane.b32.xlu0 %v470, 16
  %v1252 = vpop.permute.xlu0 %1251
  %1253 = vrot.lane.b32.xlu0 %v471, 16
  %v1254 = vpop.permute.xlu0 %1253
  %1255 = vrot.lane.b32.xlu0 %v472, 16
  %v1256 = vpop.permute.xlu0 %1255
  %1257 = vrot.lane.b32.xlu0 %v473, 16
  %v1258 = vpop.permute.xlu0 %1257
  %1259 = vrot.lane.b32.xlu0 %v474, 16
  %v1260 = vpop.permute.xlu0 %1259
  %1261 = vrot.lane.b32.xlu0 %v475, 16
  %v1262 = vpop.permute.xlu0 %1261
  %1263 = vrot.lane.b32.xlu0 %v476, 16
  %v1264 = vpop.permute.xlu0 %1263
  %1265 = vrot.lane.b32.xlu0 %v477, 16
  %v1266 = vpop.permute.xlu0 %1265
  %1267 = vrot.lane.b32.xlu0 %v478, 16
  %v1268 = vpop.permute.xlu0 %1267
  %1269 = vrot.lane.b32.xlu0 %v479, 16
  %v1270 = vpop.permute.xlu0 %1269
  %1271 = vrot.lane.b32.xlu0 %v480, 16
  %v1272 = vpop.permute.xlu0 %1271
  %1273 = vrot.lane.b32.xlu0 %v481, 16
  %v1274 = vpop.permute.xlu0 %1273
  %1275 = vrot.lane.b32.xlu0 %v482, 16
  %v1276 = vpop.permute.xlu0 %1275
  %1277 = vrot.lane.b32.xlu0 %v483, 16
  %v1278 = vpop.permute.xlu0 %1277
  %1279 = vrot.lane.b32.xlu0 %v484, 16
  %v1280 = vpop.permute.xlu0 %1279
  %1281 = vrot.lane.b32.xlu0 %v485, 16
  %v1282 = vpop.permute.xlu0 %1281
  %1283 = vrot.lane.b32.xlu0 %v486, 16
  %v1284 = vpop.permute.xlu0 %1283
  %1285 = vrot.lane.b32.xlu0 %v487, 16
  %v1286 = vpop.permute.xlu0 %1285
  %1287 = vrot.lane.b32.xlu0 %v488, 16
  %v1288 = vpop.permute.xlu0 %1287
  %1289 = vrot.lane.b32.xlu0 %v489, 16
  %v1290 = vpop.permute.xlu0 %1289
  %1291 = vrot.lane.b32.xlu0 %v490, 16
  %v1292 = vpop.permute.xlu0 %1291
  %1293 = vrot.lane.b32.xlu0 %v491, 16
  %v1294 = vpop.permute.xlu0 %1293
  %1295 = vrot.lane.b32.xlu0 %v492, 16
  %v1296 = vpop.permute.xlu0 %1295
  %1297 = vrot.lane.b32.xlu0 %v493, 16
  %v1298 = vpop.permute.xlu0 %1297
  %1299 = vrot.lane.b32.xlu0 %v494, 16
  %v1300 = vpop.permute.xlu0 %1299
  %1301 = vrot.lane.b32.xlu0 %v495, 16
  %v1302 = vpop.permute.xlu0 %1301
  %1303 = vrot.lane.b32.xlu0 %v496, 16
  %v1304 = vpop.permute.xlu0 %1303
  %1305 = vrot.lane.b32.xlu0 %v497, 16
  %v1306 = vpop.permute.xlu0 %1305
  %1307 = vrot.lane.b32.xlu0 %v498, 16
  %v1308 = vpop.permute.xlu0 %1307
  %1309 = vrot.lane.b32.xlu0 %v499, 16
  %v1310 = vpop.permute.xlu0 %1309
  %1311 = vrot.lane.b32.xlu0 %v500, 16
  %v1312 = vpop.permute.xlu0 %1311
  %1313 = vrot.lane.b32.xlu0 %v501, 16
  %v1314 = vpop.permute.xlu0 %1313
  %1315 = vrot.lane.b32.xlu0 %v502, 16
  %v1316 = vpop.permute.xlu0 %1315
  %1317 = vrot.lane.b32.xlu0 %v503, 16
  %v1318 = vpop.permute.xlu0 %1317
  %1319 = vrot.lane.b32.xlu0 %v504, 16
  %v1320 = vpop.permute.xlu0 %1319
  %1321 = vrot.lane.b32.xlu0 %v505, 16
  %v1322 = vpop.permute.xlu0 %1321
  %1323 = vrot.lane.b32.xlu0 %v506, 16
  %v1324 = vpop.permute.xlu0 %1323
  %1325 = vrot.lane.b32.xlu0 %v507, 16
  %v1326 = vpop.permute.xlu0 %1325
  %1327 = vrot.lane.b32.xlu0 %v508, 16
  %v1328 = vpop.permute.xlu0 %1327
  %1329 = vrot.lane.b32.xlu0 %v509, 16
  %v1330 = vpop.permute.xlu0 %1329
  %1331 = vrot.lane.b32.xlu0 %v510, 16
  %v1332 = vpop.permute.xlu0 %1331
  %1333 = vrot.lane.b32.xlu0 %v511, 16
  %v1334 = vpop.permute.xlu0 %1333
  %1335 = vrot.lane.b32.xlu0 %v512, 16
  %v1336 = vpop.permute.xlu0 %1335
  %1337 = vrot.lane.b32.xlu0 %v513, 16
  %v1338 = vpop.permute.xlu0 %1337
  %1339 = vrot.lane.b32.xlu0 %v514, 16
  %v1340 = vpop.permute.xlu0 %1339
  %1341 = vrot.lane.b32.xlu0 %v515, 16
  %v1342 = vpop.permute.xlu0 %1341
  %1343 = vrot.lane.b32.xlu0 %v516, 16
  %v1344 = vpop.permute.xlu0 %1343
  %1345 = vrot.lane.b32.xlu0 %v517, 16
  %v1346 = vpop.permute.xlu0 %1345
  %1347 = vrot.lane.b32.xlu0 %v518, 16
  %v1348 = vpop.permute.xlu0 %1347
  %1349 = vrot.lane.b32.xlu0 %v519, 16
  %v1350 = vpop.permute.xlu0 %1349
  %1351 = vrot.lane.b32.xlu0 %v520, 16
  %v1352 = vpop.permute.xlu0 %1351
  %1353 = vrot.lane.b32.xlu0 %v521, 16
  %v1354 = vpop.permute.xlu0 %1353
  %1483 = vrot.lane.b32.xlu0 %v522, 24
  %v1484 = vpop.permute.xlu0 %1483
  %1485 = vrot.lane.b32.xlu0 %v523, 24
  %v1486 = vpop.permute.xlu0 %1485
  %1487 = vrot.lane.b32.xlu0 %v524, 24
  %v1488 = vpop.permute.xlu0 %1487
  %1489 = vrot.lane.b32.xlu0 %v525, 24
  %v1490 = vpop.permute.xlu0 %1489
  %1491 = vrot.lane.b32.xlu0 %v526, 24
  %v1492 = vpop.permute.xlu0 %1491
  %1493 = vrot.lane.b32.xlu0 %v527, 24
  %v1494 = vpop.permute.xlu0 %1493
  %1495 = vrot.lane.b32.xlu0 %v528, 24
  %v1496 = vpop.permute.xlu0 %1495
  %1497 = vrot.lane.b32.xlu0 %v529, 24
  %v1498 = vpop.permute.xlu0 %1497
  %1499 = vrot.lane.b32.xlu0 %v530, 24
  %v1500 = vpop.permute.xlu0 %1499
  %1501 = vrot.lane.b32.xlu0 %v531, 24
  %v1502 = vpop.permute.xlu0 %1501
  %1503 = vrot.lane.b32.xlu0 %v532, 24
  %v1504 = vpop.permute.xlu0 %1503
  %1505 = vrot.lane.b32.xlu0 %v533, 24
  %v1506 = vpop.permute.xlu0 %1505
  %1507 = vrot.lane.b32.xlu0 %v534, 24
  %v1508 = vpop.permute.xlu0 %1507
  %1509 = vrot.lane.b32.xlu0 %v535, 24
  %v1510 = vpop.permute.xlu0 %1509
  %1511 = vrot.lane.b32.xlu0 %v536, 24
  %v1512 = vpop.permute.xlu0 %1511
  %1513 = vrot.lane.b32.xlu0 %v537, 24
  %v1514 = vpop.permute.xlu0 %1513
  %1515 = vrot.lane.b32.xlu0 %v538, 24
  %v1516 = vpop.permute.xlu0 %1515
  %1517 = vrot.lane.b32.xlu0 %v539, 24
  %v1518 = vpop.permute.xlu0 %1517
  %1519 = vrot.lane.b32.xlu0 %v540, 24
  %v1520 = vpop.permute.xlu0 %1519
  %1521 = vrot.lane.b32.xlu0 %v541, 24
  %v1522 = vpop.permute.xlu0 %1521
  %1523 = vrot.lane.b32.xlu0 %v542, 24
  %v1524 = vpop.permute.xlu0 %1523
  %1525 = vrot.lane.b32.xlu0 %v543, 24
  %v1526 = vpop.permute.xlu0 %1525
  %1527 = vrot.lane.b32.xlu0 %v544, 24
  %v1528 = vpop.permute.xlu0 %1527
  %1529 = vrot.lane.b32.xlu0 %v545, 24
  %v1530 = vpop.permute.xlu0 %1529
  %1531 = vrot.lane.b32.xlu0 %v546, 24
  %v1532 = vpop.permute.xlu0 %1531
  %1533 = vrot.lane.b32.xlu0 %v547, 24
  %v1534 = vpop.permute.xlu0 %1533
  %1535 = vrot.lane.b32.xlu0 %v548, 24
  %v1536 = vpop.permute.xlu0 %1535
  %1537 = vrot.lane.b32.xlu0 %v549, 24
  %v1538 = vpop.permute.xlu0 %1537
  %1539 = vrot.lane.b32.xlu0 %v550, 24
  %v1540 = vpop.permute.xlu0 %1539
  %1541 = vrot.lane.b32.xlu0 %v551, 24
  %v1542 = vpop.permute.xlu0 %1541
  %1543 = vrot.lane.b32.xlu0 %v552, 24
  %v1544 = vpop.permute.xlu0 %1543
  %1545 = vrot.lane.b32.xlu0 %v553, 24
  %v1546 = vpop.permute.xlu0 %1545
  %1547 = vrot.lane.b32.xlu0 %v554, 24
  %v1548 = vpop.permute.xlu0 %1547
  %1549 = vrot.lane.b32.xlu0 %v555, 24
  %v1550 = vpop.permute.xlu0 %1549
  %1551 = vrot.lane.b32.xlu0 %v556, 24
  %v1552 = vpop.permute.xlu0 %1551
  %1553 = vrot.lane.b32.xlu0 %v557, 24
  %v1554 = vpop.permute.xlu0 %1553
  %1555 = vrot.lane.b32.xlu0 %v558, 24
  %v1556 = vpop.permute.xlu0 %1555
  %1557 = vrot.lane.b32.xlu0 %v559, 24
  %v1558 = vpop.permute.xlu0 %1557
  %1559 = vrot.lane.b32.xlu0 %v560, 24
  %v1560 = vpop.permute.xlu0 %1559
  %1561 = vrot.lane.b32.xlu0 %v561, 24
  %v1562 = vpop.permute.xlu0 %1561
  %1563 = vrot.lane.b32.xlu0 %v562, 24
  %v1564 = vpop.permute.xlu0 %1563
  %1565 = vrot.lane.b32.xlu0 %v563, 24
  %v1566 = vpop.permute.xlu0 %1565
  %1567 = vrot.lane.b32.xlu0 %v564, 24
  %v1568 = vpop.permute.xlu0 %1567
  %1569 = vrot.lane.b32.xlu0 %v565, 24
  %v1570 = vpop.permute.xlu0 %1569
  %1571 = vrot.lane.b32.xlu0 %v566, 24
  %v1572 = vpop.permute.xlu0 %1571
  %1573 = vrot.lane.b32.xlu0 %v567, 24
  %v1574 = vpop.permute.xlu0 %1573
  %1575 = vrot.lane.b32.xlu0 %v568, 24
  %v1576 = vpop.permute.xlu0 %1575
  %1577 = vrot.lane.b32.xlu0 %v569, 24
  %v1578 = vpop.permute.xlu0 %1577
  %1579 = vrot.lane.b32.xlu0 %v570, 24
  %v1580 = vpop.permute.xlu0 %1579
  %1581 = vrot.lane.b32.xlu0 %v571, 24
  %v1582 = vpop.permute.xlu0 %1581
  %1583 = vrot.lane.b32.xlu0 %v572, 24
  %v1584 = vpop.permute.xlu0 %1583
  %1585 = vrot.lane.b32.xlu0 %v573, 24
  %v1586 = vpop.permute.xlu0 %1585
  %1587 = vrot.lane.b32.xlu0 %v574, 24
  %v1588 = vpop.permute.xlu0 %1587
  %1589 = vrot.lane.b32.xlu0 %v575, 24
  %v1590 = vpop.permute.xlu0 %1589
  %1591 = vrot.lane.b32.xlu0 %v576, 24
  %v1592 = vpop.permute.xlu0 %1591
  %1593 = vrot.lane.b32.xlu0 %v577, 24
  %v1594 = vpop.permute.xlu0 %1593
  %1595 = vrot.lane.b32.xlu0 %v578, 24
  %v1596 = vpop.permute.xlu0 %1595
  %1597 = vrot.lane.b32.xlu0 %v579, 24
  %v1598 = vpop.permute.xlu0 %1597
  %1599 = vrot.lane.b32.xlu0 %v580, 24
  %v1600 = vpop.permute.xlu0 %1599
  %1601 = vrot.lane.b32.xlu0 %v581, 24
  %v1602 = vpop.permute.xlu0 %1601
  %1603 = vrot.lane.b32.xlu0 %v582, 24
  %v1604 = vpop.permute.xlu0 %1603
  %1605 = vrot.lane.b32.xlu0 %v583, 24
  %v1606 = vpop.permute.xlu0 %1605
  %1607 = vrot.lane.b32.xlu0 %v584, 24
  %v1608 = vpop.permute.xlu0 %1607
  %1609 = vrot.lane.b32.xlu0 %v585, 24
  %v1610 = vpop.permute.xlu0 %1609
  %1739 = vrot.lane.b32.xlu0 %v586, 32
  %v1740 = vpop.permute.xlu0 %1739
  %1741 = vrot.lane.b32.xlu0 %v587, 32
  %v1742 = vpop.permute.xlu0 %1741
  %1743 = vrot.lane.b32.xlu0 %v588, 32
  %v1744 = vpop.permute.xlu0 %1743
  %1745 = vrot.lane.b32.xlu0 %v589, 32
  %v1746 = vpop.permute.xlu0 %1745
  %1747 = vrot.lane.b32.xlu0 %v590, 32
  %v1748 = vpop.permute.xlu0 %1747
  %1749 = vrot.lane.b32.xlu0 %v591, 32
  %v1750 = vpop.permute.xlu0 %1749
  %1751 = vrot.lane.b32.xlu0 %v592, 32
  %v1752 = vpop.permute.xlu0 %1751
  %1753 = vrot.lane.b32.xlu0 %v593, 32
  %v1754 = vpop.permute.xlu0 %1753
  %1755 = vrot.lane.b32.xlu0 %v594, 32
  %v1756 = vpop.permute.xlu0 %1755
  %1757 = vrot.lane.b32.xlu0 %v595, 32
  %v1758 = vpop.permute.xlu0 %1757
  %1759 = vrot.lane.b32.xlu0 %v596, 32
  %v1760 = vpop.permute.xlu0 %1759
  %1761 = vrot.lane.b32.xlu0 %v597, 32
  %v1762 = vpop.permute.xlu0 %1761
  %1763 = vrot.lane.b32.xlu0 %v598, 32
  %v1764 = vpop.permute.xlu0 %1763
  %1765 = vrot.lane.b32.xlu0 %v599, 32
  %v1766 = vpop.permute.xlu0 %1765
  %1767 = vrot.lane.b32.xlu0 %v600, 32
  %v1768 = vpop.permute.xlu0 %1767
  %1769 = vrot.lane.b32.xlu0 %v601, 32
  %v1770 = vpop.permute.xlu0 %1769
  %1771 = vrot.lane.b32.xlu0 %v602, 32
  %v1772 = vpop.permute.xlu0 %1771
  %1773 = vrot.lane.b32.xlu0 %v603, 32
  %v1774 = vpop.permute.xlu0 %1773
  %1775 = vrot.lane.b32.xlu0 %v604, 32
  %v1776 = vpop.permute.xlu0 %1775
  %1777 = vrot.lane.b32.xlu0 %v605, 32
  %v1778 = vpop.permute.xlu0 %1777
  %1779 = vrot.lane.b32.xlu0 %v606, 32
  %v1780 = vpop.permute.xlu0 %1779
  %1781 = vrot.lane.b32.xlu0 %v607, 32
  %v1782 = vpop.permute.xlu0 %1781
  %1783 = vrot.lane.b32.xlu0 %v608, 32
  %v1784 = vpop.permute.xlu0 %1783
  %1785 = vrot.lane.b32.xlu0 %v609, 32
  %v1786 = vpop.permute.xlu0 %1785
  %1787 = vrot.lane.b32.xlu0 %v610, 32
  %v1788 = vpop.permute.xlu0 %1787
  %1789 = vrot.lane.b32.xlu0 %v611, 32
  %v1790 = vpop.permute.xlu0 %1789
  %1791 = vrot.lane.b32.xlu0 %v612, 32
  %v1792 = vpop.permute.xlu0 %1791
  %1793 = vrot.lane.b32.xlu0 %v613, 32
  %v1794 = vpop.permute.xlu0 %1793
  %1795 = vrot.lane.b32.xlu0 %v614, 32
  %v1796 = vpop.permute.xlu0 %1795
  %1797 = vrot.lane.b32.xlu0 %v615, 32
  %v1798 = vpop.permute.xlu0 %1797
  %1799 = vrot.lane.b32.xlu0 %v616, 32
  %v1800 = vpop.permute.xlu0 %1799
  %1801 = vrot.lane.b32.xlu0 %v617, 32
  %v1802 = vpop.permute.xlu0 %1801
  %1803 = vrot.lane.b32.xlu0 %v618, 32
  %v1804 = vpop.permute.xlu0 %1803
  %1805 = vrot.lane.b32.xlu0 %v619, 32
  %v1806 = vpop.permute.xlu0 %1805
  %1807 = vrot.lane.b32.xlu0 %v620, 32
  %v1808 = vpop.permute.xlu0 %1807
  %1809 = vrot.lane.b32.xlu0 %v621, 32
  %v1810 = vpop.permute.xlu0 %1809
  %1811 = vrot.lane.b32.xlu0 %v622, 32
  %v1812 = vpop.permute.xlu0 %1811
  %1813 = vrot.lane.b32.xlu0 %v623, 32
  %v1814 = vpop.permute.xlu0 %1813
  %1815 = vrot.lane.b32.xlu0 %v624, 32
  %v1816 = vpop.permute.xlu0 %1815
  %1817 = vrot.lane.b32.xlu0 %v625, 32
  %v1818 = vpop.permute.xlu0 %1817
  %1819 = vrot.lane.b32.xlu0 %v626, 32
  %v1820 = vpop.permute.xlu0 %1819
  %1821 = vrot.lane.b32.xlu0 %v627, 32
  %v1822 = vpop.permute.xlu0 %1821
  %1823 = vrot.lane.b32.xlu0 %v628, 32
  %v1824 = vpop.permute.xlu0 %1823
  %1825 = vrot.lane.b32.xlu0 %v629, 32
  %v1826 = vpop.permute.xlu0 %1825
  %1827 = vrot.lane.b32.xlu0 %v630, 32
  %v1828 = vpop.permute.xlu0 %1827
  %1829 = vrot.lane.b32.xlu0 %v631, 32
  %v1830 = vpop.permute.xlu0 %1829
  %1831 = vrot.lane.b32.xlu0 %v632, 32
  %v1832 = vpop.permute.xlu0 %1831
  %1833 = vrot.lane.b32.xlu0 %v633, 32
  %v1834 = vpop.permute.xlu0 %1833
  %1835 = vrot.lane.b32.xlu0 %v634, 32
  %v1836 = vpop.permute.xlu0 %1835
  %1837 = vrot.lane.b32.xlu0 %v635, 32
  %v1838 = vpop.permute.xlu0 %1837
  %1839 = vrot.lane.b32.xlu0 %v636, 32
  %v1840 = vpop.permute.xlu0 %1839
  %1841 = vrot.lane.b32.xlu0 %v637, 32
  %v1842 = vpop.permute.xlu0 %1841
  %1843 = vrot.lane.b32.xlu0 %v638, 32
  %v1844 = vpop.permute.xlu0 %1843
  %1845 = vrot.lane.b32.xlu0 %v639, 32
  %v1846 = vpop.permute.xlu0 %1845
  %1847 = vrot.lane.b32.xlu0 %v640, 32
  %v1848 = vpop.permute.xlu0 %1847
  %1849 = vrot.lane.b32.xlu0 %v641, 32
  %v1850 = vpop.permute.xlu0 %1849
  %1851 = vrot.lane.b32.xlu0 %v642, 32
  %v1852 = vpop.permute.xlu0 %1851
  %1853 = vrot.lane.b32.xlu0 %v643, 32
  %v1854 = vpop.permute.xlu0 %1853
  %1855 = vrot.lane.b32.xlu0 %v644, 32
  %v1856 = vpop.permute.xlu0 %1855
  %1857 = vrot.lane.b32.xlu0 %v645, 32
  %v1858 = vpop.permute.xlu0 %1857
  %1859 = vrot.lane.b32.xlu0 %v646, 32
  %v1860 = vpop.permute.xlu0 %1859
  %1861 = vrot.lane.b32.xlu0 %v647, 32
  %v1862 = vpop.permute.xlu0 %1861
  %1863 = vrot.lane.b32.xlu0 %v648, 32
  %v1864 = vpop.permute.xlu0 %1863
  %1865 = vrot.lane.b32.xlu0 %v649, 32
  %v1866 = vpop.permute.xlu0 %1865
  %1995 = vrot.lane.b32.xlu0 %v650, 40
  %v1996 = vpop.permute.xlu0 %1995
  %1997 = vrot.lane.b32.xlu0 %v651, 40
  %v1998 = vpop.permute.xlu0 %1997
  %1999 = vrot.lane.b32.xlu0 %v652, 40
  %v2000 = vpop.permute.xlu0 %1999
  %2001 = vrot.lane.b32.xlu0 %v653, 40
  %v2002 = vpop.permute.xlu0 %2001
  %2003 = vrot.lane.b32.xlu0 %v654, 40
  %v2004 = vpop.permute.xlu0 %2003
  %2005 = vrot.lane.b32.xlu0 %v655, 40
  %v2006 = vpop.permute.xlu0 %2005
  %2007 = vrot.lane.b32.xlu0 %v656, 40
  %v2008 = vpop.permute.xlu0 %2007
  %2009 = vrot.lane.b32.xlu0 %v657, 40
  %v2010 = vpop.permute.xlu0 %2009
  %2011 = vrot.lane.b32.xlu0 %v658, 40
  %v2012 = vpop.permute.xlu0 %2011
  %2013 = vrot.lane.b32.xlu0 %v659, 40
  %v2014 = vpop.permute.xlu0 %2013
  %2015 = vrot.lane.b32.xlu0 %v660, 40
  %v2016 = vpop.permute.xlu0 %2015
  %2017 = vrot.lane.b32.xlu0 %v661, 40
  %v2018 = vpop.permute.xlu0 %2017
  %2019 = vrot.lane.b32.xlu0 %v662, 40
  %v2020 = vpop.permute.xlu0 %2019
  %2021 = vrot.lane.b32.xlu0 %v663, 40
  %v2022 = vpop.permute.xlu0 %2021
  %2023 = vrot.lane.b32.xlu0 %v664, 40
  %v2024 = vpop.permute.xlu0 %2023
  %2025 = vrot.lane.b32.xlu0 %v665, 40
  %v2026 = vpop.permute.xlu0 %2025
  %2027 = vrot.lane.b32.xlu0 %v666, 40
  %v2028 = vpop.permute.xlu0 %2027
  %2029 = vrot.lane.b32.xlu0 %v667, 40
  %v2030 = vpop.permute.xlu0 %2029
  %2031 = vrot.lane.b32.xlu0 %v668, 40
  %v2032 = vpop.permute.xlu0 %2031
  %2033 = vrot.lane.b32.xlu0 %v669, 40
  %v2034 = vpop.permute.xlu0 %2033
  %2035 = vrot.lane.b32.xlu0 %v670, 40
  %v2036 = vpop.permute.xlu0 %2035
  %2037 = vrot.lane.b32.xlu0 %v671, 40
  %v2038 = vpop.permute.xlu0 %2037
  %2039 = vrot.lane.b32.xlu0 %v672, 40
  %v2040 = vpop.permute.xlu0 %2039
  %2041 = vrot.lane.b32.xlu0 %v673, 40
  %v2042 = vpop.permute.xlu0 %2041
  %2043 = vrot.lane.b32.xlu0 %v674, 40
  %v2044 = vpop.permute.xlu0 %2043
  %2045 = vrot.lane.b32.xlu0 %v675, 40
  %v2046 = vpop.permute.xlu0 %2045
  %2047 = vrot.lane.b32.xlu0 %v676, 40
  %v2048 = vpop.permute.xlu0 %2047
  %2049 = vrot.lane.b32.xlu0 %v677, 40
  %v2050 = vpop.permute.xlu0 %2049
  %2051 = vrot.lane.b32.xlu0 %v678, 40
  %v2052 = vpop.permute.xlu0 %2051
  %2053 = vrot.lane.b32.xlu0 %v679, 40
  %v2054 = vpop.permute.xlu0 %2053
  %2055 = vrot.lane.b32.xlu0 %v680, 40
  %v2056 = vpop.permute.xlu0 %2055
  %2057 = vrot.lane.b32.xlu0 %v681, 40
  %v2058 = vpop.permute.xlu0 %2057
  %2059 = vrot.lane.b32.xlu0 %v682, 40
  %v2060 = vpop.permute.xlu0 %2059
  %2061 = vrot.lane.b32.xlu0 %v683, 40
  %v2062 = vpop.permute.xlu0 %2061
  %2063 = vrot.lane.b32.xlu0 %v684, 40
  %v2064 = vpop.permute.xlu0 %2063
  %2065 = vrot.lane.b32.xlu0 %v685, 40
  %v2066 = vpop.permute.xlu0 %2065
  %2067 = vrot.lane.b32.xlu0 %v686, 40
  %v2068 = vpop.permute.xlu0 %2067
  %2069 = vrot.lane.b32.xlu0 %v687, 40
  %v2070 = vpop.permute.xlu0 %2069
  %2071 = vrot.lane.b32.xlu0 %v688, 40
  %v2072 = vpop.permute.xlu0 %2071
  %2073 = vrot.lane.b32.xlu0 %v689, 40
  %v2074 = vpop.permute.xlu0 %2073
  %2075 = vrot.lane.b32.xlu0 %v690, 40
  %v2076 = vpop.permute.xlu0 %2075
  %2077 = vrot.lane.b32.xlu0 %v691, 40
  %v2078 = vpop.permute.xlu0 %2077
  %2079 = vrot.lane.b32.xlu0 %v692, 40
  %v2080 = vpop.permute.xlu0 %2079
  %2081 = vrot.lane.b32.xlu0 %v693, 40
  %v2082 = vpop.permute.xlu0 %2081
  %2083 = vrot.lane.b32.xlu0 %v694, 40
  %v2084 = vpop.permute.xlu0 %2083
  %2085 = vrot.lane.b32.xlu0 %v695, 40
  %v2086 = vpop.permute.xlu0 %2085
  %2087 = vrot.lane.b32.xlu0 %v696, 40
  %v2088 = vpop.permute.xlu0 %2087
  %2089 = vrot.lane.b32.xlu0 %v697, 40
  %v2090 = vpop.permute.xlu0 %2089
  %2091 = vrot.lane.b32.xlu0 %v698, 40
  %v2092 = vpop.permute.xlu0 %2091
  %2093 = vrot.lane.b32.xlu0 %v699, 40
  %v2094 = vpop.permute.xlu0 %2093
  %2095 = vrot.lane.b32.xlu0 %v700, 40
  %v2096 = vpop.permute.xlu0 %2095
  %2097 = vrot.lane.b32.xlu0 %v701, 40
  %v2098 = vpop.permute.xlu0 %2097
  %2099 = vrot.lane.b32.xlu0 %v702, 40
  %v2100 = vpop.permute.xlu0 %2099
  %2101 = vrot.lane.b32.xlu0 %v703, 40
  %v2102 = vpop.permute.xlu0 %2101
  %2103 = vrot.lane.b32.xlu0 %v704, 40
  %v2104 = vpop.permute.xlu0 %2103
  %2105 = vrot.lane.b32.xlu0 %v705, 40
  %v2106 = vpop.permute.xlu0 %2105
  %2107 = vrot.lane.b32.xlu0 %v706, 40
  %v2108 = vpop.permute.xlu0 %2107
  %2109 = vrot.lane.b32.xlu0 %v707, 40
  %v2110 = vpop.permute.xlu0 %2109
  %2111 = vrot.lane.b32.xlu0 %v708, 40
  %v2112 = vpop.permute.xlu0 %2111
  %2113 = vrot.lane.b32.xlu0 %v709, 40
  %v2114 = vpop.permute.xlu0 %2113
  %2115 = vrot.lane.b32.xlu0 %v710, 40
  %v2116 = vpop.permute.xlu0 %2115
  %2117 = vrot.lane.b32.xlu0 %v711, 40
  %v2118 = vpop.permute.xlu0 %2117
  %2119 = vrot.lane.b32.xlu0 %v712, 40
  %v2120 = vpop.permute.xlu0 %2119
  %2121 = vrot.lane.b32.xlu0 %v713, 40
  %v2122 = vpop.permute.xlu0 %2121
  %2251 = vrot.lane.b32.xlu0 %v715, 48
  %v2252 = vpop.permute.xlu0 %2251
  %2253 = vrot.lane.b32.xlu0 %v716, 48
  %v2254 = vpop.permute.xlu0 %2253
  %2255 = vrot.lane.b32.xlu0 %v717, 48
  %v2256 = vpop.permute.xlu0 %2255
  %2257 = vrot.lane.b32.xlu0 %v718, 48
  %v2258 = vpop.permute.xlu0 %2257
  %2259 = vrot.lane.b32.xlu0 %v719, 48
  %v2260 = vpop.permute.xlu0 %2259
  %2261 = vrot.lane.b32.xlu0 %v720, 48
  %v2262 = vpop.permute.xlu0 %2261
  %2263 = vrot.lane.b32.xlu0 %v721, 48
  %v2264 = vpop.permute.xlu0 %2263
  %2265 = vrot.lane.b32.xlu0 %v722, 48
  %v2266 = vpop.permute.xlu0 %2265
  %2267 = vrot.lane.b32.xlu0 %v723, 48
  %v2268 = vpop.permute.xlu0 %2267
  %2269 = vrot.lane.b32.xlu0 %v724, 48
  %v2270 = vpop.permute.xlu0 %2269
  %2271 = vrot.lane.b32.xlu0 %v725, 48
  %v2272 = vpop.permute.xlu0 %2271
  %2273 = vrot.lane.b32.xlu0 %v726, 48
  %v2274 = vpop.permute.xlu0 %2273
  %2275 = vrot.lane.b32.xlu0 %v727, 48
  %v2276 = vpop.permute.xlu0 %2275
  %2277 = vrot.lane.b32.xlu0 %v728, 48
  %v2278 = vpop.permute.xlu0 %2277
  %2279 = vrot.lane.b32.xlu0 %v729, 48
  %v2280 = vpop.permute.xlu0 %2279
  %2281 = vrot.lane.b32.xlu0 %v730, 48
  %v2282 = vpop.permute.xlu0 %2281
  %2283 = vrot.lane.b32.xlu0 %v731, 48
  %v2284 = vpop.permute.xlu0 %2283
  %2285 = vrot.lane.b32.xlu0 %v732, 48
  %v2286 = vpop.permute.xlu0 %2285
  %2287 = vrot.lane.b32.xlu0 %v733, 48
  %v2288 = vpop.permute.xlu0 %2287
  %2289 = vrot.lane.b32.xlu0 %v734, 48
  %v2290 = vpop.permute.xlu0 %2289
  %2291 = vrot.lane.b32.xlu0 %v735, 48
  %v2292 = vpop.permute.xlu0 %2291
  %2293 = vrot.lane.b32.xlu0 %v736, 48
  %v2294 = vpop.permute.xlu0 %2293
  %2295 = vrot.lane.b32.xlu0 %v737, 48
  %v2296 = vpop.permute.xlu0 %2295
  %2297 = vrot.lane.b32.xlu0 %v738, 48
  %v2298 = vpop.permute.xlu0 %2297
  %2299 = vrot.lane.b32.xlu0 %v739, 48
  %v2300 = vpop.permute.xlu0 %2299
  %2301 = vrot.lane.b32.xlu0 %v740, 48
  %v2302 = vpop.permute.xlu0 %2301
  %2303 = vrot.lane.b32.xlu0 %v741, 48
  %v2304 = vpop.permute.xlu0 %2303
  %2305 = vrot.lane.b32.xlu0 %v742, 48
  %v2306 = vpop.permute.xlu0 %2305
  %2307 = vrot.lane.b32.xlu0 %v743, 48
  %v2308 = vpop.permute.xlu0 %2307
  %2309 = vrot.lane.b32.xlu0 %v744, 48
  %v2310 = vpop.permute.xlu0 %2309
  %2311 = vrot.lane.b32.xlu0 %v745, 48
  %v2312 = vpop.permute.xlu0 %2311
  %2313 = vrot.lane.b32.xlu0 %v746, 48
  %v2314 = vpop.permute.xlu0 %2313
  %2315 = vrot.lane.b32.xlu0 %v747, 48
  %v2316 = vpop.permute.xlu0 %2315
  %2317 = vrot.lane.b32.xlu0 %v748, 48
  %v2318 = vpop.permute.xlu0 %2317
  %2319 = vrot.lane.b32.xlu0 %v749, 48
  %v2320 = vpop.permute.xlu0 %2319
  %2321 = vrot.lane.b32.xlu0 %v750, 48
  %v2322 = vpop.permute.xlu0 %2321
  %2323 = vrot.lane.b32.xlu0 %v751, 48
  %v2324 = vpop.permute.xlu0 %2323
  %2325 = vrot.lane.b32.xlu0 %v752, 48
  %v2326 = vpop.permute.xlu0 %2325
  %2327 = vrot.lane.b32.xlu0 %v753, 48
  %v2328 = vpop.permute.xlu0 %2327
  %2329 = vrot.lane.b32.xlu0 %v754, 48
  %v2330 = vpop.permute.xlu0 %2329
  %2331 = vrot.lane.b32.xlu0 %v755, 48
  %v2332 = vpop.permute.xlu0 %2331
  %2333 = vrot.lane.b32.xlu0 %v756, 48
  %v2334 = vpop.permute.xlu0 %2333
  %2335 = vrot.lane.b32.xlu0 %v757, 48
  %v2336 = vpop.permute.xlu0 %2335
  %2337 = vrot.lane.b32.xlu0 %v758, 48
  %v2338 = vpop.permute.xlu0 %2337
  %2339 = vrot.lane.b32.xlu0 %v759, 48
  %v2340 = vpop.permute.xlu0 %2339
  %2341 = vrot.lane.b32.xlu0 %v760, 48
  %v2342 = vpop.permute.xlu0 %2341
  %2343 = vrot.lane.b32.xlu0 %v761, 48
  %v2344 = vpop.permute.xlu0 %2343
  %2345 = vrot.lane.b32.xlu0 %v762, 48
  %v2346 = vpop.permute.xlu0 %2345
  %2347 = vrot.lane.b32.xlu0 %v763, 48
  %v2348 = vpop.permute.xlu0 %2347
  %2349 = vrot.lane.b32.xlu0 %v764, 48
  %v2350 = vpop.permute.xlu0 %2349
  %2351 = vrot.lane.b32.xlu0 %v765, 48
  %v2352 = vpop.permute.xlu0 %2351
  %2353 = vrot.lane.b32.xlu0 %v766, 48
  %v2354 = vpop.permute.xlu0 %2353
  %2355 = vrot.lane.b32.xlu0 %v767, 48
  %v2356 = vpop.permute.xlu0 %2355
  %2357 = vrot.lane.b32.xlu0 %v768, 48
  %v2358 = vpop.permute.xlu0 %2357
  %2359 = vrot.lane.b32.xlu0 %v769, 48
  %v2360 = vpop.permute.xlu0 %2359
  %2361 = vrot.lane.b32.xlu0 %v770, 48
  %v2362 = vpop.permute.xlu0 %2361
  %2363 = vrot.lane.b32.xlu0 %v771, 48
  %v2364 = vpop.permute.xlu0 %2363
  %2365 = vrot.lane.b32.xlu0 %v772, 48
  %v2366 = vpop.permute.xlu0 %2365
  %2367 = vrot.lane.b32.xlu0 %v773, 48
  %v2368 = vpop.permute.xlu0 %2367
  %2369 = vrot.lane.b32.xlu0 %v774, 48
  %v2370 = vpop.permute.xlu0 %2369
  %2371 = vrot.lane.b32.xlu0 %v775, 48
  %v2372 = vpop.permute.xlu0 %2371
  %2373 = vrot.lane.b32.xlu0 %v776, 48
  %v2374 = vpop.permute.xlu0 %2373
  %2375 = vrot.lane.b32.xlu0 %v777, 48
  %v2376 = vpop.permute.xlu0 %2375
  %2377 = vrot.lane.b32.xlu0 %v778, 48
  %v2378 = vpop.permute.xlu0 %2377
  %2507 = vrot.lane.b32.xlu0 %v779, 56
  %v2508 = vpop.permute.xlu0 %2507
  %2509 = vrot.lane.b32.xlu0 %v780, 56
  %v2510 = vpop.permute.xlu0 %2509
  %2511 = vrot.lane.b32.xlu0 %v781, 56
  %v2512 = vpop.permute.xlu0 %2511
  %2513 = vrot.lane.b32.xlu0 %v782, 56
  %v2514 = vpop.permute.xlu0 %2513
  %2515 = vrot.lane.b32.xlu0 %v783, 56
  %v2516 = vpop.permute.xlu0 %2515
  %2517 = vrot.lane.b32.xlu0 %v784, 56
  %v2518 = vpop.permute.xlu0 %2517
  %2519 = vrot.lane.b32.xlu0 %v785, 56
  %v2520 = vpop.permute.xlu0 %2519
  %2521 = vrot.lane.b32.xlu0 %v786, 56
  %v2522 = vpop.permute.xlu0 %2521
  %2523 = vrot.lane.b32.xlu0 %v787, 56
  %v2524 = vpop.permute.xlu0 %2523
  %2525 = vrot.lane.b32.xlu0 %v788, 56
  %v2526 = vpop.permute.xlu0 %2525
  %2527 = vrot.lane.b32.xlu0 %v789, 56
  %v2528 = vpop.permute.xlu0 %2527
  %2529 = vrot.lane.b32.xlu0 %v790, 56
  %v2530 = vpop.permute.xlu0 %2529
  %2531 = vrot.lane.b32.xlu0 %v791, 56
  %v2532 = vpop.permute.xlu0 %2531
  %2533 = vrot.lane.b32.xlu0 %v792, 56
  %v2534 = vpop.permute.xlu0 %2533
  %2535 = vrot.lane.b32.xlu0 %v793, 56
  %v2536 = vpop.permute.xlu0 %2535
  %2537 = vrot.lane.b32.xlu0 %v794, 56
  %v2538 = vpop.permute.xlu0 %2537
  %2539 = vrot.lane.b32.xlu0 %v795, 56
  %v2540 = vpop.permute.xlu0 %2539
  %2541 = vrot.lane.b32.xlu0 %v796, 56
  %v2542 = vpop.permute.xlu0 %2541
  %2543 = vrot.lane.b32.xlu0 %v797, 56
  %v2544 = vpop.permute.xlu0 %2543
  %2545 = vrot.lane.b32.xlu0 %v798, 56
  %v2546 = vpop.permute.xlu0 %2545
  %2547 = vrot.lane.b32.xlu0 %v799, 56
  %v2548 = vpop.permute.xlu0 %2547
  %2549 = vrot.lane.b32.xlu0 %v800, 56
  %v2550 = vpop.permute.xlu0 %2549
  %2551 = vrot.lane.b32.xlu0 %v801, 56
  %v2552 = vpop.permute.xlu0 %2551
  %2553 = vrot.lane.b32.xlu0 %v802, 56
  %v2554 = vpop.permute.xlu0 %2553
  %2555 = vrot.lane.b32.xlu0 %v803, 56
  %v2556 = vpop.permute.xlu0 %2555
  %2557 = vrot.lane.b32.xlu0 %v804, 56
  %v2558 = vpop.permute.xlu0 %2557
  %2559 = vrot.lane.b32.xlu0 %v805, 56
  %v2560 = vpop.permute.xlu0 %2559
  %2561 = vrot.lane.b32.xlu0 %v806, 56
  %v2562 = vpop.permute.xlu0 %2561
  %2563 = vrot.lane.b32.xlu0 %v807, 56
  %v2564 = vpop.permute.xlu0 %2563
  %2565 = vrot.lane.b32.xlu0 %v808, 56
  %v2566 = vpop.permute.xlu0 %2565
  %2567 = vrot.lane.b32.xlu0 %v809, 56
  %v2568 = vpop.permute.xlu0 %2567
  %2569 = vrot.lane.b32.xlu0 %v810, 56
  %v2570 = vpop.permute.xlu0 %2569
  %2571 = vrot.lane.b32.xlu0 %v811, 56
  %v2572 = vpop.permute.xlu0 %2571
  %2573 = vrot.lane.b32.xlu0 %v812, 56
  %v2574 = vpop.permute.xlu0 %2573
  %2575 = vrot.lane.b32.xlu0 %v813, 56
  %v2576 = vpop.permute.xlu0 %2575
  %2577 = vrot.lane.b32.xlu0 %v814, 56
  %v2578 = vpop.permute.xlu0 %2577
  %2579 = vrot.lane.b32.xlu0 %v815, 56
  %v2580 = vpop.permute.xlu0 %2579
  %2581 = vrot.lane.b32.xlu0 %v816, 56
  %v2582 = vpop.permute.xlu0 %2581
  %2583 = vrot.lane.b32.xlu0 %v817, 56
  %v2584 = vpop.permute.xlu0 %2583
  %2585 = vrot.lane.b32.xlu0 %v818, 56
  %v2586 = vpop.permute.xlu0 %2585
  %2587 = vrot.lane.b32.xlu0 %v819, 56
  %v2588 = vpop.permute.xlu0 %2587
  %2589 = vrot.lane.b32.xlu0 %v820, 56
  %v2590 = vpop.permute.xlu0 %2589
  %2591 = vrot.lane.b32.xlu0 %v821, 56
  %v2592 = vpop.permute.xlu0 %2591
  %2593 = vrot.lane.b32.xlu0 %v822, 56
  %v2594 = vpop.permute.xlu0 %2593
  %2595 = vrot.lane.b32.xlu0 %v823, 56
  %v2596 = vpop.permute.xlu0 %2595
  %2597 = vrot.lane.b32.xlu0 %v824, 56
  %v2598 = vpop.permute.xlu0 %2597
  %2599 = vrot.lane.b32.xlu0 %v825, 56
  %v2600 = vpop.permute.xlu0 %2599
  %2601 = vrot.lane.b32.xlu0 %v826, 56
  %v2602 = vpop.permute.xlu0 %2601
  %2603 = vrot.lane.b32.xlu0 %v827, 56
  %v2604 = vpop.permute.xlu0 %2603
  %2605 = vrot.lane.b32.xlu0 %v828, 56
  %v2606 = vpop.permute.xlu0 %2605
  %2607 = vrot.lane.b32.xlu0 %v829, 56
  %v2608 = vpop.permute.xlu0 %2607
  %2609 = vrot.lane.b32.xlu0 %v830, 56
  %v2610 = vpop.permute.xlu0 %2609
  %2611 = vrot.lane.b32.xlu0 %v831, 56
  %v2612 = vpop.permute.xlu0 %2611
  %2613 = vrot.lane.b32.xlu0 %v832, 56
  %v2614 = vpop.permute.xlu0 %2613
  %2615 = vrot.lane.b32.xlu0 %v833, 56
  %v2616 = vpop.permute.xlu0 %2615
  %2617 = vrot.lane.b32.xlu0 %v834, 56
  %v2618 = vpop.permute.xlu0 %2617
  %2619 = vrot.lane.b32.xlu0 %v835, 56
  %v2620 = vpop.permute.xlu0 %2619
  %2621 = vrot.lane.b32.xlu0 %v836, 56
  %v2622 = vpop.permute.xlu0 %2621
  %2623 = vrot.lane.b32.xlu0 %v837, 56
  %v2624 = vpop.permute.xlu0 %2623
  %2625 = vrot.lane.b32.xlu0 %v838, 56
  %v2626 = vpop.permute.xlu0 %2625
  %2627 = vrot.lane.b32.xlu0 %v839, 56
  %v2628 = vpop.permute.xlu0 %2627
  %2629 = vrot.lane.b32.xlu0 %v840, 56
  %v2630 = vpop.permute.xlu0 %2629
  %2631 = vrot.lane.b32.xlu0 %v841, 56
  %v2632 = vpop.permute.xlu0 %2631
  %2633 = vrot.lane.b32.xlu0 %v842, 56
  %v2634 = vpop.permute.xlu0 %2633
  %2763 = vrot.lane.b32.xlu0 %v843, 64
  %v2764 = vpop.permute.xlu0 %2763
  %2765 = vrot.lane.b32.xlu0 %v844, 64
  %v2766 = vpop.permute.xlu0 %2765
  %2767 = vrot.lane.b32.xlu0 %v845, 64
  %v2768 = vpop.permute.xlu0 %2767
  %2769 = vrot.lane.b32.xlu0 %v846, 64
  %v2770 = vpop.permute.xlu0 %2769
  %2771 = vrot.lane.b32.xlu0 %v847, 64
  %v2772 = vpop.permute.xlu0 %2771
  %2773 = vrot.lane.b32.xlu0 %v848, 64
  %v2774 = vpop.permute.xlu0 %2773
  %2775 = vrot.lane.b32.xlu0 %v849, 64
  %v2776 = vpop.permute.xlu0 %2775
  %2777 = vrot.lane.b32.xlu0 %v850, 64
  %v2778 = vpop.permute.xlu0 %2777
  %2779 = vrot.lane.b32.xlu0 %v851, 64
  %v2780 = vpop.permute.xlu0 %2779
  %2781 = vrot.lane.b32.xlu0 %v852, 64
  %v2782 = vpop.permute.xlu0 %2781
  %2783 = vrot.lane.b32.xlu0 %v853, 64
  %v2784 = vpop.permute.xlu0 %2783
  %2785 = vrot.lane.b32.xlu0 %v854, 64
  %v2786 = vpop.permute.xlu0 %2785
  %2787 = vrot.lane.b32.xlu0 %v855, 64
  %v2788 = vpop.permute.xlu0 %2787
  %2789 = vrot.lane.b32.xlu0 %v856, 64
  %v2790 = vpop.permute.xlu0 %2789
  %2791 = vrot.lane.b32.xlu0 %v857, 64
  %v2792 = vpop.permute.xlu0 %2791
  %2793 = vrot.lane.b32.xlu0 %v858, 64
  %v2794 = vpop.permute.xlu0 %2793
  %2795 = vrot.lane.b32.xlu0 %v859, 64
  %v2796 = vpop.permute.xlu0 %2795
  %2797 = vrot.lane.b32.xlu0 %v860, 64
  %v2798 = vpop.permute.xlu0 %2797
  %2799 = vrot.lane.b32.xlu0 %v861, 64
  %v2800 = vpop.permute.xlu0 %2799
  %2801 = vrot.lane.b32.xlu0 %v862, 64
  %v2802 = vpop.permute.xlu0 %2801
  %2803 = vrot.lane.b32.xlu0 %v863, 64
  %v2804 = vpop.permute.xlu0 %2803
  %2805 = vrot.lane.b32.xlu0 %v864, 64
  %v2806 = vpop.permute.xlu0 %2805
  %2807 = vrot.lane.b32.xlu0 %v865, 64
  %v2808 = vpop.permute.xlu0 %2807
  %2809 = vrot.lane.b32.xlu0 %v866, 64
  %v2810 = vpop.permute.xlu0 %2809
  %2811 = vrot.lane.b32.xlu0 %v867, 64
  %v2812 = vpop.permute.xlu0 %2811
  %2813 = vrot.lane.b32.xlu0 %v868, 64
  %v2814 = vpop.permute.xlu0 %2813
  %2815 = vrot.lane.b32.xlu0 %v869, 64
  %v2816 = vpop.permute.xlu0 %2815
  %2817 = vrot.lane.b32.xlu0 %v870, 64
  %v2818 = vpop.permute.xlu0 %2817
  %2819 = vrot.lane.b32.xlu0 %v871, 64
  %v2820 = vpop.permute.xlu0 %2819
  %2821 = vrot.lane.b32.xlu0 %v872, 64
  %v2822 = vpop.permute.xlu0 %2821
  %2823 = vrot.lane.b32.xlu0 %v873, 64
  %v2824 = vpop.permute.xlu0 %2823
  %2825 = vrot.lane.b32.xlu0 %v874, 64
  %v2826 = vpop.permute.xlu0 %2825
  %2827 = vrot.lane.b32.xlu0 %v875, 64
  %v2828 = vpop.permute.xlu0 %2827
  %2829 = vrot.lane.b32.xlu0 %v876, 64
  %v2830 = vpop.permute.xlu0 %2829
  %2831 = vrot.lane.b32.xlu0 %v877, 64
  %v2832 = vpop.permute.xlu0 %2831
  %2833 = vrot.lane.b32.xlu0 %v878, 64
  %v2834 = vpop.permute.xlu0 %2833
  %2835 = vrot.lane.b32.xlu0 %v879, 64
  %v2836 = vpop.permute.xlu0 %2835
  %2837 = vrot.lane.b32.xlu0 %v880, 64
  %v2838 = vpop.permute.xlu0 %2837
  %2839 = vrot.lane.b32.xlu0 %v881, 64
  %v2840 = vpop.permute.xlu0 %2839
  %2841 = vrot.lane.b32.xlu0 %v882, 64
  %v2842 = vpop.permute.xlu0 %2841
  %2843 = vrot.lane.b32.xlu0 %v883, 64
  %v2844 = vpop.permute.xlu0 %2843
  %2845 = vrot.lane.b32.xlu0 %v884, 64
  %v2846 = vpop.permute.xlu0 %2845
  %2847 = vrot.lane.b32.xlu0 %v885, 64
  %v2848 = vpop.permute.xlu0 %2847
  %2849 = vrot.lane.b32.xlu0 %v886, 64
  %v2850 = vpop.permute.xlu0 %2849
  %2851 = vrot.lane.b32.xlu0 %v887, 64
  %v2852 = vpop.permute.xlu0 %2851
  %2853 = vrot.lane.b32.xlu0 %v888, 64
  %v2854 = vpop.permute.xlu0 %2853
  %2855 = vrot.lane.b32.xlu0 %v889, 64
  %v2856 = vpop.permute.xlu0 %2855
  %2857 = vrot.lane.b32.xlu0 %v890, 64
  %v2858 = vpop.permute.xlu0 %2857
  %2859 = vrot.lane.b32.xlu0 %v891, 64
  %v2860 = vpop.permute.xlu0 %2859
  %2861 = vrot.lane.b32.xlu0 %v892, 64
  %v2862 = vpop.permute.xlu0 %2861
  %2863 = vrot.lane.b32.xlu0 %v893, 64
  %v2864 = vpop.permute.xlu0 %2863
  %2865 = vrot.lane.b32.xlu0 %v894, 64
  %v2866 = vpop.permute.xlu0 %2865
  %2867 = vrot.lane.b32.xlu0 %v895, 64
  %v2868 = vpop.permute.xlu0 %2867
  %2869 = vrot.lane.b32.xlu0 %v896, 64
  %v2870 = vpop.permute.xlu0 %2869
  %2871 = vrot.lane.b32.xlu0 %v897, 64
  %v2872 = vpop.permute.xlu0 %2871
  %2873 = vrot.lane.b32.xlu0 %v898, 64
  %v2874 = vpop.permute.xlu0 %2873
  %2875 = vrot.lane.b32.xlu0 %v899, 64
  %v2876 = vpop.permute.xlu0 %2875
  %2877 = vrot.lane.b32.xlu0 %v900, 64
  %v2878 = vpop.permute.xlu0 %2877
  %2879 = vrot.lane.b32.xlu0 %v901, 64
  %v2880 = vpop.permute.xlu0 %2879
  %2881 = vrot.lane.b32.xlu0 %v902, 64
  %v2882 = vpop.permute.xlu0 %2881
  %2883 = vrot.lane.b32.xlu0 %v903, 64
  %v2884 = vpop.permute.xlu0 %2883
  %2885 = vrot.lane.b32.xlu0 %v904, 64
  %v2886 = vpop.permute.xlu0 %2885
  %2887 = vrot.lane.b32.xlu0 %v905, 64
  %v2888 = vpop.permute.xlu0 %2887
  %2889 = vrot.lane.b32.xlu0 %v906, 64
  %v2890 = vpop.permute.xlu0 %2889
  %v2955 = vsel %vm155, %v330, %v972
  %v2956 = vsel %vm155, %v331, %v974
  %v2957 = vsel %vm155, %v332, %v976
  %v2958 = vsel %vm155, %v333, %v978
  %v2959 = vsel %vm155, %v334, %v980
  %v2960 = vsel %vm155, %v335, %v982
  %v2961 = vsel %vm155, %v336, %v984
  %v2962 = vsel %vm155, %v337, %v986
  %v2963 = vsel %vm155, %v338, %v988
  %v2964 = vsel %vm155, %v339, %v990
  %v2965 = vsel %vm155, %v340, %v992
  %v2966 = vsel %vm155, %v341, %v994
  %v2967 = vsel %vm155, %v342, %v996
  %v2968 = vsel %vm155, %v343, %v998
  %v2969 = vsel %vm155, %v344, %v1000
  %v2970 = vsel %vm155, %v345, %v1002
  %v2971 = vsel %vm155, %v346, %v1004
  %v2972 = vsel %vm155, %v347, %v1006
  %v2973 = vsel %vm155, %v348, %v1008
  %v2974 = vsel %vm155, %v349, %v1010
  %v2975 = vsel %vm155, %v350, %v1012
  %v2976 = vsel %vm155, %v351, %v1014
  %v2977 = vsel %vm155, %v352, %v1016
  %v2978 = vsel %vm155, %v353, %v1018
  %v2979 = vsel %vm155, %v354, %v1020
  %v2980 = vsel %vm155, %v355, %v1022
  %v2981 = vsel %vm155, %v356, %v1024
  %v2982 = vsel %vm155, %v357, %v1026
  %v2983 = vsel %vm155, %v358, %v1028
  %v2984 = vsel %vm155, %v359, %v1030
  %v2985 = vsel %vm155, %v360, %v1032
  %v2986 = vsel %vm155, %v361, %v1034
  %v2987 = vsel %vm155, %v362, %v1036
  %v2988 = vsel %vm155, %v363, %v1038
  %v2989 = vsel %vm155, %v364, %v1040
  %v2990 = vsel %vm155, %v365, %v1042
  %v2991 = vsel %vm155, %v366, %v1044
  %v2992 = vsel %vm155, %v367, %v1046
  %v2993 = vsel %vm155, %v368, %v1048
  %v2994 = vsel %vm155, %v369, %v1050
  %v2995 = vsel %vm155, %v370, %v1052
  %v2996 = vsel %vm155, %v371, %v1054
  %v2997 = vsel %vm155, %v372, %v1056
  %v2998 = vsel %vm155, %v373, %v1058
  %v2999 = vsel %vm155, %v374, %v1060
  %v3000 = vsel %vm155, %v375, %v1062
  %v3001 = vsel %vm155, %v376, %v1064
  %v3002 = vsel %vm155, %v377, %v1066
  %v3003 = vsel %vm155, %v378, %v1068
  %v3004 = vsel %vm155, %v379, %v1070
  %v3005 = vsel %vm155, %v380, %v1072
  %v3006 = vsel %vm155, %v381, %v1074
  %v3007 = vsel %vm155, %v382, %v1076
  %v3008 = vsel %vm155, %v383, %v1078
  %v3009 = vsel %vm155, %v384, %v1080
  %v3010 = vsel %vm155, %v385, %v1082
  %v3011 = vsel %vm155, %v386, %v1084
  %v3012 = vsel %vm155, %v387, %v1086
  %v3013 = vsel %vm155, %v388, %v1088
  %v3014 = vsel %vm155, %v389, %v1090
  %v3015 = vsel %vm155, %v390, %v1092
  %v3016 = vsel %vm155, %v391, %v1094
  %v3017 = vsel %vm155, %v392, %v1096
  %v3018 = vsel %vm155, %v393, %v1098
  %vm3019 = vcmask 130048
  %v3020 = vsel %vm3019, %v2955, %v1228
  %v3021 = vsel %vm3019, %v2956, %v1230
  %v3022 = vsel %vm3019, %v2957, %v1232
  %v3023 = vsel %vm3019, %v2958, %v1234
  %v3024 = vsel %vm3019, %v2959, %v1236
  %v3025 = vsel %vm3019, %v2960, %v1238
  %v3026 = vsel %vm3019, %v2961, %v1240
  %v3027 = vsel %vm3019, %v2962, %v1242
  %v3028 = vsel %vm3019, %v2963, %v1244
  %v3029 = vsel %vm3019, %v2964, %v1246
  %v3030 = vsel %vm3019, %v2965, %v1248
  %v3031 = vsel %vm3019, %v2966, %v1250
  %v3032 = vsel %vm3019, %v2967, %v1252
  %v3033 = vsel %vm3019, %v2968, %v1254
  %v3034 = vsel %vm3019, %v2969, %v1256
  %v3035 = vsel %vm3019, %v2970, %v1258
  %v3036 = vsel %vm3019, %v2971, %v1260
  %v3037 = vsel %vm3019, %v2972, %v1262
  %v3038 = vsel %vm3019, %v2973, %v1264
  %v3039 = vsel %vm3019, %v2974, %v1266
  %v3040 = vsel %vm3019, %v2975, %v1268
  %v3041 = vsel %vm3019, %v2976, %v1270
  %v3042 = vsel %vm3019, %v2977, %v1272
  %v3043 = vsel %vm3019, %v2978, %v1274
  %v3044 = vsel %vm3019, %v2979, %v1276
  %v3045 = vsel %vm3019, %v2980, %v1278
  %v3046 = vsel %vm3019, %v2981, %v1280
  %v3047 = vsel %vm3019, %v2982, %v1282
  %v3048 = vsel %vm3019, %v2983, %v1284
  %v3049 = vsel %vm3019, %v2984, %v1286
  %v3050 = vsel %vm3019, %v2985, %v1288
  %v3051 = vsel %vm3019, %v2986, %v1290
  %v3052 = vsel %vm3019, %v2987, %v1292
  %v3053 = vsel %vm3019, %v2988, %v1294
  %v3054 = vsel %vm3019, %v2989, %v1296
  %v3055 = vsel %vm3019, %v2990, %v1298
  %v3056 = vsel %vm3019, %v2991, %v1300
  %v3057 = vsel %vm3019, %v2992, %v1302
  %v3058 = vsel %vm3019, %v2993, %v1304
  %v3059 = vsel %vm3019, %v2994, %v1306
  %v3060 = vsel %vm3019, %v2995, %v1308
  %v3061 = vsel %vm3019, %v2996, %v1310
  %v3062 = vsel %vm3019, %v2997, %v1312
  %v3063 = vsel %vm3019, %v2998, %v1314
  %v3064 = vsel %vm3019, %v2999, %v1316
  %v3065 = vsel %vm3019, %v3000, %v1318
  %v3066 = vsel %vm3019, %v3001, %v1320
  %v3067 = vsel %vm3019, %v3002, %v1322
  %v3068 = vsel %vm3019, %v3003, %v1324
  %v3069 = vsel %vm3019, %v3004, %v1326
  %v3070 = vsel %vm3019, %v3005, %v1328
  %v3071 = vsel %vm3019, %v3006, %v1330
  %v3072 = vsel %vm3019, %v3007, %v1332
  %v3073 = vsel %vm3019, %v3008, %v1334
  %v3074 = vsel %vm3019, %v3009, %v1336
  %v3075 = vsel %vm3019, %v3010, %v1338
  %v3076 = vsel %vm3019, %v3011, %v1340
  %v3077 = vsel %vm3019, %v3012, %v1342
  %v3078 = vsel %vm3019, %v3013, %v1344
  %v3079 = vsel %vm3019, %v3014, %v1346
  %v3080 = vsel %vm3019, %v3015, %v1348
  %v3081 = vsel %vm3019, %v3016, %v1350
  %v3082 = vsel %vm3019, %v3017, %v1352
  %v3083 = vsel %vm3019, %v3018, %v1354
  %vm3084 = vcmask 195584
  %v3085 = vsel %vm3084, %v3020, %v1484
  %v3086 = vsel %vm3084, %v3021, %v1486
  %v3087 = vsel %vm3084, %v3022, %v1488
  %v3088 = vsel %vm3084, %v3023, %v1490
  %v3089 = vsel %vm3084, %v3024, %v1492
  %v3090 = vsel %vm3084, %v3025, %v1494
  %v3091 = vsel %vm3084, %v3026, %v1496
  %v3092 = vsel %vm3084, %v3027, %v1498
  %v3093 = vsel %vm3084, %v3028, %v1500
  %v3094 = vsel %vm3084, %v3029, %v1502
  %v3095 = vsel %vm3084, %v3030, %v1504
  %v3096 = vsel %vm3084, %v3031, %v1506
  %v3097 = vsel %vm3084, %v3032, %v1508
  %v3098 = vsel %vm3084, %v3033, %v1510
  %v3099 = vsel %vm3084, %v3034, %v1512
  %v3100 = vsel %vm3084, %v3035, %v1514
  %v3101 = vsel %vm3084, %v3036, %v1516
  %v3102 = vsel %vm3084, %v3037, %v1518
  %v3103 = vsel %vm3084, %v3038, %v1520
  %v3104 = vsel %vm3084, %v3039, %v1522
  %v3105 = vsel %vm3084, %v3040, %v1524
  %v3106 = vsel %vm3084, %v3041, %v1526
  %v3107 = vsel %vm3084, %v3042, %v1528
  %v3108 = vsel %vm3084, %v3043, %v1530
  %v3109 = vsel %vm3084, %v3044, %v1532
  %v3110 = vsel %vm3084, %v3045, %v1534
  %v3111 = vsel %vm3084, %v3046, %v1536
  %v3112 = vsel %vm3084, %v3047, %v1538
  %v3113 = vsel %vm3084, %v3048, %v1540
  %v3114 = vsel %vm3084, %v3049, %v1542
  %v3115 = vsel %vm3084, %v3050, %v1544
  %v3116 = vsel %vm3084, %v3051, %v1546
  %v3117 = vsel %vm3084, %v3052, %v1548
  %v3118 = vsel %vm3084, %v3053, %v1550
  %v3119 = vsel %vm3084, %v3054, %v1552
  %v3120 = vsel %vm3084, %v3055, %v1554
  %v3121 = vsel %vm3084, %v3056, %v1556
  %v3122 = vsel %vm3084, %v3057, %v1558
  %v3123 = vsel %vm3084, %v3058, %v1560
  %v3124 = vsel %vm3084, %v3059, %v1562
  %v3125 = vsel %vm3084, %v3060, %v1564
  %v3126 = vsel %vm3084, %v3061, %v1566
  %v3127 = vsel %vm3084, %v3062, %v1568
  %v3128 = vsel %vm3084, %v3063, %v1570
  %v3129 = vsel %vm3084, %v3064, %v1572
  %v3130 = vsel %vm3084, %v3065, %v1574
  %v3131 = vsel %vm3084, %v3066, %v1576
  %v3132 = vsel %vm3084, %v3067, %v1578
  %v3133 = vsel %vm3084, %v3068, %v1580
  %v3134 = vsel %vm3084, %v3069, %v1582
  %v3135 = vsel %vm3084, %v3070, %v1584
  %v3136 = vsel %vm3084, %v3071, %v1586
  %v3137 = vsel %vm3084, %v3072, %v1588
  %v3138 = vsel %vm3084, %v3073, %v1590
  %v3139 = vsel %vm3084, %v3074, %v1592
  %v3140 = vsel %vm3084, %v3075, %v1594
  %v3141 = vsel %vm3084, %v3076, %v1596
  %v3142 = vsel %vm3084, %v3077, %v1598
  %v3143 = vsel %vm3084, %v3078, %v1600
  %v3144 = vsel %vm3084, %v3079, %v1602
  %v3145 = vsel %vm3084, %v3080, %v1604
  %v3146 = vsel %vm3084, %v3081, %v1606
  %v3147 = vsel %vm3084, %v3082, %v1608
  %v3148 = vsel %vm3084, %v3083, %v1610
  %vm3149 = vcmask 261120
  %v3150 = vsel %vm3149, %v3085, %v1740
  %v3151 = vsel %vm3149, %v3086, %v1742
  %v3152 = vsel %vm3149, %v3087, %v1744
  %v3153 = vsel %vm3149, %v3088, %v1746
  %v3154 = vsel %vm3149, %v3089, %v1748
  %v3155 = vsel %vm3149, %v3090, %v1750
  %v3156 = vsel %vm3149, %v3091, %v1752
  %v3157 = vsel %vm3149, %v3092, %v1754
  %v3158 = vsel %vm3149, %v3093, %v1756
  %v3159 = vsel %vm3149, %v3094, %v1758
  %v3160 = vsel %vm3149, %v3095, %v1760
  %v3161 = vsel %vm3149, %v3096, %v1762
  %v3162 = vsel %vm3149, %v3097, %v1764
  %v3163 = vsel %vm3149, %v3098, %v1766
  %v3164 = vsel %vm3149, %v3099, %v1768
  %v3165 = vsel %vm3149, %v3100, %v1770
  %v3166 = vsel %vm3149, %v3101, %v1772
  %v3167 = vsel %vm3149, %v3102, %v1774
  %v3168 = vsel %vm3149, %v3103, %v1776
  %v3169 = vsel %vm3149, %v3104, %v1778
  %v3170 = vsel %vm3149, %v3105, %v1780
  %v3171 = vsel %vm3149, %v3106, %v1782
  %v3172 = vsel %vm3149, %v3107, %v1784
  %v3173 = vsel %vm3149, %v3108, %v1786
  %v3174 = vsel %vm3149, %v3109, %v1788
  %v3175 = vsel %vm3149, %v3110, %v1790
  %v3176 = vsel %vm3149, %v3111, %v1792
  %v3177 = vsel %vm3149, %v3112, %v1794
  %v3178 = vsel %vm3149, %v3113, %v1796
  %v3179 = vsel %vm3149, %v3114, %v1798
  %v3180 = vsel %vm3149, %v3115, %v1800
  %v3181 = vsel %vm3149, %v3116, %v1802
  %v3182 = vsel %vm3149, %v3117, %v1804
  %v3183 = vsel %vm3149, %v3118, %v1806
  %v3184 = vsel %vm3149, %v3119, %v1808
  %v3185 = vsel %vm3149, %v3120, %v1810
  %v3186 = vsel %vm3149, %v3121, %v1812
  %v3187 = vsel %vm3149, %v3122, %v1814
  %v3188 = vsel %vm3149, %v3123, %v1816
  %v3189 = vsel %vm3149, %v3124, %v1818
  %v3190 = vsel %vm3149, %v3125, %v1820
  %v3191 = vsel %vm3149, %v3126, %v1822
  %v3192 = vsel %vm3149, %v3127, %v1824
  %v3193 = vsel %vm3149, %v3128, %v1826
  %v3194 = vsel %vm3149, %v3129, %v1828
  %v3195 = vsel %vm3149, %v3130, %v1830
  %v3196 = vsel %vm3149, %v3131, %v1832
  %v3197 = vsel %vm3149, %v3132, %v1834
  %v3198 = vsel %vm3149, %v3133, %v1836
  %v3199 = vsel %vm3149, %v3134, %v1838
  %v3200 = vsel %vm3149, %v3135, %v1840
  %v3201 = vsel %vm3149, %v3136, %v1842
  %v3202 = vsel %vm3149, %v3137, %v1844
  %v3203 = vsel %vm3149, %v3138, %v1846
  %v3204 = vsel %vm3149, %v3139, %v1848
  %v3205 = vsel %vm3149, %v3140, %v1850
  %v3206 = vsel %vm3149, %v3141, %v1852
  %v3207 = vsel %vm3149, %v3142, %v1854
  %v3208 = vsel %vm3149, %v3143, %v1856
  %v3209 = vsel %vm3149, %v3144, %v1858
  %v3210 = vsel %vm3149, %v3145, %v1860
  %v3211 = vsel %vm3149, %v3146, %v1862
  %v3212 = vsel %vm3149, %v3147, %v1864
  %v3213 = vsel %vm3149, %v3148, %v1866
  %vm3214 = vcmask 326656
  %v3215 = vsel %vm3214, %v3150, %v1996
  %v3216 = vsel %vm3214, %v3151, %v1998
  %v3217 = vsel %vm3214, %v3152, %v2000
  %v3218 = vsel %vm3214, %v3153, %v2002
  %v3219 = vsel %vm3214, %v3154, %v2004
  %v3220 = vsel %vm3214, %v3155, %v2006
  %v3221 = vsel %vm3214, %v3156, %v2008
  %v3222 = vsel %vm3214, %v3157, %v2010
  %v3223 = vsel %vm3214, %v3158, %v2012
  %v3224 = vsel %vm3214, %v3159, %v2014
  %v3225 = vsel %vm3214, %v3160, %v2016
  %v3226 = vsel %vm3214, %v3161, %v2018
  %v3227 = vsel %vm3214, %v3162, %v2020
  %v3228 = vsel %vm3214, %v3163, %v2022
  %v3229 = vsel %vm3214, %v3164, %v2024
  %v3230 = vsel %vm3214, %v3165, %v2026
  %v3231 = vsel %vm3214, %v3166, %v2028
  %v3232 = vsel %vm3214, %v3167, %v2030
  %v3233 = vsel %vm3214, %v3168, %v2032
  %v3234 = vsel %vm3214, %v3169, %v2034
  %v3235 = vsel %vm3214, %v3170, %v2036
  %v3236 = vsel %vm3214, %v3171, %v2038
  %v3237 = vsel %vm3214, %v3172, %v2040
  %v3238 = vsel %vm3214, %v3173, %v2042
  %v3239 = vsel %vm3214, %v3174, %v2044
  %v3240 = vsel %vm3214, %v3175, %v2046
  %v3241 = vsel %vm3214, %v3176, %v2048
  %v3242 = vsel %vm3214, %v3177, %v2050
  %v3243 = vsel %vm3214, %v3178, %v2052
  %v3244 = vsel %vm3214, %v3179, %v2054
  %v3245 = vsel %vm3214, %v3180, %v2056
  %v3246 = vsel %vm3214, %v3181, %v2058
  %v3247 = vsel %vm3214, %v3182, %v2060
  %v3248 = vsel %vm3214, %v3183, %v2062
  %v3249 = vsel %vm3214, %v3184, %v2064
  %v3250 = vsel %vm3214, %v3185, %v2066
  %v3251 = vsel %vm3214, %v3186, %v2068
  %v3252 = vsel %vm3214, %v3187, %v2070
  %v3253 = vsel %vm3214, %v3188, %v2072
  %v3254 = vsel %vm3214, %v3189, %v2074
  %v3255 = vsel %vm3214, %v3190, %v2076
  %v3256 = vsel %vm3214, %v3191, %v2078
  %v3257 = vsel %vm3214, %v3192, %v2080
  %v3258 = vsel %vm3214, %v3193, %v2082
  %v3259 = vsel %vm3214, %v3194, %v2084
  %v3260 = vsel %vm3214, %v3195, %v2086
  %v3261 = vsel %vm3214, %v3196, %v2088
  %v3262 = vsel %vm3214, %v3197, %v2090
  %v3263 = vsel %vm3214, %v3198, %v2092
  %v3264 = vsel %vm3214, %v3199, %v2094
  %v3265 = vsel %vm3214, %v3200, %v2096
  %v3266 = vsel %vm3214, %v3201, %v2098
  %v3267 = vsel %vm3214, %v3202, %v2100
  %v3268 = vsel %vm3214, %v3203, %v2102
  %v3269 = vsel %vm3214, %v3204, %v2104
  %v3270 = vsel %vm3214, %v3205, %v2106
  %v3271 = vsel %vm3214, %v3206, %v2108
  %v3272 = vsel %vm3214, %v3207, %v2110
  %v3273 = vsel %vm3214, %v3208, %v2112
  %v3274 = vsel %vm3214, %v3209, %v2114
  %v3275 = vsel %vm3214, %v3210, %v2116
  %v3276 = vsel %vm3214, %v3211, %v2118
  %v3277 = vsel %vm3214, %v3212, %v2120
  %v3278 = vsel %vm3214, %v3213, %v2122
  %vm3279 = vcmask 392192
  %v3280 = vsel %vm3279, %v3215, %v2252
  %v3281 = vsel %vm3279, %v3216, %v2254
  %v3282 = vsel %vm3279, %v3217, %v2256
  %v3283 = vsel %vm3279, %v3218, %v2258
  %v3284 = vsel %vm3279, %v3219, %v2260
  %v3285 = vsel %vm3279, %v3220, %v2262
  %v3286 = vsel %vm3279, %v3221, %v2264
  %v3287 = vsel %vm3279, %v3222, %v2266
  %v3288 = vsel %vm3279, %v3223, %v2268
  %v3289 = vsel %vm3279, %v3224, %v2270
  %v3290 = vsel %vm3279, %v3225, %v2272
  %v3291 = vsel %vm3279, %v3226, %v2274
  %v3292 = vsel %vm3279, %v3227, %v2276
  %v3293 = vsel %vm3279, %v3228, %v2278
  %v3294 = vsel %vm3279, %v3229, %v2280
  %v3295 = vsel %vm3279, %v3230, %v2282
  %v3296 = vsel %vm3279, %v3231, %v2284
  %v3297 = vsel %vm3279, %v3232, %v2286
  %v3298 = vsel %vm3279, %v3233, %v2288
  %v3299 = vsel %vm3279, %v3234, %v2290
  %v3300 = vsel %vm3279, %v3235, %v2292
  %v3301 = vsel %vm3279, %v3236, %v2294
  %v3302 = vsel %vm3279, %v3237, %v2296
  %v3303 = vsel %vm3279, %v3238, %v2298
  %v3304 = vsel %vm3279, %v3239, %v2300
  %v3305 = vsel %vm3279, %v3240, %v2302
  %v3306 = vsel %vm3279, %v3241, %v2304
  %v3307 = vsel %vm3279, %v3242, %v2306
  %v3308 = vsel %vm3279, %v3243, %v2308
  %v3309 = vsel %vm3279, %v3244, %v2310
  %v3310 = vsel %vm3279, %v3245, %v2312
  %v3311 = vsel %vm3279, %v3246, %v2314
  %v3312 = vsel %vm3279, %v3247, %v2316
  %v3313 = vsel %vm3279, %v3248, %v2318
  %v3314 = vsel %vm3279, %v3249, %v2320
  %v3315 = vsel %vm3279, %v3250, %v2322
  %v3316 = vsel %vm3279, %v3251, %v2324
  %v3317 = vsel %vm3279, %v3252, %v2326
  %v3318 = vsel %vm3279, %v3253, %v2328
  %v3319 = vsel %vm3279, %v3254, %v2330
  %v3320 = vsel %vm3279, %v3255, %v2332
  %v3321 = vsel %vm3279, %v3256, %v2334
  %v3322 = vsel %vm3279, %v3257, %v2336
  %v3323 = vsel %vm3279, %v3258, %v2338
  %v3324 = vsel %vm3279, %v3259, %v2340
  %v3325 = vsel %vm3279, %v3260, %v2342
  %v3326 = vsel %vm3279, %v3261, %v2344
  %v3327 = vsel %vm3279, %v3262, %v2346
  %v3328 = vsel %vm3279, %v3263, %v2348
  %v3329 = vsel %vm3279, %v3264, %v2350
  %v3330 = vsel %vm3279, %v3265, %v2352
  %v3331 = vsel %vm3279, %v3266, %v2354
  %v3332 = vsel %vm3279, %v3267, %v2356
  %v3333 = vsel %vm3279, %v3268, %v2358
  %v3334 = vsel %vm3279, %v3269, %v2360
  %v3335 = vsel %vm3279, %v3270, %v2362
  %v3336 = vsel %vm3279, %v3271, %v2364
  %v3337 = vsel %vm3279, %v3272, %v2366
  %v3338 = vsel %vm3279, %v3273, %v2368
  %v3339 = vsel %vm3279, %v3274, %v2370
  %v3340 = vsel %vm3279, %v3275, %v2372
  %v3341 = vsel %vm3279, %v3276, %v2374
  %v3342 = vsel %vm3279, %v3277, %v2376
  %v3343 = vsel %vm3279, %v3278, %v2378
  %vm3344 = vcmask 457728
  %v3345 = vsel %vm3344, %v3280, %v2508
  %v3346 = vsel %vm3344, %v3281, %v2510
  %v3347 = vsel %vm3344, %v3282, %v2512
  %v3348 = vsel %vm3344, %v3283, %v2514
  %v3349 = vsel %vm3344, %v3284, %v2516
  %v3350 = vsel %vm3344, %v3285, %v2518
  %v3351 = vsel %vm3344, %v3286, %v2520
  %v3352 = vsel %vm3344, %v3287, %v2522
  %v3353 = vsel %vm3344, %v3288, %v2524
  %v3354 = vsel %vm3344, %v3289, %v2526
  %v3355 = vsel %vm3344, %v3290, %v2528
  %v3356 = vsel %vm3344, %v3291, %v2530
  %v3357 = vsel %vm3344, %v3292, %v2532
  %v3358 = vsel %vm3344, %v3293, %v2534
  %v3359 = vsel %vm3344, %v3294, %v2536
  %v3360 = vsel %vm3344, %v3295, %v2538
  %v3361 = vsel %vm3344, %v3296, %v2540
  %v3362 = vsel %vm3344, %v3297, %v2542
  %v3363 = vsel %vm3344, %v3298, %v2544
  %v3364 = vsel %vm3344, %v3299, %v2546
  %v3365 = vsel %vm3344, %v3300, %v2548
  %v3366 = vsel %vm3344, %v3301, %v2550
  %v3367 = vsel %vm3344, %v3302, %v2552
  %v3368 = vsel %vm3344, %v3303, %v2554
  %v3369 = vsel %vm3344, %v3304, %v2556
  %v3370 = vsel %vm3344, %v3305, %v2558
  %v3371 = vsel %vm3344, %v3306, %v2560
  %v3372 = vsel %vm3344, %v3307, %v2562
  %v3373 = vsel %vm3344, %v3308, %v2564
  %v3374 = vsel %vm3344, %v3309, %v2566
  %v3375 = vsel %vm3344, %v3310, %v2568
  %v3376 = vsel %vm3344, %v3311, %v2570
  %v3377 = vsel %vm3344, %v3312, %v2572
  %v3378 = vsel %vm3344, %v3313, %v2574
  %v3379 = vsel %vm3344, %v3314, %v2576
  %v3380 = vsel %vm3344, %v3315, %v2578
  %v3381 = vsel %vm3344, %v3316, %v2580
  %v3382 = vsel %vm3344, %v3317, %v2582
  %v3383 = vsel %vm3344, %v3318, %v2584
  %v3384 = vsel %vm3344, %v3319, %v2586
  %v3385 = vsel %vm3344, %v3320, %v2588
  %v3386 = vsel %vm3344, %v3321, %v2590
  %v3387 = vsel %vm3344, %v3322, %v2592
  %v3388 = vsel %vm3344, %v3323, %v2594
  %v3389 = vsel %vm3344, %v3324, %v2596
  %v3390 = vsel %vm3344, %v3325, %v2598
  %v3391 = vsel %vm3344, %v3326, %v2600
  %v3392 = vsel %vm3344, %v3327, %v2602
  %v3393 = vsel %vm3344, %v3328, %v2604
  %v3394 = vsel %vm3344, %v3329, %v2606
  %v3395 = vsel %vm3344, %v3330, %v2608
  %v3396 = vsel %vm3344, %v3331, %v2610
  %v3397 = vsel %vm3344, %v3332, %v2612
  %v3398 = vsel %vm3344, %v3333, %v2614
  %v3399 = vsel %vm3344, %v3334, %v2616
  %v3400 = vsel %vm3344, %v3335, %v2618
  %v3401 = vsel %vm3344, %v3336, %v2620
  %v3402 = vsel %vm3344, %v3337, %v2622
  %v3403 = vsel %vm3344, %v3338, %v2624
  %v3404 = vsel %vm3344, %v3339, %v2626
  %v3405 = vsel %vm3344, %v3340, %v2628
  %v3406 = vsel %vm3344, %v3341, %v2630
  %v3407 = vsel %vm3344, %v3342, %v2632
  %v3408 = vsel %vm3344, %v3343, %v2634
  %vm3409 = vcmask 523264
  %v3410 = vsel %vm3409, %v3345, %v2764
  %v3411 = vsel %vm3409, %v3346, %v2766
  %v3412 = vsel %vm3409, %v3347, %v2768
  %v3413 = vsel %vm3409, %v3348, %v2770
  %v3414 = vsel %vm3409, %v3349, %v2772
  %v3415 = vsel %vm3409, %v3350, %v2774
  %v3416 = vsel %vm3409, %v3351, %v2776
  %v3417 = vsel %vm3409, %v3352, %v2778
  %v3418 = vsel %vm3409, %v3353, %v2780
  %v3419 = vsel %vm3409, %v3354, %v2782
  %v3420 = vsel %vm3409, %v3355, %v2784
  %v3421 = vsel %vm3409, %v3356, %v2786
  %v3422 = vsel %vm3409, %v3357, %v2788
  %v3423 = vsel %vm3409, %v3358, %v2790
  %v3424 = vsel %vm3409, %v3359, %v2792
  %v3425 = vsel %vm3409, %v3360, %v2794
  %v3426 = vsel %vm3409, %v3361, %v2796
  %v3427 = vsel %vm3409, %v3362, %v2798
  %v3428 = vsel %vm3409, %v3363, %v2800
  %v3429 = vsel %vm3409, %v3364, %v2802
  %v3430 = vsel %vm3409, %v3365, %v2804
  %v3431 = vsel %vm3409, %v3366, %v2806
  %v3432 = vsel %vm3409, %v3367, %v2808
  %v3433 = vsel %vm3409, %v3368, %v2810
  %v3434 = vsel %vm3409, %v3369, %v2812
  %v3435 = vsel %vm3409, %v3370, %v2814
  %v3436 = vsel %vm3409, %v3371, %v2816
  %v3437 = vsel %vm3409, %v3372, %v2818
  %v3438 = vsel %vm3409, %v3373, %v2820
  %v3439 = vsel %vm3409, %v3374, %v2822
  %v3440 = vsel %vm3409, %v3375, %v2824
  %v3441 = vsel %vm3409, %v3376, %v2826
  %v3442 = vsel %vm3409, %v3377, %v2828
  %v3443 = vsel %vm3409, %v3378, %v2830
  %v3444 = vsel %vm3409, %v3379, %v2832
  %v3445 = vsel %vm3409, %v3380, %v2834
  %v3446 = vsel %vm3409, %v3381, %v2836
  %v3447 = vsel %vm3409, %v3382, %v2838
  %v3448 = vsel %vm3409, %v3383, %v2840
  %v3449 = vsel %vm3409, %v3384, %v2842
  %v3450 = vsel %vm3409, %v3385, %v2844
  %v3451 = vsel %vm3409, %v3386, %v2846
  %v3452 = vsel %vm3409, %v3387, %v2848
  %v3453 = vsel %vm3409, %v3388, %v2850
  %v3454 = vsel %vm3409, %v3389, %v2852
  %v3455 = vsel %vm3409, %v3390, %v2854
  %v3456 = vsel %vm3409, %v3391, %v2856
  %v3457 = vsel %vm3409, %v3392, %v2858
  %v3458 = vsel %vm3409, %v3393, %v2860
  %v3459 = vsel %vm3409, %v3394, %v2862
  %v3460 = vsel %vm3409, %v3395, %v2864
  %v3461 = vsel %vm3409, %v3396, %v2866
  %v3462 = vsel %vm3409, %v3397, %v2868
  %v3463 = vsel %vm3409, %v3398, %v2870
  %v3464 = vsel %vm3409, %v3399, %v2872
  %v3465 = vsel %vm3409, %v3400, %v2874
  %v3466 = vsel %vm3409, %v3401, %v2876
  %v3467 = vsel %vm3409, %v3402, %v2878
  %v3468 = vsel %vm3409, %v3403, %v2880
  %v3469 = vsel %vm3409, %v3404, %v2882
  %v3470 = vsel %vm3409, %v3405, %v2884
  %v3471 = vsel %vm3409, %v3406, %v2886
  %v3472 = vsel %vm3409, %v3407, %v2888
  %v3473 = vsel %vm3409, %v3408, %v2890
  %v3474 = vld [vmem:[%s1] sm:$0xff]
  %v3475 = vld [vmem:[%s1 + $0x8] sm:$0xff]
  %v3476 = vld [vmem:[%s1 + $0x10] sm:$0xff]
  %v3477 = vld [vmem:[%s1 + $0x18] sm:$0xff]
  %v3478 = vld [vmem:[%s1 + $0x20] sm:$0xff]
  %v3479 = vld [vmem:[%s1 + $0x28] sm:$0xff]
  %v3480 = vld [vmem:[%s1 + $0x30] sm:$0xff]
  %v3481 = vld [vmem:[%s1 + $0x38] sm:$0xff]
  %v3482 = vld [vmem:[%s1 + $0x40] sm:$0xff]
  %v3483 = vld [vmem:[%s2] sm:$0x1]
  %v3485 = vperm.slane %v3483, 0
  %vm3487 = vcmask 588800
  %v3489 = vsel %vm3487, %v3410, 0
  %v3492 = vsel %vm3487, %v3411, 0
  %v3495 = vsel %vm3487, %v3412, 0
  %v3498 = vsel %vm3487, %v3413, 0
  %v3501 = vsel %vm3487, %v3414, 0
  %v3504 = vsel %vm3487, %v3415, 0
  %v3507 = vsel %vm3487, %v3416, 0
  %v3510 = vsel %vm3487, %v3417, 0
  %v3513 = vsel %vm3487, %v3418, 0
  %v3516 = vsel %vm3487, %v3419, 0
  %v3519 = vsel %vm3487, %v3420, 0
  %v3522 = vsel %vm3487, %v3421, 0
  %v3525 = vsel %vm3487, %v3422, 0
  %v3528 = vsel %vm3487, %v3423, 0
  %v3531 = vsel %vm3487, %v3424, 0
  %v3534 = vsel %vm3487, %v3425, 0
  %v3537 = vsel %vm3487, %v3426, 0
  %v3540 = vsel %vm3487, %v3427, 0
  %v3543 = vsel %vm3487, %v3428, 0
  %v3546 = vsel %vm3487, %v3429, 0
  %v3549 = vsel %vm3487, %v3430, 0
  %v3552 = vsel %vm3487, %v3431, 0
  %v3555 = vsel %vm3487, %v3432, 0
  %v3558 = vsel %vm3487, %v3433, 0
  %v3561 = vsel %vm3487, %v3434, 0
  %v3564 = vsel %vm3487, %v3435, 0
  %v3567 = vsel %vm3487, %v3436, 0
  %v3570 = vsel %vm3487, %v3437, 0
  %v3573 = vsel %vm3487, %v3438, 0
  %v3576 = vsel %vm3487, %v3439, 0
  %v3579 = vsel %vm3487, %v3440, 0
  %v3582 = vsel %vm3487, %v3441, 0
  %v3585 = vsel %vm3487, %v3442, 0
  %v3588 = vsel %vm3487, %v3443, 0
  %v3591 = vsel %vm3487, %v3444, 0
  %v3594 = vsel %vm3487, %v3445, 0
  %v3597 = vsel %vm3487, %v3446, 0
  %v3600 = vsel %vm3487, %v3447, 0
  %v3603 = vsel %vm3487, %v3448, 0
  %v3606 = vsel %vm3487, %v3449, 0
  %v3609 = vsel %vm3487, %v3450, 0
  %v3612 = vsel %vm3487, %v3451, 0
  %v3615 = vsel %vm3487, %v3452, 0
  %v3618 = vsel %vm3487, %v3453, 0
  %v3621 = vsel %vm3487, %v3454, 0
  %v3624 = vsel %vm3487, %v3455, 0
  %v3627 = vsel %vm3487, %v3456, 0
  %v3630 = vsel %vm3487, %v3457, 0
  %v3633 = vsel %vm3487, %v3458, 0
  %v3636 = vsel %vm3487, %v3459, 0
  %v3639 = vsel %vm3487, %v3460, 0
  %v3642 = vsel %vm3487, %v3461, 0
  %v3645 = vsel %vm3487, %v3462, 0
  %v3648 = vsel %vm3487, %v3463, 0
  %v3651 = vsel %vm3487, %v3464, 0
  %v3654 = vsel %vm3487, %v3465, 0
  %v3657 = vsel %vm3487, %v3466, 0
  %v3660 = vsel %vm3487, %v3467, 0
  %v3663 = vsel %vm3487, %v3468, 0
  %v3666 = vsel %vm3487, %v3469, 0
  %v3669 = vsel %vm3487, %v3470, 0
  %v3672 = vsel %vm3487, %v3471, 0
  %v3675 = vsel %vm3487, %v3472, 0
  %v3678 = vsel %vm3487, %v3473, 0
  %3680 = vmatpush.msra.mxu0 0.0
  %3681 = vmatpush.msra.mxu0 0.0
  %3682 = vmatpush.msra.mxu0 0.0
  %3683 = vmatpush.msra.mxu0 0.0
  %3684 = vmatpush.msra.mxu0 0.0
  %3685 = vmatpush.msra.mxu0 0.0
  %3686 = vmatpush.msra.mxu0 0.0
  %3687 = vmatpush.msra.mxu0 %v3482
  %3688 = vmatpush.msra.mxu0 %v3481
  %3689 = vmatpush.msra.mxu0 %v3480
  %3690 = vmatpush.msra.mxu0 %v3479
  %3691 = vmatpush.msra.mxu0 %v3478
  %3692 = vmatpush.msra.mxu0 %v3477
  %3693 = vmatpush.msra.mxu0 %v3476
  %3694 = vmatpush.msra.mxu0 %v3475
  %3695 = vmatpush.msra.mxu0 %v3474
  %3696 = vmatmul.f32.gmra.mxu0 %v3489
  %v3697 = vpop.f32.mrf.mxu0
  %v3698 = vadd.f32 %v3485, %v3697
  %3699 = vmatmul.f32.gmra.mxu0 %v3492
  %v3700 = vpop.f32.mrf.mxu0
  %v3701 = vadd.f32 %v3485, %v3700
  %3702 = vmatmul.f32.gmra.mxu0 %v3495
  %v3703 = vpop.f32.mrf.mxu0
  %v3704 = vadd.f32 %v3485, %v3703
  %3705 = vmatmul.f32.gmra.mxu0 %v3498
  %v3706 = vpop.f32.mrf.mxu0
  %v3707 = vadd.f32 %v3485, %v3706
  %3708 = vmatmul.f32.gmra.mxu0 %v3501
  %v3709 = vpop.f32.mrf.mxu0
  %v3710 = vadd.f32 %v3485, %v3709
  %3711 = vmatmul.f32.gmra.mxu0 %v3504
  %v3712 = vpop.f32.mrf.mxu0
  %v3713 = vadd.f32 %v3485, %v3712
  %3714 = vmatmul.f32.gmra.mxu0 %v3507
  %v3715 = vpop.f32.mrf.mxu0
  %v3716 = vadd.f32 %v3485, %v3715
  %3717 = vmatmul.f32.gmra.mxu0 %v3510
  %v3718 = vpop.f32.mrf.mxu0
  %v3719 = vadd.f32 %v3485, %v3718
  %3720 = vmatmul.f32.gmra.mxu0 %v3513
  %v3721 = vpop.f32.mrf.mxu0
  %v3722 = vadd.f32 %v3485, %v3721
  %3723 = vmatmul.f32.gmra.mxu0 %v3516
  %v3724 = vpop.f32.mrf.mxu0
  %v3725 = vadd.f32 %v3485, %v3724
  %3726 = vmatmul.f32.gmra.mxu0 %v3519
  %v3727 = vpop.f32.mrf.mxu0
  %v3728 = vadd.f32 %v3485, %v3727
  %3729 = vmatmul.f32.gmra.mxu0 %v3522
  %v3730 = vpop.f32.mrf.mxu0
  %v3731 = vadd.f32 %v3485, %v3730
  %3732 = vmatmul.f32.gmra.mxu0 %v3525
  %v3733 = vpop.f32.mrf.mxu0
  %v3734 = vadd.f32 %v3485, %v3733
  %3735 = vmatmul.f32.gmra.mxu0 %v3528
  %v3736 = vpop.f32.mrf.mxu0
  %v3737 = vadd.f32 %v3485, %v3736
  %3738 = vmatmul.f32.gmra.mxu0 %v3531
  %v3739 = vpop.f32.mrf.mxu0
  %v3740 = vadd.f32 %v3485, %v3739
  %3741 = vmatmul.f32.gmra.mxu0 %v3534
  %v3742 = vpop.f32.mrf.mxu0
  %v3743 = vadd.f32 %v3485, %v3742
  %3744 = vmatmul.f32.gmra.mxu0 %v3537
  %v3745 = vpop.f32.mrf.mxu0
  %v3746 = vadd.f32 %v3485, %v3745
  %3747 = vmatmul.f32.gmra.mxu0 %v3540
  %v3748 = vpop.f32.mrf.mxu0
  %v3749 = vadd.f32 %v3485, %v3748
  %3750 = vmatmul.f32.gmra.mxu0 %v3543
  %v3751 = vpop.f32.mrf.mxu0
  %v3752 = vadd.f32 %v3485, %v3751
  %3753 = vmatmul.f32.gmra.mxu0 %v3546
  %v3754 = vpop.f32.mrf.mxu0
  %v3755 = vadd.f32 %v3485, %v3754
  %3756 = vmatmul.f32.gmra.mxu0 %v3549
  %v3757 = vpop.f32.mrf.mxu0
  %v3758 = vadd.f32 %v3485, %v3757
  %3759 = vmatmul.f32.gmra.mxu0 %v3552
  %v3760 = vpop.f32.mrf.mxu0
  %v3761 = vadd.f32 %v3485, %v3760
  %3762 = vmatmul.f32.gmra.mxu0 %v3555
  %v3763 = vpop.f32.mrf.mxu0
  %v3764 = vadd.f32 %v3485, %v3763
  %3765 = vmatmul.f32.gmra.mxu0 %v3558
  %v3766 = vpop.f32.mrf.mxu0
  %v3767 = vadd.f32 %v3485, %v3766
  %3768 = vmatmul.f32.gmra.mxu0 %v3561
  %v3769 = vpop.f32.mrf.mxu0
  %v3770 = vadd.f32 %v3485, %v3769
  %3771 = vmatmul.f32.gmra.mxu0 %v3564
  %v3772 = vpop.f32.mrf.mxu0
  %v3773 = vadd.f32 %v3485, %v3772
  %3774 = vmatmul.f32.gmra.mxu0 %v3567
  %v3775 = vpop.f32.mrf.mxu0
  %v3776 = vadd.f32 %v3485, %v3775
  %3777 = vmatmul.f32.gmra.mxu0 %v3570
  %v3778 = vpop.f32.mrf.mxu0
  %v3779 = vadd.f32 %v3485, %v3778
  %3780 = vmatmul.f32.gmra.mxu0 %v3573
  %v3781 = vpop.f32.mrf.mxu0
  %v3782 = vadd.f32 %v3485, %v3781
  %3783 = vmatmul.f32.gmra.mxu0 %v3576
  %v3784 = vpop.f32.mrf.mxu0
  %v3785 = vadd.f32 %v3485, %v3784
  %3786 = vmatmul.f32.gmra.mxu0 %v3579
  %v3787 = vpop.f32.mrf.mxu0
  %v3788 = vadd.f32 %v3485, %v3787
  %3789 = vmatmul.f32.gmra.mxu0 %v3582
  %v3790 = vpop.f32.mrf.mxu0
  %v3791 = vadd.f32 %v3485, %v3790
  %3792 = vmatmul.f32.gmra.mxu0 %v3585
  %v3793 = vpop.f32.mrf.mxu0
  %v3794 = vadd.f32 %v3485, %v3793
  %3795 = vmatmul.f32.gmra.mxu0 %v3588
  %v3796 = vpop.f32.mrf.mxu0
  %v3797 = vadd.f32 %v3485, %v3796
  %3798 = vmatmul.f32.gmra.mxu0 %v3591
  %v3799 = vpop.f32.mrf.mxu0
  %v3800 = vadd.f32 %v3485, %v3799
  %3801 = vmatmul.f32.gmra.mxu0 %v3594
  %v3802 = vpop.f32.mrf.mxu0
  %v3803 = vadd.f32 %v3485, %v3802
  %3804 = vmatmul.f32.gmra.mxu0 %v3597
  %v3805 = vpop.f32.mrf.mxu0
  %v3806 = vadd.f32 %v3485, %v3805
  %3807 = vmatmul.f32.gmra.mxu0 %v3600
  %v3808 = vpop.f32.mrf.mxu0
  %v3809 = vadd.f32 %v3485, %v3808
  %3810 = vmatmul.f32.gmra.mxu0 %v3603
  %v3811 = vpop.f32.mrf.mxu0
  %v3812 = vadd.f32 %v3485, %v3811
  %3813 = vmatmul.f32.gmra.mxu0 %v3606
  %v3814 = vpop.f32.mrf.mxu0
  %v3815 = vadd.f32 %v3485, %v3814
  %3816 = vmatmul.f32.gmra.mxu0 %v3609
  %v3817 = vpop.f32.mrf.mxu0
  %v3818 = vadd.f32 %v3485, %v3817
  %3819 = vmatmul.f32.gmra.mxu0 %v3612
  %v3820 = vpop.f32.mrf.mxu0
  %v3821 = vadd.f32 %v3485, %v3820
  %3822 = vmatmul.f32.gmra.mxu0 %v3615
  %v3823 = vpop.f32.mrf.mxu0
  %v3824 = vadd.f32 %v3485, %v3823
  %3825 = vmatmul.f32.gmra.mxu0 %v3618
  %v3826 = vpop.f32.mrf.mxu0
  %v3827 = vadd.f32 %v3485, %v3826
  %3828 = vmatmul.f32.gmra.mxu0 %v3621
  %v3829 = vpop.f32.mrf.mxu0
  %v3830 = vadd.f32 %v3485, %v3829
  %3831 = vmatmul.f32.gmra.mxu0 %v3624
  %v3832 = vpop.f32.mrf.mxu0
  %v3833 = vadd.f32 %v3485, %v3832
  %3834 = vmatmul.f32.gmra.mxu0 %v3627
  %v3835 = vpop.f32.mrf.mxu0
  %v3836 = vadd.f32 %v3485, %v3835
  %3837 = vmatmul.f32.gmra.mxu0 %v3630
  %v3838 = vpop.f32.mrf.mxu0
  %v3839 = vadd.f32 %v3485, %v3838
  %3840 = vmatmul.f32.gmra.mxu0 %v3633
  %v3841 = vpop.f32.mrf.mxu0
  %v3842 = vadd.f32 %v3485, %v3841
  %3843 = vmatmul.f32.gmra.mxu0 %v3636
  %v3844 = vpop.f32.mrf.mxu0
  %v3845 = vadd.f32 %v3485, %v3844
  %3846 = vmatmul.f32.gmra.mxu0 %v3639
  %v3847 = vpop.f32.mrf.mxu0
  %v3848 = vadd.f32 %v3485, %v3847
  %3849 = vmatmul.f32.gmra.mxu0 %v3642
  %v3850 = vpop.f32.mrf.mxu0
  %v3851 = vadd.f32 %v3485, %v3850
  %3852 = vmatmul.f32.gmra.mxu0 %v3645
  %v3853 = vpop.f32.mrf.mxu0
  %v3854 = vadd.f32 %v3485, %v3853
  %3855 = vmatmul.f32.gmra.mxu0 %v3648
  %v3856 = vpop.f32.mrf.mxu0
  %v3857 = vadd.f32 %v3485, %v3856
  %3858 = vmatmul.f32.gmra.mxu0 %v3651
  %v3859 = vpop.f32.mrf.mxu0
  %v3860 = vadd.f32 %v3485, %v3859
  %3861 = vmatmul.f32.gmra.mxu0 %v3654
  %v3862 = vpop.f32.mrf.mxu0
  %v3863 = vadd.f32 %v3485, %v3862
  %3864 = vmatmul.f32.gmra.mxu0 %v3657
  %v3865 = vpop.f32.mrf.mxu0
  %v3866 = vadd.f32 %v3485, %v3865
  %3867 = vmatmul.f32.gmra.mxu0 %v3660
  %v3868 = vpop.f32.mrf.mxu0
  %v3869 = vadd.f32 %v3485, %v3868
  %3870 = vmatmul.f32.gmra.mxu0 %v3663
  %v3871 = vpop.f32.mrf.mxu0
  %v3872 = vadd.f32 %v3485, %v3871
  %3873 = vmatmul.f32.gmra.mxu0 %v3666
  %v3874 = vpop.f32.mrf.mxu0
  %v3875 = vadd.f32 %v3485, %v3874
  %3876 = vmatmul.f32.gmra.mxu0 %v3669
  %v3877 = vpop.f32.mrf.mxu0
  %v3878 = vadd.f32 %v3485, %v3877
  %3879 = vmatmul.f32.gmra.mxu0 %v3672
  %v3880 = vpop.f32.mrf.mxu0
  %v3881 = vadd.f32 %v3485, %v3880
  %3882 = vmatmul.f32.gmra.mxu0 %v3675
  %v3883 = vpop.f32.mrf.mxu0
  %v3884 = vadd.f32 %v3485, %v3883
  %3885 = vmatmul.f32.gmra.mxu0 %v3678
  %v3886 = vpop.f32.mrf.mxu0
  %v3887 = vadd.f32 %v3485, %v3886
  %3888 = vdwg.mxu0
  %3889 = vst.msk [vmem:[#allocation3] sm:$0xff] %vm3019, 0.0
  %3890 = vst.msk [vmem:[#allocation3 + $0x8] sm:$0xff] %vm3019, 0.0
  %vm3891 = vcmask 123904
  %3892 = vst.msk [vmem:[#allocation3 + $0x10] sm:$0x3] %vm3891, 0.0
  %3893 = vst.msk [vmem:[#allocation3 + $0x18] sm:$0xff] %vm3019, 0.0
  %3894 = vst.msk [vmem:[#allocation3 + $0x20] sm:$0xff] %vm3019, 0.0
  %3895 = vst.msk [vmem:[#allocation3 + $0x28] sm:$0x3] %vm3891, 0.0
  %3896 = vst.msk [vmem:[#allocation3 + $0x30] sm:$0xff] %vm3019, 0.0
  %3897 = vst.msk [vmem:[#allocation3 + $0x38] sm:$0xff] %vm3019, 0.0
  %3898 = vst.msk [vmem:[#allocation3 + $0x40] sm:$0x3] %vm3891, 0.0
  %3899 = vst.msk [vmem:[#allocation3 + $0x48] sm:$0xff] %vm3019, 0.0
  %3900 = vst.msk [vmem:[#allocation3 + $0x50] sm:$0xff] %vm3019, 0.0
  %3901 = vst.msk [vmem:[#allocation3 + $0x58] sm:$0x3] %vm3891, 0.0
  %3902 = vst.msk [vmem:[#allocation3 + $0x60] sm:$0xff] %vm3019, 0.0
  %3903 = vst.msk [vmem:[#allocation3 + $0x68] sm:$0xff] %vm3019, 0.0
  %3904 = vst.msk [vmem:[#allocation3 + $0x70] sm:$0x3] %vm3891, 0.0
  %3905 = vst.msk [vmem:[#allocation3 + $0x78] sm:$0xff] %vm3019, 0.0
  %3906 = vst.msk [vmem:[#allocation3 + $0x80] sm:$0xff] %vm3019, 0.0
  %3907 = vst.msk [vmem:[#allocation3 + $0x88] sm:$0x3] %vm3891, 0.0
  %3908 = vst.msk [vmem:[#allocation3 + $0x90] sm:$0xff] %vm3019, 0.0
  %3909 = vst.msk [vmem:[#allocation3 + $0x98] sm:$0xff] %vm3019, 0.0
  %3910 = vst.msk [vmem:[#allocation3 + $0xa0] sm:$0x3] %vm3891, 0.0
  %3911 = vst.msk [vmem:[#allocation3 + $0xa8] sm:$0xff] %vm3019, 0.0
  %3912 = vst.msk [vmem:[#allocation3 + $0xb0] sm:$0xff] %vm3019, 0.0
  %3913 = vst.msk [vmem:[#allocation3 + $0xb8] sm:$0x3] %vm3891, 0.0
  %3914 = vst.msk [vmem:[#allocation3 + $0xc0] sm:$0xff] %vm3019, 0.0
  %3915 = vst.msk [vmem:[#allocation3 + $0xc8] sm:$0xff] %vm3019, 0.0
  %3916 = vst.msk [vmem:[#allocation3 + $0xd0] sm:$0x3] %vm3891, 0.0
  %3917 = vst.msk [vmem:[#allocation3 + $0xd8] sm:$0xff] %vm3019, 0.0
  %3918 = vst.msk [vmem:[#allocation3 + $0xe0] sm:$0xff] %vm3019, 0.0
  %3919 = vst.msk [vmem:[#allocation3 + $0xe8] sm:$0x3] %vm3891, 0.0
  %3920 = vst.msk [vmem:[#allocation3 + $0xf0] sm:$0xff] %vm3019, 0.0
  %3921 = vst.msk [vmem:[#allocation3 + $0xf8] sm:$0xff] %vm3019, 0.0
  %3922 = vst.msk [vmem:[#allocation3 + $0x100] sm:$0x3] %vm3891, 0.0
  %3923 = vst.msk [vmem:[#allocation3 + $0x108] sm:$0xff] %vm3019, 0.0
  %3924 = vst.msk [vmem:[#allocation3 + $0x110] sm:$0xff] %vm3019, 0.0
  %3925 = vst.msk [vmem:[#allocation3 + $0x118] sm:$0x3] %vm3891, 0.0
  %3926 = vst.msk [vmem:[#allocation3 + $0x120] sm:$0xff] %vm3019, 0.0
  %3927 = vst.msk [vmem:[#allocation3 + $0x128] sm:$0xff] %vm3019, 0.0
  %3928 = vst.msk [vmem:[#allocation3 + $0x130] sm:$0x3] %vm3891, 0.0
  %3929 = vst.msk [vmem:[#allocation3 + $0x138] sm:$0xff] %vm3019, 0.0
  %3930 = vst.msk [vmem:[#allocation3 + $0x140] sm:$0xff] %vm3019, 0.0
  %3931 = vst.msk [vmem:[#allocation3 + $0x148] sm:$0x3] %vm3891, 0.0
  %3932 = vst.msk [vmem:[#allocation3 + $0x150] sm:$0xff] %vm3019, 0.0
  %3933 = vst.msk [vmem:[#allocation3 + $0x158] sm:$0xff] %vm3019, 0.0
  %3934 = vst.msk [vmem:[#allocation3 + $0x160] sm:$0x3] %vm3891, 0.0
  %3935 = vst.msk [vmem:[#allocation3 + $0x168] sm:$0xff] %vm3019, 0.0
  %3936 = vst.msk [vmem:[#allocation3 + $0x170] sm:$0xff] %vm3019, 0.0
  %3937 = vst.msk [vmem:[#allocation3 + $0x178] sm:$0x3] %vm3891, 0.0
  %3938 = vst.msk [vmem:[#allocation3 + $0x180] sm:$0xff] %vm3019, 0.0
  %3939 = vst.msk [vmem:[#allocation3 + $0x188] sm:$0xff] %vm3019, 0.0
  %3940 = vst.msk [vmem:[#allocation3 + $0x190] sm:$0x3] %vm3891, 0.0
  %3941 = vst.msk [vmem:[#allocation3 + $0x198] sm:$0xff] %vm3019, 0.0
  %3942 = vst.msk [vmem:[#allocation3 + $0x1a0] sm:$0xff] %vm3019, 0.0
  %3943 = vst.msk [vmem:[#allocation3 + $0x1a8] sm:$0x3] %vm3891, 0.0
  %3944 = vst.msk [vmem:[#allocation3 + $0x1b0] sm:$0xff] %vm3019, 0.0
  %3945 = vst.msk [vmem:[#allocation3 + $0x1b8] sm:$0xff] %vm3019, 0.0
  %3946 = vst.msk [vmem:[#allocation3 + $0x1c0] sm:$0x3] %vm3891, 0.0
  %3947 = vst.msk [vmem:[#allocation3 + $0x1c8] sm:$0xff] %vm3019, 0.0
  %3948 = vst.msk [vmem:[#allocation3 + $0x1d0] sm:$0xff] %vm3019, 0.0
  %3949 = vst.msk [vmem:[#allocation3 + $0x1d8] sm:$0x3] %vm3891, 0.0
  %3950 = vst.msk [vmem:[#allocation3 + $0x1e0] sm:$0xff] %vm3019, 0.0
  %3951 = vst.msk [vmem:[#allocation3 + $0x1e8] sm:$0xff] %vm3019, 0.0
  %3952 = vst.msk [vmem:[#allocation3 + $0x1f0] sm:$0x3] %vm3891, 0.0
  %3953 = vst.msk [vmem:[#allocation3 + $0x1f8] sm:$0xff] %vm3019, 0.0
  %3954 = vst.msk [vmem:[#allocation3 + $0x200] sm:$0xff] %vm3019, 0.0
  %3955 = vst.msk [vmem:[#allocation3 + $0x208] sm:$0x3] %vm3891, 0.0
  %3956 = vst.msk [vmem:[#allocation3 + $0x210] sm:$0xff] %vm3019, 0.0
  %3957 = vst.msk [vmem:[#allocation3 + $0x218] sm:$0xff] %vm3019, 0.0
  %3958 = vst.msk [vmem:[#allocation3 + $0x220] sm:$0x3] %vm3891, 0.0
  %3959 = vst.msk [vmem:[#allocation3 + $0x228] sm:$0xff] %vm3019, 0.0
  %3960 = vst.msk [vmem:[#allocation3 + $0x230] sm:$0xff] %vm3019, 0.0
  %3961 = vst.msk [vmem:[#allocation3 + $0x238] sm:$0x3] %vm3891, 0.0
  %3962 = vst.msk [vmem:[#allocation3 + $0x240] sm:$0xff] %vm3019, 0.0
  %3963 = vst.msk [vmem:[#allocation3 + $0x248] sm:$0xff] %vm3019, 0.0
  %3964 = vst.msk [vmem:[#allocation3 + $0x250] sm:$0x3] %vm3891, 0.0
  %3965 = vst.msk [vmem:[#allocation3 + $0x258] sm:$0xff] %vm3019, 0.0
  %3966 = vst.msk [vmem:[#allocation3 + $0x260] sm:$0xff] %vm3019, 0.0
  %3967 = vst.msk [vmem:[#allocation3 + $0x268] sm:$0x3] %vm3891, 0.0
  %3968 = vst.msk [vmem:[#allocation3 + $0x270] sm:$0xff] %vm3019, 0.0
  %3969 = vst.msk [vmem:[#allocation3 + $0x278] sm:$0xff] %vm3019, 0.0
  %3970 = vst.msk [vmem:[#allocation3 + $0x280] sm:$0x3] %vm3891, 0.0
  %3971 = vst.msk [vmem:[#allocation3 + $0x288] sm:$0xff] %vm3019, 0.0
  %3972 = vst.msk [vmem:[#allocation3 + $0x290] sm:$0xff] %vm3019, 0.0
  %3973 = vst.msk [vmem:[#allocation3 + $0x298] sm:$0x3] %vm3891, 0.0
  %3974 = vst.msk [vmem:[#allocation3 + $0x2a0] sm:$0xff] %vm3019, 0.0
  %3975 = vst.msk [vmem:[#allocation3 + $0x2a8] sm:$0xff] %vm3019, 0.0
  %3976 = vst.msk [vmem:[#allocation3 + $0x2b0] sm:$0x3] %vm3891, 0.0
  %3977 = vst.msk [vmem:[#allocation3 + $0x2b8] sm:$0xff] %vm3019, 0.0
  %3978 = vst.msk [vmem:[#allocation3 + $0x2c0] sm:$0xff] %vm3019, 0.0
  %3979 = vst.msk [vmem:[#allocation3 + $0x2c8] sm:$0x3] %vm3891, 0.0
  %3980 = vst.msk [vmem:[#allocation3 + $0x2d0] sm:$0xff] %vm3019, 0.0
  %3981 = vst.msk [vmem:[#allocation3 + $0x2d8] sm:$0xff] %vm3019, 0.0
  %3982 = vst.msk [vmem:[#allocation3 + $0x2e0] sm:$0x3] %vm3891, 0.0
  %3983 = vst.msk [vmem:[#allocation3 + $0x2e8] sm:$0xff] %vm3019, 0.0
  %3984 = vst.msk [vmem:[#allocation3 + $0x2f0] sm:$0xff] %vm3019, 0.0
  %3985 = vst.msk [vmem:[#allocation3 + $0x2f8] sm:$0x3] %vm3891, 0.0
  %3986 = vst.msk [vmem:[#allocation3 + $0x300] sm:$0xff] %vm3019, 0.0
  %3987 = vst.msk [vmem:[#allocation3 + $0x308] sm:$0xff] %vm3019, 0.0
  %3988 = vst.msk [vmem:[#allocation3 + $0x310] sm:$0x3] %vm3891, 0.0
  %3989 = vst.msk [vmem:[#allocation3 + $0x318] sm:$0xff] %vm3019, 0.0
  %3990 = vst.msk [vmem:[#allocation3 + $0x320] sm:$0xff] %vm3019, 0.0
  %3991 = vst.msk [vmem:[#allocation3 + $0x328] sm:$0x3] %vm3891, 0.0
  %3992 = vst.msk [vmem:[#allocation3 + $0x330] sm:$0xff] %vm3019, 0.0
  %3993 = vst.msk [vmem:[#allocation3 + $0x338] sm:$0xff] %vm3019, 0.0
  %3994 = vst.msk [vmem:[#allocation3 + $0x340] sm:$0x3] %vm3891, 0.0
  %3995 = vst.msk [vmem:[#allocation3 + $0x348] sm:$0xff] %vm3019, 0.0
  %3996 = vst.msk [vmem:[#allocation3 + $0x350] sm:$0xff] %vm3019, 0.0
  %3997 = vst.msk [vmem:[#allocation3 + $0x358] sm:$0x3] %vm3891, 0.0
  %s3998 = scalar_lea.vmem [#allocation3], 24
  %3999 = vst.msk [vmem:[%s3998 + $0x1] sm:$0xff] %vm3019, %v3698
  %4000 = vst.msk [vmem:[%s3998 + $0x9] sm:$0xff] %vm3019, %v3701
  %4001 = vst.msk [vmem:[%s3998 + $0x19] sm:$0xff] %vm3019, %v3704
  %4002 = vst.msk [vmem:[%s3998 + $0x21] sm:$0xff] %vm3019, %v3707
  %4003 = vst.msk [vmem:[%s3998 + $0x31] sm:$0xff] %vm3019, %v3710
  %4004 = vst.msk [vmem:[%s3998 + $0x39] sm:$0xff] %vm3019, %v3713
  %4005 = vst.msk [vmem:[%s3998 + $0x49] sm:$0xff] %vm3019, %v3716
  %4006 = vst.msk [vmem:[%s3998 + $0x51] sm:$0xff] %vm3019, %v3719
  %4007 = vst.msk [vmem:[%s3998 + $0x61] sm:$0xff] %vm3019, %v3722
  %4008 = vst.msk [vmem:[%s3998 + $0x69] sm:$0xff] %vm3019, %v3725
  %4009 = vst.msk [vmem:[%s3998 + $0x79] sm:$0xff] %vm3019, %v3728
  %4010 = vst.msk [vmem:[%s3998 + $0x81] sm:$0xff] %vm3019, %v3731
  %4011 = vst.msk [vmem:[%s3998 + $0x91] sm:$0xff] %vm3019, %v3734
  %4012 = vst.msk [vmem:[%s3998 + $0x99] sm:$0xff] %vm3019, %v3737
  %4013 = vst.msk [vmem:[%s3998 + $0xa9] sm:$0xff] %vm3019, %v3740
  %4014 = vst.msk [vmem:[%s3998 + $0xb1] sm:$0xff] %vm3019, %v3743
  %4015 = vst.msk [vmem:[%s3998 + $0xc1] sm:$0xff] %vm3019, %v3746
  %4016 = vst.msk [vmem:[%s3998 + $0xc9] sm:$0xff] %vm3019, %v3749
  %4017 = vst.msk [vmem:[%s3998 + $0xd9] sm:$0xff] %vm3019, %v3752
  %4018 = vst.msk [vmem:[%s3998 + $0xe1] sm:$0xff] %vm3019, %v3755
  %4019 = vst.msk [vmem:[%s3998 + $0xf1] sm:$0xff] %vm3019, %v3758
  %4020 = vst.msk [vmem:[%s3998 + $0xf9] sm:$0xff] %vm3019, %v3761
  %4021 = vst.msk [vmem:[%s3998 + $0x109] sm:$0xff] %vm3019, %v3764
  %4022 = vst.msk [vmem:[%s3998 + $0x111] sm:$0xff] %vm3019, %v3767
  %4023 = vst.msk [vmem:[%s3998 + $0x121] sm:$0xff] %vm3019, %v3770
  %4024 = vst.msk [vmem:[%s3998 + $0x129] sm:$0xff] %vm3019, %v3773
  %4025 = vst.msk [vmem:[%s3998 + $0x139] sm:$0xff] %vm3019, %v3776
  %4026 = vst.msk [vmem:[%s3998 + $0x141] sm:$0xff] %vm3019, %v3779
  %4027 = vst.msk [vmem:[%s3998 + $0x151] sm:$0xff] %vm3019, %v3782
  %4028 = vst.msk [vmem:[%s3998 + $0x159] sm:$0xff] %vm3019, %v3785
  %4029 = vst.msk [vmem:[%s3998 + $0x169] sm:$0xff] %vm3019, %v3788
  %4030 = vst.msk [vmem:[%s3998 + $0x171] sm:$0xff] %vm3019, %v3791
  %4031 = vst.msk [vmem:[%s3998 + $0x1b1] sm:$0xff] %vm3019, %v3794
  %4032 = vst.msk [vmem:[%s3998 + $0x1b9] sm:$0xff] %vm3019, %v3797
  %4033 = vst.msk [vmem:[%s3998 + $0x1c9] sm:$0xff] %vm3019, %v3800
  %4034 = vst.msk [vmem:[%s3998 + $0x1d1] sm:$0xff] %vm3019, %v3803
  %4035 = vst.msk [vmem:[%s3998 + $0x1e1] sm:$0xff] %vm3019, %v3806
  %4036 = vst.msk [vmem:[%s3998 + $0x1e9] sm:$0xff] %vm3019, %v3809
  %4037 = vst.msk [vmem:[%s3998 + $0x1f9] sm:$0xff] %vm3019, %v3812
  %4038 = vst.msk [vmem:[%s3998 + $0x201] sm:$0xff] %vm3019, %v3815
  %4039 = vst.msk [vmem:[%s3998 + $0x211] sm:$0xff] %vm3019, %v3818
  %4040 = vst.msk [vmem:[%s3998 + $0x219] sm:$0xff] %vm3019, %v3821
  %4041 = vst.msk [vmem:[%s3998 + $0x229] sm:$0xff] %vm3019, %v3824
  %4042 = vst.msk [vmem:[%s3998 + $0x231] sm:$0xff] %vm3019, %v3827
  %4043 = vst.msk [vmem:[%s3998 + $0x241] sm:$0xff] %vm3019, %v3830
  %4044 = vst.msk [vmem:[%s3998 + $0x249] sm:$0xff] %vm3019, %v3833
  %4045 = vst.msk [vmem:[%s3998 + $0x259] sm:$0xff] %vm3019, %v3836
  %4046 = vst.msk [vmem:[%s3998 + $0x261] sm:$0xff] %vm3019, %v3839
  %4047 = vst.msk [vmem:[%s3998 + $0x271] sm:$0xff] %vm3019, %v3842
  %4048 = vst.msk [vmem:[%s3998 + $0x279] sm:$0xff] %vm3019, %v3845
  %4049 = vst.msk [vmem:[%s3998 + $0x289] sm:$0xff] %vm3019, %v3848
  %4050 = vst.msk [vmem:[%s3998 + $0x291] sm:$0xff] %vm3019, %v3851
  %4051 = vst.msk [vmem:[%s3998 + $0x2a1] sm:$0xff] %vm3019, %v3854
  %4052 = vst.msk [vmem:[%s3998 + $0x2a9] sm:$0xff] %vm3019, %v3857
  %4053 = vst.msk [vmem:[%s3998 + $0x2b9] sm:$0xff] %vm3019, %v3860
  %4054 = vst.msk [vmem:[%s3998 + $0x2c1] sm:$0xff] %vm3019, %v3863
  %4055 = vst.msk [vmem:[%s3998 + $0x2d1] sm:$0xff] %vm3019, %v3866
  %4056 = vst.msk [vmem:[%s3998 + $0x2d9] sm:$0xff] %vm3019, %v3869
  %4057 = vst.msk [vmem:[%s3998 + $0x2e9] sm:$0xff] %vm3019, %v3872
  %4058 = vst.msk [vmem:[%s3998 + $0x2f1] sm:$0xff] %vm3019, %v3875
  %4059 = vst.msk [vmem:[%s3998 + $0x301] sm:$0xff] %vm3019, %v3878
  %4060 = vst.msk [vmem:[%s3998 + $0x309] sm:$0xff] %vm3019, %v3881
  %4061 = vst.msk [vmem:[%s3998 + $0x319] sm:$0xff] %vm3019, %v3884
  %4062 = vst.msk [vmem:[%s3998 + $0x321] sm:$0xff] %vm3019, %v3887
  %v4063 = vld [vmem:[#allocation3] sm:$0xff]
  %v4064 = vld [vmem:[#allocation3 + $0x8] sm:$0xff]
  %v4065 = vld [vmem:[#allocation3 + $0x18] sm:$0xff]
  %v4066 = vld [vmem:[#allocation3 + $0x20] sm:$0xff]
  %v4067 = vld [vmem:[#allocation3 + $0x30] sm:$0xff]
  %v4068 = vld [vmem:[#allocation3 + $0x38] sm:$0xff]
  %v4069 = vld [vmem:[#allocation3 + $0x48] sm:$0xff]
  %v4070 = vld [vmem:[#allocation3 + $0x50] sm:$0xff]
  %v4071 = vld [vmem:[#allocation3 + $0x60] sm:$0xff]
  %v4072 = vld [vmem:[#allocation3 + $0x68] sm:$0xff]
  %v4073 = vld [vmem:[#allocation3 + $0x78] sm:$0xff]
  %v4074 = vld [vmem:[#allocation3 + $0x80] sm:$0xff]
  %v4075 = vld [vmem:[#allocation3 + $0x90] sm:$0xff]
  %v4076 = vld [vmem:[#allocation3 + $0x98] sm:$0xff]
  %v4077 = vld [vmem:[#allocation3 + $0xa8] sm:$0xff]
  %v4078 = vld [vmem:[#allocation3 + $0xb0] sm:$0xff]
  %v4079 = vld [vmem:[#allocation3 + $0xc0] sm:$0xff]
  %v4080 = vld [vmem:[#allocation3 + $0xc8] sm:$0xff]
  %v4081 = vld [vmem:[#allocation3 + $0xd8] sm:$0xff]
  %v4082 = vld [vmem:[#allocation3 + $0xe0] sm:$0xff]
  %v4083 = vld [vmem:[#allocation3 + $0xf0] sm:$0xff]
  %v4084 = vld [vmem:[#allocation3 + $0xf8] sm:$0xff]
  %v4085 = vld [vmem:[#allocation3 + $0x108] sm:$0xff]
  %v4086 = vld [vmem:[#allocation3 + $0x110] sm:$0xff]
  %v4087 = vld [vmem:[#allocation3 + $0x120] sm:$0xff]
  %v4088 = vld [vmem:[#allocation3 + $0x128] sm:$0xff]
  %v4089 = vld [vmem:[#allocation3 + $0x138] sm:$0xff]
  %v4090 = vld [vmem:[#allocation3 + $0x140] sm:$0xff]
  %v4091 = vld [vmem:[#allocation3 + $0x150] sm:$0xff]
  %v4092 = vld [vmem:[#allocation3 + $0x158] sm:$0xff]
  %v4093 = vld [vmem:[#allocation3 + $0x168] sm:$0xff]
  %v4094 = vld [vmem:[#allocation3 + $0x170] sm:$0xff]
  %v4095 = vld [vmem:[#allocation3 + $0x1b0] sm:$0xff]
  %v4096 = vld [vmem:[#allocation3 + $0x1b8] sm:$0xff]
  %v4097 = vld [vmem:[#allocation3 + $0x1c8] sm:$0xff]
  %v4098 = vld [vmem:[#allocation3 + $0x1d0] sm:$0xff]
  %v4099 = vld [vmem:[#allocation3 + $0x1e0] sm:$0xff]
  %v4100 = vld [vmem:[#allocation3 + $0x1e8] sm:$0xff]
  %v4101 = vld [vmem:[#allocation3 + $0x1f8] sm:$0xff]
  %v4102 = vld [vmem:[#allocation3 + $0x200] sm:$0xff]
  %v4103 = vld [vmem:[#allocation3 + $0x210] sm:$0xff]
  %v4104 = vld [vmem:[#allocation3 + $0x218] sm:$0xff]
  %v4105 = vld [vmem:[#allocation3 + $0x228] sm:$0xff]
  %v4106 = vld [vmem:[#allocation3 + $0x230] sm:$0xff]
  %v4107 = vld [vmem:[#allocation3 + $0x240] sm:$0xff]
  %v4108 = vld [vmem:[#allocation3 + $0x248] sm:$0xff]
  %v4109 = vld [vmem:[#allocation3 + $0x258] sm:$0xff]
  %v4110 = vld [vmem:[#allocation3 + $0x260] sm:$0xff]
  %v4111 = vld [vmem:[#allocation3 + $0x270] sm:$0xff]
  %v4112 = vld [vmem:[#allocation3 + $0x278] sm:$0xff]
  %v4113 = vld [vmem:[#allocation3 + $0x288] sm:$0xff]
  %v4114 = vld [vmem:[#allocation3 + $0x290] sm:$0xff]
  %v4115 = vld [vmem:[#allocation3 + $0x2a0] sm:$0xff]
  %v4116 = vld [vmem:[#allocation3 + $0x2a8] sm:$0xff]
  %v4117 = vld [vmem:[#allocation3 + $0x2b8] sm:$0xff]
  %v4118 = vld [vmem:[#allocation3 + $0x2c0] sm:$0xff]
  %v4119 = vld [vmem:[#allocation3 + $0x2d0] sm:$0xff]
  %v4120 = vld [vmem:[#allocation3 + $0x2d8] sm:$0xff]
  %v4121 = vld [vmem:[#allocation3 + $0x2e8] sm:$0xff]
  %v4122 = vld [vmem:[#allocation3 + $0x2f0] sm:$0xff]
  %v4123 = vld [vmem:[#allocation3 + $0x300] sm:$0xff]
  %v4124 = vld [vmem:[#allocation3 + $0x308] sm:$0xff]
  %v4125 = vld [vmem:[#allocation3 + $0x318] sm:$0xff]
  %v4126 = vld [vmem:[#allocation3 + $0x320] sm:$0xff]
  %v4127 = vld [vmem:[#allocation3 + $0x1] sm:$0xff]
  %v4128 = vld [vmem:[#allocation3 + $0x9] sm:$0xff]
  %v4129 = vld [vmem:[#allocation3 + $0x19] sm:$0xff]
  %v4130 = vld [vmem:[#allocation3 + $0x21] sm:$0xff]
  %v4131 = vld [vmem:[#allocation3 + $0x31] sm:$0xff]
  %v4132 = vld [vmem:[#allocation3 + $0x39] sm:$0xff]
  %v4133 = vld [vmem:[#allocation3 + $0x49] sm:$0xff]
  %v4134 = vld [vmem:[#allocation3 + $0x51] sm:$0xff]
  %v4135 = vld [vmem:[#allocation3 + $0x61] sm:$0xff]
  %v4136 = vld [vmem:[#allocation3 + $0x69] sm:$0xff]
  %v4137 = vld [vmem:[#allocation3 + $0x79] sm:$0xff]
  %v4138 = vld [vmem:[#allocation3 + $0x81] sm:$0xff]
  %v4139 = vld [vmem:[#allocation3 + $0x91] sm:$0xff]
  %v4140 = vld [vmem:[#allocation3 + $0x99] sm:$0xff]
  %v4141 = vld [vmem:[#allocation3 + $0xa9] sm:$0xff]
  %v4142 = vld [vmem:[#allocation3 + $0xb1] sm:$0xff]
  %v4143 = vld [vmem:[#allocation3 + $0xc1] sm:$0xff]
  %v4144 = vld [vmem:[#allocation3 + $0xc9] sm:$0xff]
  %v4145 = vld [vmem:[#allocation3 + $0xd9] sm:$0xff]
  %v4146 = vld [vmem:[#allocation3 + $0xe1] sm:$0xff]
  %v4147 = vld [vmem:[#allocation3 + $0xf1] sm:$0xff]
  %v4148 = vld [vmem:[#allocation3 + $0xf9] sm:$0xff]
  %v4149 = vld [vmem:[#allocation3 + $0x109] sm:$0xff]
  %v4150 = vld [vmem:[#allocation3 + $0x111] sm:$0xff]
  %v4151 = vld [vmem:[#allocation3 + $0x121] sm:$0xff]
  %v4152 = vld [vmem:[#allocation3 + $0x129] sm:$0xff]
  %v4153 = vld [vmem:[#allocation3 + $0x139] sm:$0xff]
  %v4154 = vld [vmem:[#allocation3 + $0x141] sm:$0xff]
  %v4155 = vld [vmem:[#allocation3 + $0x151] sm:$0xff]
  %v4156 = vld [vmem:[#allocation3 + $0x159] sm:$0xff]
  %v4157 = vld [vmem:[#allocation3 + $0x169] sm:$0xff]
  %v4158 = vld [vmem:[#allocation3 + $0x171] sm:$0xff]
  %v4159 = vld [vmem:[#allocation3 + $0x1b1] sm:$0xff]
  %v4160 = vld [vmem:[#allocation3 + $0x1b9] sm:$0xff]
  %v4161 = vld [vmem:[#allocation3 + $0x1c9] sm:$0xff]
  %v4162 = vld [vmem:[#allocation3 + $0x1d1] sm:$0xff]
  %v4163 = vld [vmem:[#allocation3 + $0x1e1] sm:$0xff]
  %v4164 = vld [vmem:[#allocation3 + $0x1e9] sm:$0xff]
  %v4165 = vld [vmem:[#allocation3 + $0x1f9] sm:$0xff]
  %v4166 = vld [vmem:[#allocation3 + $0x201] sm:$0xff]
  %v4167 = vld [vmem:[#allocation3 + $0x211] sm:$0xff]
  %v4168 = vld [vmem:[#allocation3 + $0x219] sm:$0xff]
  %v4169 = vld [vmem:[#allocation3 + $0x229] sm:$0xff]
  %v4170 = vld [vmem:[#allocation3 + $0x231] sm:$0xff]
  %v4171 = vld [vmem:[#allocation3 + $0x241] sm:$0xff]
  %v4172 = vld [vmem:[#allocation3 + $0x249] sm:$0xff]
  %v4173 = vld [vmem:[#allocation3 + $0x259] sm:$0xff]
  %v4174 = vld [vmem:[#allocation3 + $0x261] sm:$0xff]
  %v4175 = vld [vmem:[#allocation3 + $0x271] sm:$0xff]
  %v4176 = vld [vmem:[#allocation3 + $0x279] sm:$0xff]
  %v4177 = vld [vmem:[#allocation3 + $0x289] sm:$0xff]
  %v4178 = vld [vmem:[#allocation3 + $0x291] sm:$0xff]
  %v4179 = vld [vmem:[#allocation3 + $0x2a1] sm:$0xff]
  %v4180 = vld [vmem:[#allocation3 + $0x2a9] sm:$0xff]
  %v4181 = vld [vmem:[#allocation3 + $0x2b9] sm:$0xff]
  %v4182 = vld [vmem:[#allocation3 + $0x2c1] sm:$0xff]
  %v4183 = vld [vmem:[#allocation3 + $0x2d1] sm:$0xff]
  %v4184 = vld [vmem:[#allocation3 + $0x2d9] sm:$0xff]
  %v4185 = vld [vmem:[#allocation3 + $0x2e9] sm:$0xff]
  %v4186 = vld [vmem:[#allocation3 + $0x2f1] sm:$0xff]
  %v4187 = vld [vmem:[#allocation3 + $0x301] sm:$0xff]
  %v4188 = vld [vmem:[#allocation3 + $0x309] sm:$0xff]
  %v4189 = vld [vmem:[#allocation3 + $0x319] sm:$0xff]
  %v4190 = vld [vmem:[#allocation3 + $0x321] sm:$0xff]
  %v4191 = vld [vmem:[#allocation3 + $0x2] sm:$0xff]
  %v4192 = vld [vmem:[#allocation3 + $0xa] sm:$0xff]
  %v4193 = vld [vmem:[#allocation3 + $0x1a] sm:$0xff]
  %v4194 = vld [vmem:[#allocation3 + $0x22] sm:$0xff]
  %v4195 = vld [vmem:[#allocation3 + $0x32] sm:$0xff]
  %v4196 = vld [vmem:[#allocation3 + $0x3a] sm:$0xff]
  %v4197 = vld [vmem:[#allocation3 + $0x4a] sm:$0xff]
  %v4198 = vld [vmem:[#allocation3 + $0x52] sm:$0xff]
  %v4199 = vld [vmem:[#allocation3 + $0x62] sm:$0xff]
  %v4200 = vld [vmem:[#allocation3 + $0x6a] sm:$0xff]
  %v4201 = vld [vmem:[#allocation3 + $0x7a] sm:$0xff]
  %v4202 = vld [vmem:[#allocation3 + $0x82] sm:$0xff]
  %v4203 = vld [vmem:[#allocation3 + $0x92] sm:$0xff]
  %v4204 = vld [vmem:[#allocation3 + $0x9a] sm:$0xff]
  %v4205 = vld [vmem:[#allocation3 + $0xaa] sm:$0xff]
  %v4206 = vld [vmem:[#allocation3 + $0xb2] sm:$0xff]
  %v4207 = vld [vmem:[#allocation3 + $0xc2] sm:$0xff]
  %v4208 = vld [vmem:[#allocation3 + $0xca] sm:$0xff]
  %v4209 = vld [vmem:[#allocation3 + $0xda] sm:$0xff]
  %v4210 = vld [vmem:[#allocation3 + $0xe2] sm:$0xff]
  %v4211 = vld [vmem:[#allocation3 + $0xf2] sm:$0xff]
  %v4212 = vld [vmem:[#allocation3 + $0xfa] sm:$0xff]
  %v4213 = vld [vmem:[#allocation3 + $0x10a] sm:$0xff]
  %v4214 = vld [vmem:[#allocation3 + $0x112] sm:$0xff]
  %v4215 = vld [vmem:[#allocation3 + $0x122] sm:$0xff]
  %v4216 = vld [vmem:[#allocation3 + $0x12a] sm:$0xff]
  %v4217 = vld [vmem:[#allocation3 + $0x13a] sm:$0xff]
  %v4218 = vld [vmem:[#allocation3 + $0x142] sm:$0xff]
  %v4219 = vld [vmem:[#allocation3 + $0x152] sm:$0xff]
  %v4220 = vld [vmem:[#allocation3 + $0x15a] sm:$0xff]
  %v4221 = vld [vmem:[#allocation3 + $0x16a] sm:$0xff]
  %v4222 = vld [vmem:[#allocation3 + $0x172] sm:$0xff]
  %v4223 = vld [vmem:[#allocation3 + $0x1b2] sm:$0xff]
  %v4224 = vld [vmem:[#allocation3 + $0x1ba] sm:$0xff]
  %v4225 = vld [vmem:[#allocation3 + $0x1ca] sm:$0xff]
  %v4226 = vld [vmem:[#allocation3 + $0x1d2] sm:$0xff]
  %v4227 = vld [vmem:[#allocation3 + $0x1e2] sm:$0xff]
  %v4228 = vld [vmem:[#allocation3 + $0x1ea] sm:$0xff]
  %v4229 = vld [vmem:[#allocation3 + $0x1fa] sm:$0xff]
  %v4230 = vld [vmem:[#allocation3 + $0x202] sm:$0xff]
  %v4231 = vld [vmem:[#allocation3 + $0x212] sm:$0xff]
  %v4232 = vld [vmem:[#allocation3 + $0x21a] sm:$0xff]
  %v4233 = vld [vmem:[#allocation3 + $0x22a] sm:$0xff]
  %v4234 = vld [vmem:[#allocation3 + $0x232] sm:$0xff]
  %v4235 = vld [vmem:[#allocation3 + $0x242] sm:$0xff]
  %v4236 = vld [vmem:[#allocation3 + $0x24a] sm:$0xff]
  %v4237 = vld [vmem:[#allocation3 + $0x25a] sm:$0xff]
  %v4238 = vld [vmem:[#allocation3 + $0x262] sm:$0xff]
  %v4239 = vld [vmem:[#allocation3 + $0x272] sm:$0xff]
  %v4240 = vld [vmem:[#allocation3 + $0x27a] sm:$0xff]
  %v4241 = vld [vmem:[#allocation3 + $0x28a] sm:$0xff]
  %v4242 = vld [vmem:[#allocation3 + $0x292] sm:$0xff]
  %v4243 = vld [vmem:[#allocation3 + $0x2a2] sm:$0xff]
  %v4244 = vld [vmem:[#allocation3 + $0x2aa] sm:$0xff]
  %v4245 = vld [vmem:[#allocation3 + $0x2ba] sm:$0xff]
  %v4246 = vld [vmem:[#allocation3 + $0x2c2] sm:$0xff]
  %v4247 = vld [vmem:[#allocation3 + $0x2d2] sm:$0xff]
  %v4248 = vld [vmem:[#allocation3 + $0x2da] sm:$0xff]
  %v4249 = vld [vmem:[#allocation3 + $0x2ea] sm:$0xff]
  %v4250 = vld [vmem:[#allocation3 + $0x2f2] sm:$0xff]
  %v4251 = vld [vmem:[#allocation3 + $0x302] sm:$0xff]
  %v4252 = vld [vmem:[#allocation3 + $0x30a] sm:$0xff]
  %v4253 = vld [vmem:[#allocation3 + $0x31a] sm:$0xff]
  %v4254 = vld [vmem:[#allocation3 + $0x322] sm:$0xff]
  %v4255 = vld [vmem:[%s3998] sm:$0xff]
  %v4256 = vld [vmem:[%s3998 + $0x8] sm:$0xff]
  %v4257 = vld [vmem:[%s3998 + $0x18] sm:$0xff]
  %v4258 = vld [vmem:[%s3998 + $0x20] sm:$0xff]
  %v4259 = vld [vmem:[%s3998 + $0x30] sm:$0xff]
  %v4260 = vld [vmem:[%s3998 + $0x38] sm:$0xff]
  %v4261 = vld [vmem:[%s3998 + $0x48] sm:$0xff]
  %v4262 = vld [vmem:[%s3998 + $0x50] sm:$0xff]
  %v4263 = vld [vmem:[%s3998 + $0x60] sm:$0xff]
  %v4264 = vld [vmem:[%s3998 + $0x68] sm:$0xff]
  %v4265 = vld [vmem:[%s3998 + $0x78] sm:$0xff]
  %v4266 = vld [vmem:[%s3998 + $0x80] sm:$0xff]
  %v4267 = vld [vmem:[%s3998 + $0x90] sm:$0xff]
  %v4268 = vld [vmem:[%s3998 + $0x98] sm:$0xff]
  %v4269 = vld [vmem:[%s3998 + $0xa8] sm:$0xff]
  %v4270 = vld [vmem:[%s3998 + $0xb0] sm:$0xff]
  %v4271 = vld [vmem:[%s3998 + $0xc0] sm:$0xff]
  %v4272 = vld [vmem:[%s3998 + $0xc8] sm:$0xff]
  %v4273 = vld [vmem:[%s3998 + $0xd8] sm:$0xff]
  %v4274 = vld [vmem:[%s3998 + $0xe0] sm:$0xff]
  %v4275 = vld [vmem:[%s3998 + $0xf0] sm:$0xff]
  %v4276 = vld [vmem:[%s3998 + $0xf8] sm:$0xff]
  %v4277 = vld [vmem:[%s3998 + $0x108] sm:$0xff]
  %v4278 = vld [vmem:[%s3998 + $0x110] sm:$0xff]
  %v4279 = vld [vmem:[%s3998 + $0x120] sm:$0xff]
  %v4280 = vld [vmem:[%s3998 + $0x128] sm:$0xff]
  %v4281 = vld [vmem:[%s3998 + $0x138] sm:$0xff]
  %v4282 = vld [vmem:[%s3998 + $0x140] sm:$0xff]
  %v4283 = vld [vmem:[%s3998 + $0x150] sm:$0xff]
  %v4284 = vld [vmem:[%s3998 + $0x158] sm:$0xff]
  %v4285 = vld [vmem:[%s3998 + $0x168] sm:$0xff]
  %v4286 = vld [vmem:[%s3998 + $0x170] sm:$0xff]
  %v4287 = vld [vmem:[%s3998 + $0x1b0] sm:$0xff]
  %v4288 = vld [vmem:[%s3998 + $0x1b8] sm:$0xff]
  %v4289 = vld [vmem:[%s3998 + $0x1c8] sm:$0xff]
  %v4290 = vld [vmem:[%s3998 + $0x1d0] sm:$0xff]
  %v4291 = vld [vmem:[%s3998 + $0x1e0] sm:$0xff]
  %v4292 = vld [vmem:[%s3998 + $0x1e8] sm:$0xff]
  %v4293 = vld [vmem:[%s3998 + $0x1f8] sm:$0xff]
  %v4294 = vld [vmem:[%s3998 + $0x200] sm:$0xff]
  %v4295 = vld [vmem:[%s3998 + $0x210] sm:$0xff]
  %v4296 = vld [vmem:[%s3998 + $0x218] sm:$0xff]
  %v4297 = vld [vmem:[%s3998 + $0x228] sm:$0xff]
  %v4298 = vld [vmem:[%s3998 + $0x230] sm:$0xff]
  %v4299 = vld [vmem:[%s3998 + $0x240] sm:$0xff]
  %v4300 = vld [vmem:[%s3998 + $0x248] sm:$0xff]
  %v4301 = vld [vmem:[%s3998 + $0x258] sm:$0xff]
  %v4302 = vld [vmem:[%s3998 + $0x260] sm:$0xff]
  %v4303 = vld [vmem:[%s3998 + $0x270] sm:$0xff]
  %v4304 = vld [vmem:[%s3998 + $0x278] sm:$0xff]
  %v4305 = vld [vmem:[%s3998 + $0x288] sm:$0xff]
  %v4306 = vld [vmem:[%s3998 + $0x290] sm:$0xff]
  %v4307 = vld [vmem:[%s3998 + $0x2a0] sm:$0xff]
  %v4308 = vld [vmem:[%s3998 + $0x2a8] sm:$0xff]
  %v4309 = vld [vmem:[%s3998 + $0x2b8] sm:$0xff]
  %v4310 = vld [vmem:[%s3998 + $0x2c0] sm:$0xff]
  %v4311 = vld [vmem:[%s3998 + $0x2d0] sm:$0xff]
  %v4312 = vld [vmem:[%s3998 + $0x2d8] sm:$0xff]
  %v4313 = vld [vmem:[%s3998 + $0x2e8] sm:$0xff]
  %v4314 = vld [vmem:[%s3998 + $0x2f0] sm:$0xff]
  %v4315 = vld [vmem:[%s3998 + $0x300] sm:$0xff]
  %v4316 = vld [vmem:[%s3998 + $0x308] sm:$0xff]
  %v4317 = vld [vmem:[%s3998 + $0x318] sm:$0xff]
  %v4318 = vld [vmem:[%s3998 + $0x320] sm:$0xff]
  %v4319 = vld [vmem:[%s3998 + $0x1] sm:$0xff]
  %v4320 = vld [vmem:[%s3998 + $0x9] sm:$0xff]
  %v4321 = vld [vmem:[%s3998 + $0x19] sm:$0xff]
  %v4322 = vld [vmem:[%s3998 + $0x21] sm:$0xff]
  %v4323 = vld [vmem:[%s3998 + $0x31] sm:$0xff]
  %v4324 = vld [vmem:[%s3998 + $0x39] sm:$0xff]
  %v4325 = vld [vmem:[%s3998 + $0x49] sm:$0xff]
  %v4326 = vld [vmem:[%s3998 + $0x51] sm:$0xff]
  %v4327 = vld [vmem:[%s3998 + $0x61] sm:$0xff]
  %v4328 = vld [vmem:[%s3998 + $0x69] sm:$0xff]
  %v4329 = vld [vmem:[%s3998 + $0x79] sm:$0xff]
  %v4330 = vld [vmem:[%s3998 + $0x81] sm:$0xff]
  %v4331 = vld [vmem:[%s3998 + $0x91] sm:$0xff]
  %v4332 = vld [vmem:[%s3998 + $0x99] sm:$0xff]
  %v4333 = vld [vmem:[%s3998 + $0xa9] sm:$0xff]
  %v4334 = vld [vmem:[%s3998 + $0xb1] sm:$0xff]
  %v4335 = vld [vmem:[%s3998 + $0xc1] sm:$0xff]
  %v4336 = vld [vmem:[%s3998 + $0xc9] sm:$0xff]
  %v4337 = vld [vmem:[%s3998 + $0xd9] sm:$0xff]
  %v4338 = vld [vmem:[%s3998 + $0xe1] sm:$0xff]
  %v4339 = vld [vmem:[%s3998 + $0xf1] sm:$0xff]
  %v4340 = vld [vmem:[%s3998 + $0xf9] sm:$0xff]
  %v4341 = vld [vmem:[%s3998 + $0x109] sm:$0xff]
  %v4342 = vld [vmem:[%s3998 + $0x111] sm:$0xff]
  %v4343 = vld [vmem:[%s3998 + $0x121] sm:$0xff]
  %v4344 = vld [vmem:[%s3998 + $0x129] sm:$0xff]
  %v4345 = vld [vmem:[%s3998 + $0x139] sm:$0xff]
  %v4346 = vld [vmem:[%s3998 + $0x141] sm:$0xff]
  %v4347 = vld [vmem:[%s3998 + $0x151] sm:$0xff]
  %v4348 = vld [vmem:[%s3998 + $0x159] sm:$0xff]
  %v4349 = vld [vmem:[%s3998 + $0x169] sm:$0xff]
  %v4350 = vld [vmem:[%s3998 + $0x171] sm:$0xff]
  %v4351 = vld [vmem:[%s3998 + $0x1b1] sm:$0xff]
  %v4352 = vld [vmem:[%s3998 + $0x1b9] sm:$0xff]
  %v4353 = vld [vmem:[%s3998 + $0x1c9] sm:$0xff]
  %v4354 = vld [vmem:[%s3998 + $0x1d1] sm:$0xff]
  %v4355 = vld [vmem:[%s3998 + $0x1e1] sm:$0xff]
  %v4356 = vld [vmem:[%s3998 + $0x1e9] sm:$0xff]
  %v4357 = vld [vmem:[%s3998 + $0x1f9] sm:$0xff]
  %v4358 = vld [vmem:[%s3998 + $0x201] sm:$0xff]
  %v4359 = vld [vmem:[%s3998 + $0x211] sm:$0xff]
  %v4360 = vld [vmem:[%s3998 + $0x219] sm:$0xff]
  %v4361 = vld [vmem:[%s3998 + $0x229] sm:$0xff]
  %v4362 = vld [vmem:[%s3998 + $0x231] sm:$0xff]
  %v4363 = vld [vmem:[%s3998 + $0x241] sm:$0xff]
  %v4364 = vld [vmem:[%s3998 + $0x249] sm:$0xff]
  %v4365 = vld [vmem:[%s3998 + $0x259] sm:$0xff]
  %v4366 = vld [vmem:[%s3998 + $0x261] sm:$0xff]
  %v4367 = vld [vmem:[%s3998 + $0x271] sm:$0xff]
  %v4368 = vld [vmem:[%s3998 + $0x279] sm:$0xff]
  %v4369 = vld [vmem:[%s3998 + $0x289] sm:$0xff]
  %v4370 = vld [vmem:[%s3998 + $0x291] sm:$0xff]
  %v4371 = vld [vmem:[%s3998 + $0x2a1] sm:$0xff]
  %v4372 = vld [vmem:[%s3998 + $0x2a9] sm:$0xff]
  %v4373 = vld [vmem:[%s3998 + $0x2b9] sm:$0xff]
  %v4374 = vld [vmem:[%s3998 + $0x2c1] sm:$0xff]
  %v4375 = vld [vmem:[%s3998 + $0x2d1] sm:$0xff]
  %v4376 = vld [vmem:[%s3998 + $0x2d9] sm:$0xff]
  %v4377 = vld [vmem:[%s3998 + $0x2e9] sm:$0xff]
  %v4378 = vld [vmem:[%s3998 + $0x2f1] sm:$0xff]
  %v4379 = vld [vmem:[%s3998 + $0x301] sm:$0xff]
  %v4380 = vld [vmem:[%s3998 + $0x309] sm:$0xff]
  %v4381 = vld [vmem:[%s3998 + $0x319] sm:$0xff]
  %v4382 = vld [vmem:[%s3998 + $0x321] sm:$0xff]
  %v4383 = vld [vmem:[%s3998 + $0x2] sm:$0xff]
  %v4384 = vld [vmem:[%s3998 + $0xa] sm:$0xff]
  %v4385 = vld [vmem:[%s3998 + $0x1a] sm:$0xff]
  %v4386 = vld [vmem:[%s3998 + $0x22] sm:$0xff]
  %v4387 = vld [vmem:[%s3998 + $0x32] sm:$0xff]
  %v4388 = vld [vmem:[%s3998 + $0x3a] sm:$0xff]
  %v4389 = vld [vmem:[%s3998 + $0x4a] sm:$0xff]
  %v4390 = vld [vmem:[%s3998 + $0x52] sm:$0xff]
  %v4391 = vld [vmem:[%s3998 + $0x62] sm:$0xff]
  %v4392 = vld [vmem:[%s3998 + $0x6a] sm:$0xff]
  %v4393 = vld [vmem:[%s3998 + $0x7a] sm:$0xff]
  %v4394 = vld [vmem:[%s3998 + $0x82] sm:$0xff]
  %v4395 = vld [vmem:[%s3998 + $0x92] sm:$0xff]
  %v4396 = vld [vmem:[%s3998 + $0x9a] sm:$0xff]
  %v4397 = vld [vmem:[%s3998 + $0xaa] sm:$0xff]
  %v4398 = vld [vmem:[%s3998 + $0xb2] sm:$0xff]
  %v4399 = vld [vmem:[%s3998 + $0xc2] sm:$0xff]
  %v4400 = vld [vmem:[%s3998 + $0xca] sm:$0xff]
  %v4401 = vld [vmem:[%s3998 + $0xda] sm:$0xff]
  %v4402 = vld [vmem:[%s3998 + $0xe2] sm:$0xff]
  %v4403 = vld [vmem:[%s3998 + $0xf2] sm:$0xff]
  %v4404 = vld [vmem:[%s3998 + $0xfa] sm:$0xff]
  %v4405 = vld [vmem:[%s3998 + $0x10a] sm:$0xff]
  %v4406 = vld [vmem:[%s3998 + $0x112] sm:$0xff]
  %v4407 = vld [vmem:[%s3998 + $0x122] sm:$0xff]
  %v4408 = vld [vmem:[%s3998 + $0x12a] sm:$0xff]
  %v4409 = vld [vmem:[%s3998 + $0x13a] sm:$0xff]
  %v4410 = vld [vmem:[%s3998 + $0x142] sm:$0xff]
  %v4411 = vld [vmem:[%s3998 + $0x152] sm:$0xff]
  %v4412 = vld [vmem:[%s3998 + $0x15a] sm:$0xff]
  %v4413 = vld [vmem:[%s3998 + $0x16a] sm:$0xff]
  %v4414 = vld [vmem:[%s3998 + $0x172] sm:$0xff]
  %v4415 = vld [vmem:[%s3998 + $0x1b2] sm:$0xff]
  %v4416 = vld [vmem:[%s3998 + $0x1ba] sm:$0xff]
  %v4417 = vld [vmem:[%s3998 + $0x1ca] sm:$0xff]
  %v4418 = vld [vmem:[%s3998 + $0x1d2] sm:$0xff]
  %v4419 = vld [vmem:[%s3998 + $0x1e2] sm:$0xff]
  %v4420 = vld [vmem:[%s3998 + $0x1ea] sm:$0xff]
  %v4421 = vld [vmem:[%s3998 + $0x1fa] sm:$0xff]
  %v4422 = vld [vmem:[%s3998 + $0x202] sm:$0xff]
  %v4423 = vld [vmem:[%s3998 + $0x212] sm:$0xff]
  %v4424 = vld [vmem:[%s3998 + $0x21a] sm:$0xff]
  %v4425 = vld [vmem:[%s3998 + $0x22a] sm:$0xff]
  %v4426 = vld [vmem:[%s3998 + $0x232] sm:$0xff]
  %v4427 = vld [vmem:[%s3998 + $0x242] sm:$0xff]
  %v4428 = vld [vmem:[%s3998 + $0x24a] sm:$0xff]
  %v4429 = vld [vmem:[%s3998 + $0x25a] sm:$0xff]
  %v4430 = vld [vmem:[%s3998 + $0x262] sm:$0xff]
  %v4431 = vld [vmem:[%s3998 + $0x272] sm:$0xff]
  %v4432 = vld [vmem:[%s3998 + $0x27a] sm:$0xff]
  %v4433 = vld [vmem:[%s3998 + $0x28a] sm:$0xff]
  %v4434 = vld [vmem:[%s3998 + $0x292] sm:$0xff]
  %v4435 = vld [vmem:[%s3998 + $0x2a2] sm:$0xff]
  %v4436 = vld [vmem:[%s3998 + $0x2aa] sm:$0xff]
  %v4437 = vld [vmem:[%s3998 + $0x2ba] sm:$0xff]
  %v4438 = vld [vmem:[%s3998 + $0x2c2] sm:$0xff]
  %v4439 = vld [vmem:[%s3998 + $0x2d2] sm:$0xff]
  %v4440 = vld [vmem:[%s3998 + $0x2da] sm:$0xff]
  %v4441 = vld [vmem:[%s3998 + $0x2ea] sm:$0xff]
  %v4442 = vld [vmem:[%s3998 + $0x2f2] sm:$0xff]
  %v4443 = vld [vmem:[%s3998 + $0x302] sm:$0xff]
  %v4444 = vld [vmem:[%s3998 + $0x30a] sm:$0xff]
  %v4445 = vld [vmem:[%s3998 + $0x31a] sm:$0xff]
  %v4446 = vld [vmem:[%s3998 + $0x322] sm:$0xff]
  %s4447 = scalar_lea.vmem [#allocation3], 48
  %v4448 = vld [vmem:[%s4447] sm:$0xff]
  %v4449 = vld [vmem:[%s4447 + $0x8] sm:$0xff]
  %v4450 = vld [vmem:[%s4447 + $0x18] sm:$0xff]
  %v4451 = vld [vmem:[%s4447 + $0x20] sm:$0xff]
  %v4452 = vld [vmem:[%s4447 + $0x30] sm:$0xff]
  %v4453 = vld [vmem:[%s4447 + $0x38] sm:$0xff]
  %v4454 = vld [vmem:[%s4447 + $0x48] sm:$0xff]
  %v4455 = vld [vmem:[%s4447 + $0x50] sm:$0xff]
  %v4456 = vld [vmem:[%s4447 + $0x60] sm:$0xff]
  %v4457 = vld [vmem:[%s4447 + $0x68] sm:$0xff]
  %v4458 = vld [vmem:[%s4447 + $0x78] sm:$0xff]
  %v4459 = vld [vmem:[%s4447 + $0x80] sm:$0xff]
  %v4460 = vld [vmem:[%s4447 + $0x90] sm:$0xff]
  %v4461 = vld [vmem:[%s4447 + $0x98] sm:$0xff]
  %v4462 = vld [vmem:[%s4447 + $0xa8] sm:$0xff]
  %v4463 = vld [vmem:[%s4447 + $0xb0] sm:$0xff]
  %v4464 = vld [vmem:[%s4447 + $0xc0] sm:$0xff]
  %v4465 = vld [vmem:[%s4447 + $0xc8] sm:$0xff]
  %v4466 = vld [vmem:[%s4447 + $0xd8] sm:$0xff]
  %v4467 = vld [vmem:[%s4447 + $0xe0] sm:$0xff]
  %v4468 = vld [vmem:[%s4447 + $0xf0] sm:$0xff]
  %v4469 = vld [vmem:[%s4447 + $0xf8] sm:$0xff]
  %v4470 = vld [vmem:[%s4447 + $0x108] sm:$0xff]
  %v4471 = vld [vmem:[%s4447 + $0x110] sm:$0xff]
  %v4472 = vld [vmem:[%s4447 + $0x120] sm:$0xff]
  %v4473 = vld [vmem:[%s4447 + $0x128] sm:$0xff]
  %v4474 = vld [vmem:[%s4447 + $0x138] sm:$0xff]
  %v4475 = vld [vmem:[%s4447 + $0x140] sm:$0xff]
  %v4476 = vld [vmem:[%s4447 + $0x150] sm:$0xff]
  %v4477 = vld [vmem:[%s4447 + $0x158] sm:$0xff]
  %v4478 = vld [vmem:[%s4447 + $0x168] sm:$0xff]
  %v4479 = vld [vmem:[%s4447 + $0x170] sm:$0xff]
  %v4480 = vld [vmem:[%s4447 + $0x1b0] sm:$0xff]
  %v4481 = vld [vmem:[%s4447 + $0x1b8] sm:$0xff]
  %v4482 = vld [vmem:[%s4447 + $0x1c8] sm:$0xff]
  %v4483 = vld [vmem:[%s4447 + $0x1d0] sm:$0xff]
  %v4484 = vld [vmem:[%s4447 + $0x1e0] sm:$0xff]
  %v4485 = vld [vmem:[%s4447 + $0x1e8] sm:$0xff]
  %v4486 = vld [vmem:[%s4447 + $0x1f8] sm:$0xff]
  %v4487 = vld [vmem:[%s4447 + $0x200] sm:$0xff]
  %v4488 = vld [vmem:[%s4447 + $0x210] sm:$0xff]
  %v4489 = vld [vmem:[%s4447 + $0x218] sm:$0xff]
  %v4490 = vld [vmem:[%s4447 + $0x228] sm:$0xff]
  %v4491 = vld [vmem:[%s4447 + $0x230] sm:$0xff]
  %v4492 = vld [vmem:[%s4447 + $0x240] sm:$0xff]
  %v4493 = vld [vmem:[%s4447 + $0x248] sm:$0xff]
  %v4494 = vld [vmem:[%s4447 + $0x258] sm:$0xff]
  %v4495 = vld [vmem:[%s4447 + $0x260] sm:$0xff]
  %v4496 = vld [vmem:[%s4447 + $0x270] sm:$0xff]
  %v4497 = vld [vmem:[%s4447 + $0x278] sm:$0xff]
  %v4498 = vld [vmem:[%s4447 + $0x288] sm:$0xff]
  %v4499 = vld [vmem:[%s4447 + $0x290] sm:$0xff]
  %v4500 = vld [vmem:[%s4447 + $0x2a0] sm:$0xff]
  %v4501 = vld [vmem:[%s4447 + $0x2a8] sm:$0xff]
  %v4502 = vld [vmem:[%s4447 + $0x2b8] sm:$0xff]
  %v4503 = vld [vmem:[%s4447 + $0x2c0] sm:$0xff]
  %v4504 = vld [vmem:[%s4447 + $0x2d0] sm:$0xff]
  %v4505 = vld [vmem:[%s4447 + $0x2d8] sm:$0xff]
  %v4506 = vld [vmem:[%s4447 + $0x2e8] sm:$0xff]
  %v4507 = vld [vmem:[%s4447 + $0x2f0] sm:$0xff]
  %v4508 = vld [vmem:[%s4447 + $0x300] sm:$0xff]
  %v4509 = vld [vmem:[%s4447 + $0x308] sm:$0xff]
  %v4510 = vld [vmem:[%s4447 + $0x318] sm:$0xff]
  %v4511 = vld [vmem:[%s4447 + $0x320] sm:$0xff]
  %v4512 = vld [vmem:[%s4447 + $0x1] sm:$0xff]
  %v4513 = vld [vmem:[%s4447 + $0x9] sm:$0xff]
  %v4514 = vld [vmem:[%s4447 + $0x19] sm:$0xff]
  %v4515 = vld [vmem:[%s4447 + $0x21] sm:$0xff]
  %v4516 = vld [vmem:[%s4447 + $0x31] sm:$0xff]
  %v4517 = vld [vmem:[%s4447 + $0x39] sm:$0xff]
  %v4518 = vld [vmem:[%s4447 + $0x49] sm:$0xff]
  %v4519 = vld [vmem:[%s4447 + $0x51] sm:$0xff]
  %v4520 = vld [vmem:[%s4447 + $0x61] sm:$0xff]
  %v4521 = vld [vmem:[%s4447 + $0x69] sm:$0xff]
  %v4522 = vld [vmem:[%s4447 + $0x79] sm:$0xff]
  %v4523 = vld [vmem:[%s4447 + $0x81] sm:$0xff]
  %v4524 = vld [vmem:[%s4447 + $0x91] sm:$0xff]
  %v4525 = vld [vmem:[%s4447 + $0x99] sm:$0xff]
  %v4526 = vld [vmem:[%s4447 + $0xa9] sm:$0xff]
  %v4527 = vld [vmem:[%s4447 + $0xb1] sm:$0xff]
  %v4528 = vld [vmem:[%s4447 + $0xc1] sm:$0xff]
  %v4529 = vld [vmem:[%s4447 + $0xc9] sm:$0xff]
  %v4530 = vld [vmem:[%s4447 + $0xd9] sm:$0xff]
  %v4531 = vld [vmem:[%s4447 + $0xe1] sm:$0xff]
  %v4532 = vld [vmem:[%s4447 + $0xf1] sm:$0xff]
  %v4533 = vld [vmem:[%s4447 + $0xf9] sm:$0xff]
  %v4534 = vld [vmem:[%s4447 + $0x109] sm:$0xff]
  %v4535 = vld [vmem:[%s4447 + $0x111] sm:$0xff]
  %v4536 = vld [vmem:[%s4447 + $0x121] sm:$0xff]
  %v4537 = vld [vmem:[%s4447 + $0x129] sm:$0xff]
  %v4538 = vld [vmem:[%s4447 + $0x139] sm:$0xff]
  %v4539 = vld [vmem:[%s4447 + $0x141] sm:$0xff]
  %v4540 = vld [vmem:[%s4447 + $0x151] sm:$0xff]
  %v4541 = vld [vmem:[%s4447 + $0x159] sm:$0xff]
  %v4542 = vld [vmem:[%s4447 + $0x169] sm:$0xff]
  %v4543 = vld [vmem:[%s4447 + $0x171] sm:$0xff]
  %v4544 = vld [vmem:[%s4447 + $0x1b1] sm:$0xff]
  %v4545 = vld [vmem:[%s4447 + $0x1b9] sm:$0xff]
  %v4546 = vld [vmem:[%s4447 + $0x1c9] sm:$0xff]
  %v4547 = vld [vmem:[%s4447 + $0x1d1] sm:$0xff]
  %v4548 = vld [vmem:[%s4447 + $0x1e1] sm:$0xff]
  %v4549 = vld [vmem:[%s4447 + $0x1e9] sm:$0xff]
  %v4550 = vld [vmem:[%s4447 + $0x1f9] sm:$0xff]
  %v4551 = vld [vmem:[%s4447 + $0x201] sm:$0xff]
  %v4552 = vld [vmem:[%s4447 + $0x211] sm:$0xff]
  %v4553 = vld [vmem:[%s4447 + $0x219] sm:$0xff]
  %v4554 = vld [vmem:[%s4447 + $0x229] sm:$0xff]
  %v4555 = vld [vmem:[%s4447 + $0x231] sm:$0xff]
  %v4556 = vld [vmem:[%s4447 + $0x241] sm:$0xff]
  %v4557 = vld [vmem:[%s4447 + $0x249] sm:$0xff]
  %v4558 = vld [vmem:[%s4447 + $0x259] sm:$0xff]
  %v4559 = vld [vmem:[%s4447 + $0x261] sm:$0xff]
  %v4560 = vld [vmem:[%s4447 + $0x271] sm:$0xff]
  %v4561 = vld [vmem:[%s4447 + $0x279] sm:$0xff]
  %v4562 = vld [vmem:[%s4447 + $0x289] sm:$0xff]
  %v4563 = vld [vmem:[%s4447 + $0x291] sm:$0xff]
  %v4564 = vld [vmem:[%s4447 + $0x2a1] sm:$0xff]
  %v4565 = vld [vmem:[%s4447 + $0x2a9] sm:$0xff]
  %v4566 = vld [vmem:[%s4447 + $0x2b9] sm:$0xff]
  %v4567 = vld [vmem:[%s4447 + $0x2c1] sm:$0xff]
  %v4568 = vld [vmem:[%s4447 + $0x2d1] sm:$0xff]
  %v4569 = vld [vmem:[%s4447 + $0x2d9] sm:$0xff]
  %v4570 = vld [vmem:[%s4447 + $0x2e9] sm:$0xff]
  %v4571 = vld [vmem:[%s4447 + $0x2f1] sm:$0xff]
  %v4572 = vld [vmem:[%s4447 + $0x301] sm:$0xff]
  %v4573 = vld [vmem:[%s4447 + $0x309] sm:$0xff]
  %v4574 = vld [vmem:[%s4447 + $0x319] sm:$0xff]
  %v4575 = vld [vmem:[%s4447 + $0x321] sm:$0xff]
  %v4576 = vld [vmem:[%s4447 + $0x2] sm:$0xff]
  %v4577 = vld [vmem:[%s4447 + $0xa] sm:$0xff]
  %v4578 = vld [vmem:[%s4447 + $0x1a] sm:$0xff]
  %v4579 = vld [vmem:[%s4447 + $0x22] sm:$0xff]
  %v4580 = vld [vmem:[%s4447 + $0x32] sm:$0xff]
  %v4581 = vld [vmem:[%s4447 + $0x3a] sm:$0xff]
  %v4582 = vld [vmem:[%s4447 + $0x4a] sm:$0xff]
  %v4583 = vld [vmem:[%s4447 + $0x52] sm:$0xff]
  %v4584 = vld [vmem:[%s4447 + $0x62] sm:$0xff]
  %v4585 = vld [vmem:[%s4447 + $0x6a] sm:$0xff]
  %v4586 = vld [vmem:[%s4447 + $0x7a] sm:$0xff]
  %v4587 = vld [vmem:[%s4447 + $0x82] sm:$0xff]
  %v4588 = vld [vmem:[%s4447 + $0x92] sm:$0xff]
  %v4589 = vld [vmem:[%s4447 + $0x9a] sm:$0xff]
  %v4590 = vld [vmem:[%s4447 + $0xaa] sm:$0xff]
  %v4591 = vld [vmem:[%s4447 + $0xb2] sm:$0xff]
  %v4592 = vld [vmem:[%s4447 + $0xc2] sm:$0xff]
  %v4593 = vld [vmem:[%s4447 + $0xca] sm:$0xff]
  %v4594 = vld [vmem:[%s4447 + $0xda] sm:$0xff]
  %v4595 = vld [vmem:[%s4447 + $0xe2] sm:$0xff]
  %v4596 = vld [vmem:[%s4447 + $0xf2] sm:$0xff]
  %v4597 = vld [vmem:[%s4447 + $0xfa] sm:$0xff]
  %v4598 = vld [vmem:[%s4447 + $0x10a] sm:$0xff]
  %v4599 = vld [vmem:[%s4447 + $0x112] sm:$0xff]
  %v4600 = vld [vmem:[%s4447 + $0x122] sm:$0xff]
  %v4601 = vld [vmem:[%s4447 + $0x12a] sm:$0xff]
  %v4602 = vld [vmem:[%s4447 + $0x13a] sm:$0xff]
  %v4603 = vld [vmem:[%s4447 + $0x142] sm:$0xff]
  %v4604 = vld [vmem:[%s4447 + $0x152] sm:$0xff]
  %v4605 = vld [vmem:[%s4447 + $0x15a] sm:$0xff]
  %v4606 = vld [vmem:[%s4447 + $0x16a] sm:$0xff]
  %v4607 = vld [vmem:[%s4447 + $0x172] sm:$0xff]
  %v4608 = vld [vmem:[%s4447 + $0x1b2] sm:$0xff]
  %v4609 = vld [vmem:[%s4447 + $0x1ba] sm:$0xff]
  %v4610 = vld [vmem:[%s4447 + $0x1ca] sm:$0xff]
  %v4611 = vld [vmem:[%s4447 + $0x1d2] sm:$0xff]
  %v4612 = vld [vmem:[%s4447 + $0x1e2] sm:$0xff]
  %v4613 = vld [vmem:[%s4447 + $0x1ea] sm:$0xff]
  %v4614 = vld [vmem:[%s4447 + $0x1fa] sm:$0xff]
  %v4615 = vld [vmem:[%s4447 + $0x202] sm:$0xff]
  %v4616 = vld [vmem:[%s4447 + $0x212] sm:$0xff]
  %v4617 = vld [vmem:[%s4447 + $0x21a] sm:$0xff]
  %v4618 = vld [vmem:[%s4447 + $0x22a] sm:$0xff]
  %v4619 = vld [vmem:[%s4447 + $0x232] sm:$0xff]
  %v4620 = vld [vmem:[%s4447 + $0x242] sm:$0xff]
  %v4621 = vld [vmem:[%s4447 + $0x24a] sm:$0xff]
  %v4622 = vld [vmem:[%s4447 + $0x25a] sm:$0xff]
  %v4623 = vld [vmem:[%s4447 + $0x262] sm:$0xff]
  %v4624 = vld [vmem:[%s4447 + $0x272] sm:$0xff]
  %v4625 = vld [vmem:[%s4447 + $0x27a] sm:$0xff]
  %v4626 = vld [vmem:[%s4447 + $0x28a] sm:$0xff]
  %v4627 = vld [vmem:[%s4447 + $0x292] sm:$0xff]
  %v4628 = vld [vmem:[%s4447 + $0x2a2] sm:$0xff]
  %v4629 = vld [vmem:[%s4447 + $0x2aa] sm:$0xff]
  %v4630 = vld [vmem:[%s4447 + $0x2ba] sm:$0xff]
  %v4631 = vld [vmem:[%s4447 + $0x2c2] sm:$0xff]
  %v4632 = vld [vmem:[%s4447 + $0x2d2] sm:$0xff]
  %v4633 = vld [vmem:[%s4447 + $0x2da] sm:$0xff]
  %v4634 = vld [vmem:[%s4447 + $0x2ea] sm:$0xff]
  %v4635 = vld [vmem:[%s4447 + $0x2f2] sm:$0xff]
  %v4636 = vld [vmem:[%s4447 + $0x302] sm:$0xff]
  %v4637 = vld [vmem:[%s4447 + $0x30a] sm:$0xff]
  %v4638 = vld [vmem:[%s4447 + $0x31a] sm:$0xff]
  %v4639 = vld [vmem:[%s4447 + $0x322] sm:$0xff]
  %4704 = vrot.lane.b32.xlu0 %v4127, 16
  %v4705 = vpop.permute.xlu0 %4704
  %4706 = vrot.lane.b32.xlu0 %v4128, 16
  %v4707 = vpop.permute.xlu0 %4706
  %4708 = vrot.lane.b32.xlu0 %v4129, 16
  %v4709 = vpop.permute.xlu0 %4708
  %4710 = vrot.lane.b32.xlu0 %v4130, 16
  %v4711 = vpop.permute.xlu0 %4710
  %4712 = vrot.lane.b32.xlu0 %v4131, 16
  %v4713 = vpop.permute.xlu0 %4712
  %4714 = vrot.lane.b32.xlu0 %v4132, 16
  %v4715 = vpop.permute.xlu0 %4714
  %4716 = vrot.lane.b32.xlu0 %v4133, 16
  %v4717 = vpop.permute.xlu0 %4716
  %4718 = vrot.lane.b32.xlu0 %v4134, 16
  %v4719 = vpop.permute.xlu0 %4718
  %4720 = vrot.lane.b32.xlu0 %v4135, 16
  %v4721 = vpop.permute.xlu0 %4720
  %4722 = vrot.lane.b32.xlu0 %v4136, 16
  %v4723 = vpop.permute.xlu0 %4722
  %4724 = vrot.lane.b32.xlu0 %v4137, 16
  %v4725 = vpop.permute.xlu0 %4724
  %4726 = vrot.lane.b32.xlu0 %v4138, 16
  %v4727 = vpop.permute.xlu0 %4726
  %4728 = vrot.lane.b32.xlu0 %v4139, 16
  %v4729 = vpop.permute.xlu0 %4728
  %4730 = vrot.lane.b32.xlu0 %v4140, 16
  %v4731 = vpop.permute.xlu0 %4730
  %4732 = vrot.lane.b32.xlu0 %v4141, 16
  %v4733 = vpop.permute.xlu0 %4732
  %4734 = vrot.lane.b32.xlu0 %v4142, 16
  %v4735 = vpop.permute.xlu0 %4734
  %4736 = vrot.lane.b32.xlu0 %v4143, 16
  %v4737 = vpop.permute.xlu0 %4736
  %4738 = vrot.lane.b32.xlu0 %v4144, 16
  %v4739 = vpop.permute.xlu0 %4738
  %4740 = vrot.lane.b32.xlu0 %v4145, 16
  %v4741 = vpop.permute.xlu0 %4740
  %4742 = vrot.lane.b32.xlu0 %v4146, 16
  %v4743 = vpop.permute.xlu0 %4742
  %4744 = vrot.lane.b32.xlu0 %v4147, 16
  %v4745 = vpop.permute.xlu0 %4744
  %4746 = vrot.lane.b32.xlu0 %v4148, 16
  %v4747 = vpop.permute.xlu0 %4746
  %4748 = vrot.lane.b32.xlu0 %v4149, 16
  %v4749 = vpop.permute.xlu0 %4748
  %4750 = vrot.lane.b32.xlu0 %v4150, 16
  %v4751 = vpop.permute.xlu0 %4750
  %4752 = vrot.lane.b32.xlu0 %v4151, 16
  %v4753 = vpop.permute.xlu0 %4752
  %4754 = vrot.lane.b32.xlu0 %v4152, 16
  %v4755 = vpop.permute.xlu0 %4754
  %4756 = vrot.lane.b32.xlu0 %v4153, 16
  %v4757 = vpop.permute.xlu0 %4756
  %4758 = vrot.lane.b32.xlu0 %v4154, 16
  %v4759 = vpop.permute.xlu0 %4758
  %4760 = vrot.lane.b32.xlu0 %v4155, 16
  %v4761 = vpop.permute.xlu0 %4760
  %4762 = vrot.lane.b32.xlu0 %v4156, 16
  %v4763 = vpop.permute.xlu0 %4762
  %4764 = vrot.lane.b32.xlu0 %v4157, 16
  %v4765 = vpop.permute.xlu0 %4764
  %4766 = vrot.lane.b32.xlu0 %v4158, 16
  %v4767 = vpop.permute.xlu0 %4766
  %4768 = vrot.lane.b32.xlu0 %v4159, 16
  %v4769 = vpop.permute.xlu0 %4768
  %4770 = vrot.lane.b32.xlu0 %v4160, 16
  %v4771 = vpop.permute.xlu0 %4770
  %4772 = vrot.lane.b32.xlu0 %v4161, 16
  %v4773 = vpop.permute.xlu0 %4772
  %4774 = vrot.lane.b32.xlu0 %v4162, 16
  %v4775 = vpop.permute.xlu0 %4774
  %4776 = vrot.lane.b32.xlu0 %v4163, 16
  %v4777 = vpop.permute.xlu0 %4776
  %4778 = vrot.lane.b32.xlu0 %v4164, 16
  %v4779 = vpop.permute.xlu0 %4778
  %4780 = vrot.lane.b32.xlu0 %v4165, 16
  %v4781 = vpop.permute.xlu0 %4780
  %4782 = vrot.lane.b32.xlu0 %v4166, 16
  %v4783 = vpop.permute.xlu0 %4782
  %4784 = vrot.lane.b32.xlu0 %v4167, 16
  %v4785 = vpop.permute.xlu0 %4784
  %4786 = vrot.lane.b32.xlu0 %v4168, 16
  %v4787 = vpop.permute.xlu0 %4786
  %4788 = vrot.lane.b32.xlu0 %v4169, 16
  %v4789 = vpop.permute.xlu0 %4788
  %4790 = vrot.lane.b32.xlu0 %v4170, 16
  %v4791 = vpop.permute.xlu0 %4790
  %4792 = vrot.lane.b32.xlu0 %v4171, 16
  %v4793 = vpop.permute.xlu0 %4792
  %4794 = vrot.lane.b32.xlu0 %v4172, 16
  %v4795 = vpop.permute.xlu0 %4794
  %4796 = vrot.lane.b32.xlu0 %v4173, 16
  %v4797 = vpop.permute.xlu0 %4796
  %4798 = vrot.lane.b32.xlu0 %v4174, 16
  %v4799 = vpop.permute.xlu0 %4798
  %4800 = vrot.lane.b32.xlu0 %v4175, 16
  %v4801 = vpop.permute.xlu0 %4800
  %4802 = vrot.lane.b32.xlu0 %v4176, 16
  %v4803 = vpop.permute.xlu0 %4802
  %4804 = vrot.lane.b32.xlu0 %v4177, 16
  %v4805 = vpop.permute.xlu0 %4804
  %4806 = vrot.lane.b32.xlu0 %v4178, 16
  %v4807 = vpop.permute.xlu0 %4806
  %4808 = vrot.lane.b32.xlu0 %v4179, 16
  %v4809 = vpop.permute.xlu0 %4808
  %4810 = vrot.lane.b32.xlu0 %v4180, 16
  %v4811 = vpop.permute.xlu0 %4810
  %4812 = vrot.lane.b32.xlu0 %v4181, 16
  %v4813 = vpop.permute.xlu0 %4812
  %4814 = vrot.lane.b32.xlu0 %v4182, 16
  %v4815 = vpop.permute.xlu0 %4814
  %4816 = vrot.lane.b32.xlu0 %v4183, 16
  %v4817 = vpop.permute.xlu0 %4816
  %4818 = vrot.lane.b32.xlu0 %v4184, 16
  %v4819 = vpop.permute.xlu0 %4818
  %4820 = vrot.lane.b32.xlu0 %v4185, 16
  %v4821 = vpop.permute.xlu0 %4820
  %4822 = vrot.lane.b32.xlu0 %v4186, 16
  %v4823 = vpop.permute.xlu0 %4822
  %4824 = vrot.lane.b32.xlu0 %v4187, 16
  %v4825 = vpop.permute.xlu0 %4824
  %4826 = vrot.lane.b32.xlu0 %v4188, 16
  %v4827 = vpop.permute.xlu0 %4826
  %4828 = vrot.lane.b32.xlu0 %v4189, 16
  %v4829 = vpop.permute.xlu0 %4828
  %4830 = vrot.lane.b32.xlu0 %v4190, 16
  %v4831 = vpop.permute.xlu0 %4830
  %4960 = vrot.lane.b32.xlu0 %v4191, 32
  %v4961 = vpop.permute.xlu0 %4960
  %4962 = vrot.lane.b32.xlu0 %v4192, 32
  %v4963 = vpop.permute.xlu0 %4962
  %4964 = vrot.lane.b32.xlu0 %v4193, 32
  %v4965 = vpop.permute.xlu0 %4964
  %4966 = vrot.lane.b32.xlu0 %v4194, 32
  %v4967 = vpop.permute.xlu0 %4966
  %4968 = vrot.lane.b32.xlu0 %v4195, 32
  %v4969 = vpop.permute.xlu0 %4968
  %4970 = vrot.lane.b32.xlu0 %v4196, 32
  %v4971 = vpop.permute.xlu0 %4970
  %4972 = vrot.lane.b32.xlu0 %v4197, 32
  %v4973 = vpop.permute.xlu0 %4972
  %4974 = vrot.lane.b32.xlu0 %v4198, 32
  %v4975 = vpop.permute.xlu0 %4974
  %4976 = vrot.lane.b32.xlu0 %v4199, 32
  %v4977 = vpop.permute.xlu0 %4976
  %4978 = vrot.lane.b32.xlu0 %v4200, 32
  %v4979 = vpop.permute.xlu0 %4978
  %4980 = vrot.lane.b32.xlu0 %v4201, 32
  %v4981 = vpop.permute.xlu0 %4980
  %4982 = vrot.lane.b32.xlu0 %v4202, 32
  %v4983 = vpop.permute.xlu0 %4982
  %4984 = vrot.lane.b32.xlu0 %v4203, 32
  %v4985 = vpop.permute.xlu0 %4984
  %4986 = vrot.lane.b32.xlu0 %v4204, 32
  %v4987 = vpop.permute.xlu0 %4986
  %4988 = vrot.lane.b32.xlu0 %v4205, 32
  %v4989 = vpop.permute.xlu0 %4988
  %4990 = vrot.lane.b32.xlu0 %v4206, 32
  %v4991 = vpop.permute.xlu0 %4990
  %4992 = vrot.lane.b32.xlu0 %v4207, 32
  %v4993 = vpop.permute.xlu0 %4992
  %4994 = vrot.lane.b32.xlu0 %v4208, 32
  %v4995 = vpop.permute.xlu0 %4994
  %4996 = vrot.lane.b32.xlu0 %v4209, 32
  %v4997 = vpop.permute.xlu0 %4996
  %4998 = vrot.lane.b32.xlu0 %v4210, 32
  %v4999 = vpop.permute.xlu0 %4998
  %5000 = vrot.lane.b32.xlu0 %v4211, 32
  %v5001 = vpop.permute.xlu0 %5000
  %5002 = vrot.lane.b32.xlu0 %v4212, 32
  %v5003 = vpop.permute.xlu0 %5002
  %5004 = vrot.lane.b32.xlu0 %v4213, 32
  %v5005 = vpop.permute.xlu0 %5004
  %5006 = vrot.lane.b32.xlu0 %v4214, 32
  %v5007 = vpop.permute.xlu0 %5006
  %5008 = vrot.lane.b32.xlu0 %v4215, 32
  %v5009 = vpop.permute.xlu0 %5008
  %5010 = vrot.lane.b32.xlu0 %v4216, 32
  %v5011 = vpop.permute.xlu0 %5010
  %5012 = vrot.lane.b32.xlu0 %v4217, 32
  %v5013 = vpop.permute.xlu0 %5012
  %5014 = vrot.lane.b32.xlu0 %v4218, 32
  %v5015 = vpop.permute.xlu0 %5014
  %5016 = vrot.lane.b32.xlu0 %v4219, 32
  %v5017 = vpop.permute.xlu0 %5016
  %5018 = vrot.lane.b32.xlu0 %v4220, 32
  %v5019 = vpop.permute.xlu0 %5018
  %5020 = vrot.lane.b32.xlu0 %v4221, 32
  %v5021 = vpop.permute.xlu0 %5020
  %5022 = vrot.lane.b32.xlu0 %v4222, 32
  %v5023 = vpop.permute.xlu0 %5022
  %5024 = vrot.lane.b32.xlu0 %v4223, 32
  %v5025 = vpop.permute.xlu0 %5024
  %5026 = vrot.lane.b32.xlu0 %v4224, 32
  %v5027 = vpop.permute.xlu0 %5026
  %5028 = vrot.lane.b32.xlu0 %v4225, 32
  %v5029 = vpop.permute.xlu0 %5028
  %5030 = vrot.lane.b32.xlu0 %v4226, 32
  %v5031 = vpop.permute.xlu0 %5030
  %5032 = vrot.lane.b32.xlu0 %v4227, 32
  %v5033 = vpop.permute.xlu0 %5032
  %5034 = vrot.lane.b32.xlu0 %v4228, 32
  %v5035 = vpop.permute.xlu0 %5034
  %5036 = vrot.lane.b32.xlu0 %v4229, 32
  %v5037 = vpop.permute.xlu0 %5036
  %5038 = vrot.lane.b32.xlu0 %v4230, 32
  %v5039 = vpop.permute.xlu0 %5038
  %5040 = vrot.lane.b32.xlu0 %v4231, 32
  %v5041 = vpop.permute.xlu0 %5040
  %5042 = vrot.lane.b32.xlu0 %v4232, 32
  %v5043 = vpop.permute.xlu0 %5042
  %5044 = vrot.lane.b32.xlu0 %v4233, 32
  %v5045 = vpop.permute.xlu0 %5044
  %5046 = vrot.lane.b32.xlu0 %v4234, 32
  %v5047 = vpop.permute.xlu0 %5046
  %5048 = vrot.lane.b32.xlu0 %v4235, 32
  %v5049 = vpop.permute.xlu0 %5048
  %5050 = vrot.lane.b32.xlu0 %v4236, 32
  %v5051 = vpop.permute.xlu0 %5050
  %5052 = vrot.lane.b32.xlu0 %v4237, 32
  %v5053 = vpop.permute.xlu0 %5052
  %5054 = vrot.lane.b32.xlu0 %v4238, 32
  %v5055 = vpop.permute.xlu0 %5054
  %5056 = vrot.lane.b32.xlu0 %v4239, 32
  %v5057 = vpop.permute.xlu0 %5056
  %5058 = vrot.lane.b32.xlu0 %v4240, 32
  %v5059 = vpop.permute.xlu0 %5058
  %5060 = vrot.lane.b32.xlu0 %v4241, 32
  %v5061 = vpop.permute.xlu0 %5060
  %5062 = vrot.lane.b32.xlu0 %v4242, 32
  %v5063 = vpop.permute.xlu0 %5062
  %5064 = vrot.lane.b32.xlu0 %v4243, 32
  %v5065 = vpop.permute.xlu0 %5064
  %5066 = vrot.lane.b32.xlu0 %v4244, 32
  %v5067 = vpop.permute.xlu0 %5066
  %5068 = vrot.lane.b32.xlu0 %v4245, 32
  %v5069 = vpop.permute.xlu0 %5068
  %5070 = vrot.lane.b32.xlu0 %v4246, 32
  %v5071 = vpop.permute.xlu0 %5070
  %5072 = vrot.lane.b32.xlu0 %v4247, 32
  %v5073 = vpop.permute.xlu0 %5072
  %5074 = vrot.lane.b32.xlu0 %v4248, 32
  %v5075 = vpop.permute.xlu0 %5074
  %5076 = vrot.lane.b32.xlu0 %v4249, 32
  %v5077 = vpop.permute.xlu0 %5076
  %5078 = vrot.lane.b32.xlu0 %v4250, 32
  %v5079 = vpop.permute.xlu0 %5078
  %5080 = vrot.lane.b32.xlu0 %v4251, 32
  %v5081 = vpop.permute.xlu0 %5080
  %5082 = vrot.lane.b32.xlu0 %v4252, 32
  %v5083 = vpop.permute.xlu0 %5082
  %5084 = vrot.lane.b32.xlu0 %v4253, 32
  %v5085 = vpop.permute.xlu0 %5084
  %5086 = vrot.lane.b32.xlu0 %v4254, 32
  %v5087 = vpop.permute.xlu0 %5086
  %5216 = vrot.lane.b32.xlu0 %v4255, 48
  %v5217 = vpop.permute.xlu0 %5216
  %5218 = vrot.lane.b32.xlu0 %v4256, 48
  %v5219 = vpop.permute.xlu0 %5218
  %5220 = vrot.lane.b32.xlu0 %v4257, 48
  %v5221 = vpop.permute.xlu0 %5220
  %5222 = vrot.lane.b32.xlu0 %v4258, 48
  %v5223 = vpop.permute.xlu0 %5222
  %5224 = vrot.lane.b32.xlu0 %v4259, 48
  %v5225 = vpop.permute.xlu0 %5224
  %5226 = vrot.lane.b32.xlu0 %v4260, 48
  %v5227 = vpop.permute.xlu0 %5226
  %5228 = vrot.lane.b32.xlu0 %v4261, 48
  %v5229 = vpop.permute.xlu0 %5228
  %5230 = vrot.lane.b32.xlu0 %v4262, 48
  %v5231 = vpop.permute.xlu0 %5230
  %5232 = vrot.lane.b32.xlu0 %v4263, 48
  %v5233 = vpop.permute.xlu0 %5232
  %5234 = vrot.lane.b32.xlu0 %v4264, 48
  %v5235 = vpop.permute.xlu0 %5234
  %5236 = vrot.lane.b32.xlu0 %v4265, 48
  %v5237 = vpop.permute.xlu0 %5236
  %5238 = vrot.lane.b32.xlu0 %v4266, 48
  %v5239 = vpop.permute.xlu0 %5238
  %5240 = vrot.lane.b32.xlu0 %v4267, 48
  %v5241 = vpop.permute.xlu0 %5240
  %5242 = vrot.lane.b32.xlu0 %v4268, 48
  %v5243 = vpop.permute.xlu0 %5242
  %5244 = vrot.lane.b32.xlu0 %v4269, 48
  %v5245 = vpop.permute.xlu0 %5244
  %5246 = vrot.lane.b32.xlu0 %v4270, 48
  %v5247 = vpop.permute.xlu0 %5246
  %5248 = vrot.lane.b32.xlu0 %v4271, 48
  %v5249 = vpop.permute.xlu0 %5248
  %5250 = vrot.lane.b32.xlu0 %v4272, 48
  %v5251 = vpop.permute.xlu0 %5250
  %5252 = vrot.lane.b32.xlu0 %v4273, 48
  %v5253 = vpop.permute.xlu0 %5252
  %5254 = vrot.lane.b32.xlu0 %v4274, 48
  %v5255 = vpop.permute.xlu0 %5254
  %5256 = vrot.lane.b32.xlu0 %v4275, 48
  %v5257 = vpop.permute.xlu0 %5256
  %5258 = vrot.lane.b32.xlu0 %v4276, 48
  %v5259 = vpop.permute.xlu0 %5258
  %5260 = vrot.lane.b32.xlu0 %v4277, 48
  %v5261 = vpop.permute.xlu0 %5260
  %5262 = vrot.lane.b32.xlu0 %v4278, 48
  %v5263 = vpop.permute.xlu0 %5262
  %5264 = vrot.lane.b32.xlu0 %v4279, 48
  %v5265 = vpop.permute.xlu0 %5264
  %5266 = vrot.lane.b32.xlu0 %v4280, 48
  %v5267 = vpop.permute.xlu0 %5266
  %5268 = vrot.lane.b32.xlu0 %v4281, 48
  %v5269 = vpop.permute.xlu0 %5268
  %5270 = vrot.lane.b32.xlu0 %v4282, 48
  %v5271 = vpop.permute.xlu0 %5270
  %5272 = vrot.lane.b32.xlu0 %v4283, 48
  %v5273 = vpop.permute.xlu0 %5272
  %5274 = vrot.lane.b32.xlu0 %v4284, 48
  %v5275 = vpop.permute.xlu0 %5274
  %5276 = vrot.lane.b32.xlu0 %v4285, 48
  %v5277 = vpop.permute.xlu0 %5276
  %5278 = vrot.lane.b32.xlu0 %v4286, 48
  %v5279 = vpop.permute.xlu0 %5278
  %5280 = vrot.lane.b32.xlu0 %v4287, 48
  %v5281 = vpop.permute.xlu0 %5280
  %5282 = vrot.lane.b32.xlu0 %v4288, 48
  %v5283 = vpop.permute.xlu0 %5282
  %5284 = vrot.lane.b32.xlu0 %v4289, 48
  %v5285 = vpop.permute.xlu0 %5284
  %5286 = vrot.lane.b32.xlu0 %v4290, 48
  %v5287 = vpop.permute.xlu0 %5286
  %5288 = vrot.lane.b32.xlu0 %v4291, 48
  %v5289 = vpop.permute.xlu0 %5288
  %5290 = vrot.lane.b32.xlu0 %v4292, 48
  %v5291 = vpop.permute.xlu0 %5290
  %5292 = vrot.lane.b32.xlu0 %v4293, 48
  %v5293 = vpop.permute.xlu0 %5292
  %5294 = vrot.lane.b32.xlu0 %v4294, 48
  %v5295 = vpop.permute.xlu0 %5294
  %5296 = vrot.lane.b32.xlu0 %v4295, 48
  %v5297 = vpop.permute.xlu0 %5296
  %5298 = vrot.lane.b32.xlu0 %v4296, 48
  %v5299 = vpop.permute.xlu0 %5298
  %5300 = vrot.lane.b32.xlu0 %v4297, 48
  %v5301 = vpop.permute.xlu0 %5300
  %5302 = vrot.lane.b32.xlu0 %v4298, 48
  %v5303 = vpop.permute.xlu0 %5302
  %5304 = vrot.lane.b32.xlu0 %v4299, 48
  %v5305 = vpop.permute.xlu0 %5304
  %5306 = vrot.lane.b32.xlu0 %v4300, 48
  %v5307 = vpop.permute.xlu0 %5306
  %5308 = vrot.lane.b32.xlu0 %v4301, 48
  %v5309 = vpop.permute.xlu0 %5308
  %5310 = vrot.lane.b32.xlu0 %v4302, 48
  %v5311 = vpop.permute.xlu0 %5310
  %5312 = vrot.lane.b32.xlu0 %v4303, 48
  %v5313 = vpop.permute.xlu0 %5312
  %5314 = vrot.lane.b32.xlu0 %v4304, 48
  %v5315 = vpop.permute.xlu0 %5314
  %5316 = vrot.lane.b32.xlu0 %v4305, 48
  %v5317 = vpop.permute.xlu0 %5316
  %5318 = vrot.lane.b32.xlu0 %v4306, 48
  %v5319 = vpop.permute.xlu0 %5318
  %5320 = vrot.lane.b32.xlu0 %v4307, 48
  %v5321 = vpop.permute.xlu0 %5320
  %5322 = vrot.lane.b32.xlu0 %v4308, 48
  %v5323 = vpop.permute.xlu0 %5322
  %5324 = vrot.lane.b32.xlu0 %v4309, 48
  %v5325 = vpop.permute.xlu0 %5324
  %5326 = vrot.lane.b32.xlu0 %v4310, 48
  %v5327 = vpop.permute.xlu0 %5326
  %5328 = vrot.lane.b32.xlu0 %v4311, 48
  %v5329 = vpop.permute.xlu0 %5328
  %5330 = vrot.lane.b32.xlu0 %v4312, 48
  %v5331 = vpop.permute.xlu0 %5330
  %5332 = vrot.lane.b32.xlu0 %v4313, 48
  %v5333 = vpop.permute.xlu0 %5332
  %5334 = vrot.lane.b32.xlu0 %v4314, 48
  %v5335 = vpop.permute.xlu0 %5334
  %5336 = vrot.lane.b32.xlu0 %v4315, 48
  %v5337 = vpop.permute.xlu0 %5336
  %5338 = vrot.lane.b32.xlu0 %v4316, 48
  %v5339 = vpop.permute.xlu0 %5338
  %5340 = vrot.lane.b32.xlu0 %v4317, 48
  %v5341 = vpop.permute.xlu0 %5340
  %5342 = vrot.lane.b32.xlu0 %v4318, 48
  %v5343 = vpop.permute.xlu0 %5342
  %5472 = vrot.lane.b32.xlu0 %v4319, 64
  %v5473 = vpop.permute.xlu0 %5472
  %5474 = vrot.lane.b32.xlu0 %v4320, 64
  %v5475 = vpop.permute.xlu0 %5474
  %5476 = vrot.lane.b32.xlu0 %v4321, 64
  %v5477 = vpop.permute.xlu0 %5476
  %5478 = vrot.lane.b32.xlu0 %v4322, 64
  %v5479 = vpop.permute.xlu0 %5478
  %5480 = vrot.lane.b32.xlu0 %v4323, 64
  %v5481 = vpop.permute.xlu0 %5480
  %5482 = vrot.lane.b32.xlu0 %v4324, 64
  %v5483 = vpop.permute.xlu0 %5482
  %5484 = vrot.lane.b32.xlu0 %v4325, 64
  %v5485 = vpop.permute.xlu0 %5484
  %5486 = vrot.lane.b32.xlu0 %v4326, 64
  %v5487 = vpop.permute.xlu0 %5486
  %5488 = vrot.lane.b32.xlu0 %v4327, 64
  %v5489 = vpop.permute.xlu0 %5488
  %5490 = vrot.lane.b32.xlu0 %v4328, 64
  %v5491 = vpop.permute.xlu0 %5490
  %5492 = vrot.lane.b32.xlu0 %v4329, 64
  %v5493 = vpop.permute.xlu0 %5492
  %5494 = vrot.lane.b32.xlu0 %v4330, 64
  %v5495 = vpop.permute.xlu0 %5494
  %5496 = vrot.lane.b32.xlu0 %v4331, 64
  %v5497 = vpop.permute.xlu0 %5496
  %5498 = vrot.lane.b32.xlu0 %v4332, 64
  %v5499 = vpop.permute.xlu0 %5498
  %5500 = vrot.lane.b32.xlu0 %v4333, 64
  %v5501 = vpop.permute.xlu0 %5500
  %5502 = vrot.lane.b32.xlu0 %v4334, 64
  %v5503 = vpop.permute.xlu0 %5502
  %5504 = vrot.lane.b32.xlu0 %v4335, 64
  %v5505 = vpop.permute.xlu0 %5504
  %5506 = vrot.lane.b32.xlu0 %v4336, 64
  %v5507 = vpop.permute.xlu0 %5506
  %5508 = vrot.lane.b32.xlu0 %v4337, 64
  %v5509 = vpop.permute.xlu0 %5508
  %5510 = vrot.lane.b32.xlu0 %v4338, 64
  %v5511 = vpop.permute.xlu0 %5510
  %5512 = vrot.lane.b32.xlu0 %v4339, 64
  %v5513 = vpop.permute.xlu0 %5512
  %5514 = vrot.lane.b32.xlu0 %v4340, 64
  %v5515 = vpop.permute.xlu0 %5514
  %5516 = vrot.lane.b32.xlu0 %v4341, 64
  %v5517 = vpop.permute.xlu0 %5516
  %5518 = vrot.lane.b32.xlu0 %v4342, 64
  %v5519 = vpop.permute.xlu0 %5518
  %5520 = vrot.lane.b32.xlu0 %v4343, 64
  %v5521 = vpop.permute.xlu0 %5520
  %5522 = vrot.lane.b32.xlu0 %v4344, 64
  %v5523 = vpop.permute.xlu0 %5522
  %5524 = vrot.lane.b32.xlu0 %v4345, 64
  %v5525 = vpop.permute.xlu0 %5524
  %5526 = vrot.lane.b32.xlu0 %v4346, 64
  %v5527 = vpop.permute.xlu0 %5526
  %5528 = vrot.lane.b32.xlu0 %v4347, 64
  %v5529 = vpop.permute.xlu0 %5528
  %5530 = vrot.lane.b32.xlu0 %v4348, 64
  %v5531 = vpop.permute.xlu0 %5530
  %5532 = vrot.lane.b32.xlu0 %v4349, 64
  %v5533 = vpop.permute.xlu0 %5532
  %5534 = vrot.lane.b32.xlu0 %v4350, 64
  %v5535 = vpop.permute.xlu0 %5534
  %5536 = vrot.lane.b32.xlu0 %v4351, 64
  %v5537 = vpop.permute.xlu0 %5536
  %5538 = vrot.lane.b32.xlu0 %v4352, 64
  %v5539 = vpop.permute.xlu0 %5538
  %5540 = vrot.lane.b32.xlu0 %v4353, 64
  %v5541 = vpop.permute.xlu0 %5540
  %5542 = vrot.lane.b32.xlu0 %v4354, 64
  %v5543 = vpop.permute.xlu0 %5542
  %5544 = vrot.lane.b32.xlu0 %v4355, 64
  %v5545 = vpop.permute.xlu0 %5544
  %5546 = vrot.lane.b32.xlu0 %v4356, 64
  %v5547 = vpop.permute.xlu0 %5546
  %5548 = vrot.lane.b32.xlu0 %v4357, 64
  %v5549 = vpop.permute.xlu0 %5548
  %5550 = vrot.lane.b32.xlu0 %v4358, 64
  %v5551 = vpop.permute.xlu0 %5550
  %5552 = vrot.lane.b32.xlu0 %v4359, 64
  %v5553 = vpop.permute.xlu0 %5552
  %5554 = vrot.lane.b32.xlu0 %v4360, 64
  %v5555 = vpop.permute.xlu0 %5554
  %5556 = vrot.lane.b32.xlu0 %v4361, 64
  %v5557 = vpop.permute.xlu0 %5556
  %5558 = vrot.lane.b32.xlu0 %v4362, 64
  %v5559 = vpop.permute.xlu0 %5558
  %5560 = vrot.lane.b32.xlu0 %v4363, 64
  %v5561 = vpop.permute.xlu0 %5560
  %5562 = vrot.lane.b32.xlu0 %v4364, 64
  %v5563 = vpop.permute.xlu0 %5562
  %5564 = vrot.lane.b32.xlu0 %v4365, 64
  %v5565 = vpop.permute.xlu0 %5564
  %5566 = vrot.lane.b32.xlu0 %v4366, 64
  %v5567 = vpop.permute.xlu0 %5566
  %5568 = vrot.lane.b32.xlu0 %v4367, 64
  %v5569 = vpop.permute.xlu0 %5568
  %5570 = vrot.lane.b32.xlu0 %v4368, 64
  %v5571 = vpop.permute.xlu0 %5570
  %5572 = vrot.lane.b32.xlu0 %v4369, 64
  %v5573 = vpop.permute.xlu0 %5572
  %5574 = vrot.lane.b32.xlu0 %v4370, 64
  %v5575 = vpop.permute.xlu0 %5574
  %5576 = vrot.lane.b32.xlu0 %v4371, 64
  %v5577 = vpop.permute.xlu0 %5576
  %5578 = vrot.lane.b32.xlu0 %v4372, 64
  %v5579 = vpop.permute.xlu0 %5578
  %5580 = vrot.lane.b32.xlu0 %v4373, 64
  %v5581 = vpop.permute.xlu0 %5580
  %5582 = vrot.lane.b32.xlu0 %v4374, 64
  %v5583 = vpop.permute.xlu0 %5582
  %5584 = vrot.lane.b32.xlu0 %v4375, 64
  %v5585 = vpop.permute.xlu0 %5584
  %5586 = vrot.lane.b32.xlu0 %v4376, 64
  %v5587 = vpop.permute.xlu0 %5586
  %5588 = vrot.lane.b32.xlu0 %v4377, 64
  %v5589 = vpop.permute.xlu0 %5588
  %5590 = vrot.lane.b32.xlu0 %v4378, 64
  %v5591 = vpop.permute.xlu0 %5590
  %5592 = vrot.lane.b32.xlu0 %v4379, 64
  %v5593 = vpop.permute.xlu0 %5592
  %5594 = vrot.lane.b32.xlu0 %v4380, 64
  %v5595 = vpop.permute.xlu0 %5594
  %5596 = vrot.lane.b32.xlu0 %v4381, 64
  %v5597 = vpop.permute.xlu0 %5596
  %5598 = vrot.lane.b32.xlu0 %v4382, 64
  %v5599 = vpop.permute.xlu0 %5598
  %5728 = vrot.lane.b32.xlu0 %v4383, 80
  %v5729 = vpop.permute.xlu0 %5728
  %5730 = vrot.lane.b32.xlu0 %v4384, 80
  %v5731 = vpop.permute.xlu0 %5730
  %5732 = vrot.lane.b32.xlu0 %v4385, 80
  %v5733 = vpop.permute.xlu0 %5732
  %5734 = vrot.lane.b32.xlu0 %v4386, 80
  %v5735 = vpop.permute.xlu0 %5734
  %5736 = vrot.lane.b32.xlu0 %v4387, 80
  %v5737 = vpop.permute.xlu0 %5736
  %5738 = vrot.lane.b32.xlu0 %v4388, 80
  %v5739 = vpop.permute.xlu0 %5738
  %5740 = vrot.lane.b32.xlu0 %v4389, 80
  %v5741 = vpop.permute.xlu0 %5740
  %5742 = vrot.lane.b32.xlu0 %v4390, 80
  %v5743 = vpop.permute.xlu0 %5742
  %5744 = vrot.lane.b32.xlu0 %v4391, 80
  %v5745 = vpop.permute.xlu0 %5744
  %5746 = vrot.lane.b32.xlu0 %v4392, 80
  %v5747 = vpop.permute.xlu0 %5746
  %5748 = vrot.lane.b32.xlu0 %v4393, 80
  %v5749 = vpop.permute.xlu0 %5748
  %5750 = vrot.lane.b32.xlu0 %v4394, 80
  %v5751 = vpop.permute.xlu0 %5750
  %5752 = vrot.lane.b32.xlu0 %v4395, 80
  %v5753 = vpop.permute.xlu0 %5752
  %5754 = vrot.lane.b32.xlu0 %v4396, 80
  %v5755 = vpop.permute.xlu0 %5754
  %5756 = vrot.lane.b32.xlu0 %v4397, 80
  %v5757 = vpop.permute.xlu0 %5756
  %5758 = vrot.lane.b32.xlu0 %v4398, 80
  %v5759 = vpop.permute.xlu0 %5758
  %5760 = vrot.lane.b32.xlu0 %v4399, 80
  %v5761 = vpop.permute.xlu0 %5760
  %5762 = vrot.lane.b32.xlu0 %v4400, 80
  %v5763 = vpop.permute.xlu0 %5762
  %5764 = vrot.lane.b32.xlu0 %v4401, 80
  %v5765 = vpop.permute.xlu0 %5764
  %5766 = vrot.lane.b32.xlu0 %v4402, 80
  %v5767 = vpop.permute.xlu0 %5766
  %5768 = vrot.lane.b32.xlu0 %v4403, 80
  %v5769 = vpop.permute.xlu0 %5768
  %5770 = vrot.lane.b32.xlu0 %v4404, 80
  %v5771 = vpop.permute.xlu0 %5770
  %5772 = vrot.lane.b32.xlu0 %v4405, 80
  %v5773 = vpop.permute.xlu0 %5772
  %5774 = vrot.lane.b32.xlu0 %v4406, 80
  %v5775 = vpop.permute.xlu0 %5774
  %5776 = vrot.lane.b32.xlu0 %v4407, 80
  %v5777 = vpop.permute.xlu0 %5776
  %5778 = vrot.lane.b32.xlu0 %v4408, 80
  %v5779 = vpop.permute.xlu0 %5778
  %5780 = vrot.lane.b32.xlu0 %v4409, 80
  %v5781 = vpop.permute.xlu0 %5780
  %5782 = vrot.lane.b32.xlu0 %v4410, 80
  %v5783 = vpop.permute.xlu0 %5782
  %5784 = vrot.lane.b32.xlu0 %v4411, 80
  %v5785 = vpop.permute.xlu0 %5784
  %5786 = vrot.lane.b32.xlu0 %v4412, 80
  %v5787 = vpop.permute.xlu0 %5786
  %5788 = vrot.lane.b32.xlu0 %v4413, 80
  %v5789 = vpop.permute.xlu0 %5788
  %5790 = vrot.lane.b32.xlu0 %v4414, 80
  %v5791 = vpop.permute.xlu0 %5790
  %5792 = vrot.lane.b32.xlu0 %v4415, 80
  %v5793 = vpop.permute.xlu0 %5792
  %5794 = vrot.lane.b32.xlu0 %v4416, 80
  %v5795 = vpop.permute.xlu0 %5794
  %5796 = vrot.lane.b32.xlu0 %v4417, 80
  %v5797 = vpop.permute.xlu0 %5796
  %5798 = vrot.lane.b32.xlu0 %v4418, 80
  %v5799 = vpop.permute.xlu0 %5798
  %5800 = vrot.lane.b32.xlu0 %v4419, 80
  %v5801 = vpop.permute.xlu0 %5800
  %5802 = vrot.lane.b32.xlu0 %v4420, 80
  %v5803 = vpop.permute.xlu0 %5802
  %5804 = vrot.lane.b32.xlu0 %v4421, 80
  %v5805 = vpop.permute.xlu0 %5804
  %5806 = vrot.lane.b32.xlu0 %v4422, 80
  %v5807 = vpop.permute.xlu0 %5806
  %5808 = vrot.lane.b32.xlu0 %v4423, 80
  %v5809 = vpop.permute.xlu0 %5808
  %5810 = vrot.lane.b32.xlu0 %v4424, 80
  %v5811 = vpop.permute.xlu0 %5810
  %5812 = vrot.lane.b32.xlu0 %v4425, 80
  %v5813 = vpop.permute.xlu0 %5812
  %5814 = vrot.lane.b32.xlu0 %v4426, 80
  %v5815 = vpop.permute.xlu0 %5814
  %5816 = vrot.lane.b32.xlu0 %v4427, 80
  %v5817 = vpop.permute.xlu0 %5816
  %5818 = vrot.lane.b32.xlu0 %v4428, 80
  %v5819 = vpop.permute.xlu0 %5818
  %5820 = vrot.lane.b32.xlu0 %v4429, 80
  %v5821 = vpop.permute.xlu0 %5820
  %5822 = vrot.lane.b32.xlu0 %v4430, 80
  %v5823 = vpop.permute.xlu0 %5822
  %5824 = vrot.lane.b32.xlu0 %v4431, 80
  %v5825 = vpop.permute.xlu0 %5824
  %5826 = vrot.lane.b32.xlu0 %v4432, 80
  %v5827 = vpop.permute.xlu0 %5826
  %5828 = vrot.lane.b32.xlu0 %v4433, 80
  %v5829 = vpop.permute.xlu0 %5828
  %5830 = vrot.lane.b32.xlu0 %v4434, 80
  %v5831 = vpop.permute.xlu0 %5830
  %5832 = vrot.lane.b32.xlu0 %v4435, 80
  %v5833 = vpop.permute.xlu0 %5832
  %5834 = vrot.lane.b32.xlu0 %v4436, 80
  %v5835 = vpop.permute.xlu0 %5834
  %5836 = vrot.lane.b32.xlu0 %v4437, 80
  %v5837 = vpop.permute.xlu0 %5836
  %5838 = vrot.lane.b32.xlu0 %v4438, 80
  %v5839 = vpop.permute.xlu0 %5838
  %5840 = vrot.lane.b32.xlu0 %v4439, 80
  %v5841 = vpop.permute.xlu0 %5840
  %5842 = vrot.lane.b32.xlu0 %v4440, 80
  %v5843 = vpop.permute.xlu0 %5842
  %5844 = vrot.lane.b32.xlu0 %v4441, 80
  %v5845 = vpop.permute.xlu0 %5844
  %5846 = vrot.lane.b32.xlu0 %v4442, 80
  %v5847 = vpop.permute.xlu0 %5846
  %5848 = vrot.lane.b32.xlu0 %v4443, 80
  %v5849 = vpop.permute.xlu0 %5848
  %5850 = vrot.lane.b32.xlu0 %v4444, 80
  %v5851 = vpop.permute.xlu0 %5850
  %5852 = vrot.lane.b32.xlu0 %v4445, 80
  %v5853 = vpop.permute.xlu0 %5852
  %5854 = vrot.lane.b32.xlu0 %v4446, 80
  %v5855 = vpop.permute.xlu0 %5854
  %5984 = vrot.lane.b32.xlu0 %v4448, 96
  %v5985 = vpop.permute.xlu0 %5984
  %5986 = vrot.lane.b32.xlu0 %v4449, 96
  %v5987 = vpop.permute.xlu0 %5986
  %5988 = vrot.lane.b32.xlu0 %v4450, 96
  %v5989 = vpop.permute.xlu0 %5988
  %5990 = vrot.lane.b32.xlu0 %v4451, 96
  %v5991 = vpop.permute.xlu0 %5990
  %5992 = vrot.lane.b32.xlu0 %v4452, 96
  %v5993 = vpop.permute.xlu0 %5992
  %5994 = vrot.lane.b32.xlu0 %v4453, 96
  %v5995 = vpop.permute.xlu0 %5994
  %5996 = vrot.lane.b32.xlu0 %v4454, 96
  %v5997 = vpop.permute.xlu0 %5996
  %5998 = vrot.lane.b32.xlu0 %v4455, 96
  %v5999 = vpop.permute.xlu0 %5998
  %6000 = vrot.lane.b32.xlu0 %v4456, 96
  %v6001 = vpop.permute.xlu0 %6000
  %6002 = vrot.lane.b32.xlu0 %v4457, 96
  %v6003 = vpop.permute.xlu0 %6002
  %6004 = vrot.lane.b32.xlu0 %v4458, 96
  %v6005 = vpop.permute.xlu0 %6004
  %6006 = vrot.lane.b32.xlu0 %v4459, 96
  %v6007 = vpop.permute.xlu0 %6006
  %6008 = vrot.lane.b32.xlu0 %v4460, 96
  %v6009 = vpop.permute.xlu0 %6008
  %6010 = vrot.lane.b32.xlu0 %v4461, 96
  %v6011 = vpop.permute.xlu0 %6010
  %6012 = vrot.lane.b32.xlu0 %v4462, 96
  %v6013 = vpop.permute.xlu0 %6012
  %6014 = vrot.lane.b32.xlu0 %v4463, 96
  %v6015 = vpop.permute.xlu0 %6014
  %6016 = vrot.lane.b32.xlu0 %v4464, 96
  %v6017 = vpop.permute.xlu0 %6016
  %6018 = vrot.lane.b32.xlu0 %v4465, 96
  %v6019 = vpop.permute.xlu0 %6018
  %6020 = vrot.lane.b32.xlu0 %v4466, 96
  %v6021 = vpop.permute.xlu0 %6020
  %6022 = vrot.lane.b32.xlu0 %v4467, 96
  %v6023 = vpop.permute.xlu0 %6022
  %6024 = vrot.lane.b32.xlu0 %v4468, 96
  %v6025 = vpop.permute.xlu0 %6024
  %6026 = vrot.lane.b32.xlu0 %v4469, 96
  %v6027 = vpop.permute.xlu0 %6026
  %6028 = vrot.lane.b32.xlu0 %v4470, 96
  %v6029 = vpop.permute.xlu0 %6028
  %6030 = vrot.lane.b32.xlu0 %v4471, 96
  %v6031 = vpop.permute.xlu0 %6030
  %6032 = vrot.lane.b32.xlu0 %v4472, 96
  %v6033 = vpop.permute.xlu0 %6032
  %6034 = vrot.lane.b32.xlu0 %v4473, 96
  %v6035 = vpop.permute.xlu0 %6034
  %6036 = vrot.lane.b32.xlu0 %v4474, 96
  %v6037 = vpop.permute.xlu0 %6036
  %6038 = vrot.lane.b32.xlu0 %v4475, 96
  %v6039 = vpop.permute.xlu0 %6038
  %6040 = vrot.lane.b32.xlu0 %v4476, 96
  %v6041 = vpop.permute.xlu0 %6040
  %6042 = vrot.lane.b32.xlu0 %v4477, 96
  %v6043 = vpop.permute.xlu0 %6042
  %6044 = vrot.lane.b32.xlu0 %v4478, 96
  %v6045 = vpop.permute.xlu0 %6044
  %6046 = vrot.lane.b32.xlu0 %v4479, 96
  %v6047 = vpop.permute.xlu0 %6046
  %6048 = vrot.lane.b32.xlu0 %v4480, 96
  %v6049 = vpop.permute.xlu0 %6048
  %6050 = vrot.lane.b32.xlu0 %v4481, 96
  %v6051 = vpop.permute.xlu0 %6050
  %6052 = vrot.lane.b32.xlu0 %v4482, 96
  %v6053 = vpop.permute.xlu0 %6052
  %6054 = vrot.lane.b32.xlu0 %v4483, 96
  %v6055 = vpop.permute.xlu0 %6054
  %6056 = vrot.lane.b32.xlu0 %v4484, 96
  %v6057 = vpop.permute.xlu0 %6056
  %6058 = vrot.lane.b32.xlu0 %v4485, 96
  %v6059 = vpop.permute.xlu0 %6058
  %6060 = vrot.lane.b32.xlu0 %v4486, 96
  %v6061 = vpop.permute.xlu0 %6060
  %6062 = vrot.lane.b32.xlu0 %v4487, 96
  %v6063 = vpop.permute.xlu0 %6062
  %6064 = vrot.lane.b32.xlu0 %v4488, 96
  %v6065 = vpop.permute.xlu0 %6064
  %6066 = vrot.lane.b32.xlu0 %v4489, 96
  %v6067 = vpop.permute.xlu0 %6066
  %6068 = vrot.lane.b32.xlu0 %v4490, 96
  %v6069 = vpop.permute.xlu0 %6068
  %6070 = vrot.lane.b32.xlu0 %v4491, 96
  %v6071 = vpop.permute.xlu0 %6070
  %6072 = vrot.lane.b32.xlu0 %v4492, 96
  %v6073 = vpop.permute.xlu0 %6072
  %6074 = vrot.lane.b32.xlu0 %v4493, 96
  %v6075 = vpop.permute.xlu0 %6074
  %6076 = vrot.lane.b32.xlu0 %v4494, 96
  %v6077 = vpop.permute.xlu0 %6076
  %6078 = vrot.lane.b32.xlu0 %v4495, 96
  %v6079 = vpop.permute.xlu0 %6078
  %6080 = vrot.lane.b32.xlu0 %v4496, 96
  %v6081 = vpop.permute.xlu0 %6080
  %6082 = vrot.lane.b32.xlu0 %v4497, 96
  %v6083 = vpop.permute.xlu0 %6082
  %6084 = vrot.lane.b32.xlu0 %v4498, 96
  %v6085 = vpop.permute.xlu0 %6084
  %6086 = vrot.lane.b32.xlu0 %v4499, 96
  %v6087 = vpop.permute.xlu0 %6086
  %6088 = vrot.lane.b32.xlu0 %v4500, 96
  %v6089 = vpop.permute.xlu0 %6088
  %6090 = vrot.lane.b32.xlu0 %v4501, 96
  %v6091 = vpop.permute.xlu0 %6090
  %6092 = vrot.lane.b32.xlu0 %v4502, 96
  %v6093 = vpop.permute.xlu0 %6092
  %6094 = vrot.lane.b32.xlu0 %v4503, 96
  %v6095 = vpop.permute.xlu0 %6094
  %6096 = vrot.lane.b32.xlu0 %v4504, 96
  %v6097 = vpop.permute.xlu0 %6096
  %6098 = vrot.lane.b32.xlu0 %v4505, 96
  %v6099 = vpop.permute.xlu0 %6098
  %6100 = vrot.lane.b32.xlu0 %v4506, 96
  %v6101 = vpop.permute.xlu0 %6100
  %6102 = vrot.lane.b32.xlu0 %v4507, 96
  %v6103 = vpop.permute.xlu0 %6102
  %6104 = vrot.lane.b32.xlu0 %v4508, 96
  %v6105 = vpop.permute.xlu0 %6104
  %6106 = vrot.lane.b32.xlu0 %v4509, 96
  %v6107 = vpop.permute.xlu0 %6106
  %6108 = vrot.lane.b32.xlu0 %v4510, 96
  %v6109 = vpop.permute.xlu0 %6108
  %6110 = vrot.lane.b32.xlu0 %v4511, 96
  %v6111 = vpop.permute.xlu0 %6110
  %6240 = vrot.lane.b32.xlu0 %v4512, 112
  %v6241 = vpop.permute.xlu0 %6240
  %6242 = vrot.lane.b32.xlu0 %v4513, 112
  %v6243 = vpop.permute.xlu0 %6242
  %6244 = vrot.lane.b32.xlu0 %v4514, 112
  %v6245 = vpop.permute.xlu0 %6244
  %6246 = vrot.lane.b32.xlu0 %v4515, 112
  %v6247 = vpop.permute.xlu0 %6246
  %6248 = vrot.lane.b32.xlu0 %v4516, 112
  %v6249 = vpop.permute.xlu0 %6248
  %6250 = vrot.lane.b32.xlu0 %v4517, 112
  %v6251 = vpop.permute.xlu0 %6250
  %6252 = vrot.lane.b32.xlu0 %v4518, 112
  %v6253 = vpop.permute.xlu0 %6252
  %6254 = vrot.lane.b32.xlu0 %v4519, 112
  %v6255 = vpop.permute.xlu0 %6254
  %6256 = vrot.lane.b32.xlu0 %v4520, 112
  %v6257 = vpop.permute.xlu0 %6256
  %6258 = vrot.lane.b32.xlu0 %v4521, 112
  %v6259 = vpop.permute.xlu0 %6258
  %6260 = vrot.lane.b32.xlu0 %v4522, 112
  %v6261 = vpop.permute.xlu0 %6260
  %6262 = vrot.lane.b32.xlu0 %v4523, 112
  %v6263 = vpop.permute.xlu0 %6262
  %6264 = vrot.lane.b32.xlu0 %v4524, 112
  %v6265 = vpop.permute.xlu0 %6264
  %6266 = vrot.lane.b32.xlu0 %v4525, 112
  %v6267 = vpop.permute.xlu0 %6266
  %6268 = vrot.lane.b32.xlu0 %v4526, 112
  %v6269 = vpop.permute.xlu0 %6268
  %6270 = vrot.lane.b32.xlu0 %v4527, 112
  %v6271 = vpop.permute.xlu0 %6270
  %6272 = vrot.lane.b32.xlu0 %v4528, 112
  %v6273 = vpop.permute.xlu0 %6272
  %6274 = vrot.lane.b32.xlu0 %v4529, 112
  %v6275 = vpop.permute.xlu0 %6274
  %6276 = vrot.lane.b32.xlu0 %v4530, 112
  %v6277 = vpop.permute.xlu0 %6276
  %6278 = vrot.lane.b32.xlu0 %v4531, 112
  %v6279 = vpop.permute.xlu0 %6278
  %6280 = vrot.lane.b32.xlu0 %v4532, 112
  %v6281 = vpop.permute.xlu0 %6280
  %6282 = vrot.lane.b32.xlu0 %v4533, 112
  %v6283 = vpop.permute.xlu0 %6282
  %6284 = vrot.lane.b32.xlu0 %v4534, 112
  %v6285 = vpop.permute.xlu0 %6284
  %6286 = vrot.lane.b32.xlu0 %v4535, 112
  %v6287 = vpop.permute.xlu0 %6286
  %6288 = vrot.lane.b32.xlu0 %v4536, 112
  %v6289 = vpop.permute.xlu0 %6288
  %6290 = vrot.lane.b32.xlu0 %v4537, 112
  %v6291 = vpop.permute.xlu0 %6290
  %6292 = vrot.lane.b32.xlu0 %v4538, 112
  %v6293 = vpop.permute.xlu0 %6292
  %6294 = vrot.lane.b32.xlu0 %v4539, 112
  %v6295 = vpop.permute.xlu0 %6294
  %6296 = vrot.lane.b32.xlu0 %v4540, 112
  %v6297 = vpop.permute.xlu0 %6296
  %6298 = vrot.lane.b32.xlu0 %v4541, 112
  %v6299 = vpop.permute.xlu0 %6298
  %6300 = vrot.lane.b32.xlu0 %v4542, 112
  %v6301 = vpop.permute.xlu0 %6300
  %6302 = vrot.lane.b32.xlu0 %v4543, 112
  %v6303 = vpop.permute.xlu0 %6302
  %6304 = vrot.lane.b32.xlu0 %v4544, 112
  %v6305 = vpop.permute.xlu0 %6304
  %6306 = vrot.lane.b32.xlu0 %v4545, 112
  %v6307 = vpop.permute.xlu0 %6306
  %6308 = vrot.lane.b32.xlu0 %v4546, 112
  %v6309 = vpop.permute.xlu0 %6308
  %6310 = vrot.lane.b32.xlu0 %v4547, 112
  %v6311 = vpop.permute.xlu0 %6310
  %6312 = vrot.lane.b32.xlu0 %v4548, 112
  %v6313 = vpop.permute.xlu0 %6312
  %6314 = vrot.lane.b32.xlu0 %v4549, 112
  %v6315 = vpop.permute.xlu0 %6314
  %6316 = vrot.lane.b32.xlu0 %v4550, 112
  %v6317 = vpop.permute.xlu0 %6316
  %6318 = vrot.lane.b32.xlu0 %v4551, 112
  %v6319 = vpop.permute.xlu0 %6318
  %6320 = vrot.lane.b32.xlu0 %v4552, 112
  %v6321 = vpop.permute.xlu0 %6320
  %6322 = vrot.lane.b32.xlu0 %v4553, 112
  %v6323 = vpop.permute.xlu0 %6322
  %6324 = vrot.lane.b32.xlu0 %v4554, 112
  %v6325 = vpop.permute.xlu0 %6324
  %6326 = vrot.lane.b32.xlu0 %v4555, 112
  %v6327 = vpop.permute.xlu0 %6326
  %6328 = vrot.lane.b32.xlu0 %v4556, 112
  %v6329 = vpop.permute.xlu0 %6328
  %6330 = vrot.lane.b32.xlu0 %v4557, 112
  %v6331 = vpop.permute.xlu0 %6330
  %6332 = vrot.lane.b32.xlu0 %v4558, 112
  %v6333 = vpop.permute.xlu0 %6332
  %6334 = vrot.lane.b32.xlu0 %v4559, 112
  %v6335 = vpop.permute.xlu0 %6334
  %6336 = vrot.lane.b32.xlu0 %v4560, 112
  %v6337 = vpop.permute.xlu0 %6336
  %6338 = vrot.lane.b32.xlu0 %v4561, 112
  %v6339 = vpop.permute.xlu0 %6338
  %6340 = vrot.lane.b32.xlu0 %v4562, 112
  %v6341 = vpop.permute.xlu0 %6340
  %6342 = vrot.lane.b32.xlu0 %v4563, 112
  %v6343 = vpop.permute.xlu0 %6342
  %6344 = vrot.lane.b32.xlu0 %v4564, 112
  %v6345 = vpop.permute.xlu0 %6344
  %6346 = vrot.lane.b32.xlu0 %v4565, 112
  %v6347 = vpop.permute.xlu0 %6346
  %6348 = vrot.lane.b32.xlu0 %v4566, 112
  %v6349 = vpop.permute.xlu0 %6348
  %6350 = vrot.lane.b32.xlu0 %v4567, 112
  %v6351 = vpop.permute.xlu0 %6350
  %6352 = vrot.lane.b32.xlu0 %v4568, 112
  %v6353 = vpop.permute.xlu0 %6352
  %6354 = vrot.lane.b32.xlu0 %v4569, 112
  %v6355 = vpop.permute.xlu0 %6354
  %6356 = vrot.lane.b32.xlu0 %v4570, 112
  %v6357 = vpop.permute.xlu0 %6356
  %6358 = vrot.lane.b32.xlu0 %v4571, 112
  %v6359 = vpop.permute.xlu0 %6358
  %6360 = vrot.lane.b32.xlu0 %v4572, 112
  %v6361 = vpop.permute.xlu0 %6360
  %6362 = vrot.lane.b32.xlu0 %v4573, 112
  %v6363 = vpop.permute.xlu0 %6362
  %6364 = vrot.lane.b32.xlu0 %v4574, 112
  %v6365 = vpop.permute.xlu0 %6364
  %6366 = vrot.lane.b32.xlu0 %v4575, 112
  %v6367 = vpop.permute.xlu0 %6366
  %v6432 = vsel %vm3019, %v4063, %v4705
  %v6433 = vsel %vm3019, %v4064, %v4707
  %v6434 = vsel %vm3019, %v4065, %v4709
  %v6435 = vsel %vm3019, %v4066, %v4711
  %v6436 = vsel %vm3019, %v4067, %v4713
  %v6437 = vsel %vm3019, %v4068, %v4715
  %v6438 = vsel %vm3019, %v4069, %v4717
  %v6439 = vsel %vm3019, %v4070, %v4719
  %v6440 = vsel %vm3019, %v4071, %v4721
  %v6441 = vsel %vm3019, %v4072, %v4723
  %v6442 = vsel %vm3019, %v4073, %v4725
  %v6443 = vsel %vm3019, %v4074, %v4727
  %v6444 = vsel %vm3019, %v4075, %v4729
  %v6445 = vsel %vm3019, %v4076, %v4731
  %v6446 = vsel %vm3019, %v4077, %v4733
  %v6447 = vsel %vm3019, %v4078, %v4735
  %v6448 = vsel %vm3019, %v4079, %v4737
  %v6449 = vsel %vm3019, %v4080, %v4739
  %v6450 = vsel %vm3019, %v4081, %v4741
  %v6451 = vsel %vm3019, %v4082, %v4743
  %v6452 = vsel %vm3019, %v4083, %v4745
  %v6453 = vsel %vm3019, %v4084, %v4747
  %v6454 = vsel %vm3019, %v4085, %v4749
  %v6455 = vsel %vm3019, %v4086, %v4751
  %v6456 = vsel %vm3019, %v4087, %v4753
  %v6457 = vsel %vm3019, %v4088, %v4755
  %v6458 = vsel %vm3019, %v4089, %v4757
  %v6459 = vsel %vm3019, %v4090, %v4759
  %v6460 = vsel %vm3019, %v4091, %v4761
  %v6461 = vsel %vm3019, %v4092, %v4763
  %v6462 = vsel %vm3019, %v4093, %v4765
  %v6463 = vsel %vm3019, %v4094, %v4767
  %v6464 = vsel %vm3019, %v4095, %v4769
  %v6465 = vsel %vm3019, %v4096, %v4771
  %v6466 = vsel %vm3019, %v4097, %v4773
  %v6467 = vsel %vm3019, %v4098, %v4775
  %v6468 = vsel %vm3019, %v4099, %v4777
  %v6469 = vsel %vm3019, %v4100, %v4779
  %v6470 = vsel %vm3019, %v4101, %v4781
  %v6471 = vsel %vm3019, %v4102, %v4783
  %v6472 = vsel %vm3019, %v4103, %v4785
  %v6473 = vsel %vm3019, %v4104, %v4787
  %v6474 = vsel %vm3019, %v4105, %v4789
  %v6475 = vsel %vm3019, %v4106, %v4791
  %v6476 = vsel %vm3019, %v4107, %v4793
  %v6477 = vsel %vm3019, %v4108, %v4795
  %v6478 = vsel %vm3019, %v4109, %v4797
  %v6479 = vsel %vm3019, %v4110, %v4799
  %v6480 = vsel %vm3019, %v4111, %v4801
  %v6481 = vsel %vm3019, %v4112, %v4803
  %v6482 = vsel %vm3019, %v4113, %v4805
  %v6483 = vsel %vm3019, %v4114, %v4807
  %v6484 = vsel %vm3019, %v4115, %v4809
  %v6485 = vsel %vm3019, %v4116, %v4811
  %v6486 = vsel %vm3019, %v4117, %v4813
  %v6487 = vsel %vm3019, %v4118, %v4815
  %v6488 = vsel %vm3019, %v4119, %v4817
  %v6489 = vsel %vm3019, %v4120, %v4819
  %v6490 = vsel %vm3019, %v4121, %v4821
  %v6491 = vsel %vm3019, %v4122, %v4823
  %v6492 = vsel %vm3019, %v4123, %v4825
  %v6493 = vsel %vm3019, %v4124, %v4827
  %v6494 = vsel %vm3019, %v4125, %v4829
  %v6495 = vsel %vm3019, %v4126, %v4831
  %v6496 = vsel %vm3149, %v6432, %v4961
  %v6497 = vsel %vm3149, %v6433, %v4963
  %v6498 = vsel %vm3149, %v6434, %v4965
  %v6499 = vsel %vm3149, %v6435, %v4967
  %v6500 = vsel %vm3149, %v6436, %v4969
  %v6501 = vsel %vm3149, %v6437, %v4971
  %v6502 = vsel %vm3149, %v6438, %v4973
  %v6503 = vsel %vm3149, %v6439, %v4975
  %v6504 = vsel %vm3149, %v6440, %v4977
  %v6505 = vsel %vm3149, %v6441, %v4979
  %v6506 = vsel %vm3149, %v6442, %v4981
  %v6507 = vsel %vm3149, %v6443, %v4983
  %v6508 = vsel %vm3149, %v6444, %v4985
  %v6509 = vsel %vm3149, %v6445, %v4987
  %v6510 = vsel %vm3149, %v6446, %v4989
  %v6511 = vsel %vm3149, %v6447, %v4991
  %v6512 = vsel %vm3149, %v6448, %v4993
  %v6513 = vsel %vm3149, %v6449, %v4995
  %v6514 = vsel %vm3149, %v6450, %v4997
  %v6515 = vsel %vm3149, %v6451, %v4999
  %v6516 = vsel %vm3149, %v6452, %v5001
  %v6517 = vsel %vm3149, %v6453, %v5003
  %v6518 = vsel %vm3149, %v6454, %v5005
  %v6519 = vsel %vm3149, %v6455, %v5007
  %v6520 = vsel %vm3149, %v6456, %v5009
  %v6521 = vsel %vm3149, %v6457, %v5011
  %v6522 = vsel %vm3149, %v6458, %v5013
  %v6523 = vsel %vm3149, %v6459, %v5015
  %v6524 = vsel %vm3149, %v6460, %v5017
  %v6525 = vsel %vm3149, %v6461, %v5019
  %v6526 = vsel %vm3149, %v6462, %v5021
  %v6527 = vsel %vm3149, %v6463, %v5023
  %v6528 = vsel %vm3149, %v6464, %v5025
  %v6529 = vsel %vm3149, %v6465, %v5027
  %v6530 = vsel %vm3149, %v6466, %v5029
  %v6531 = vsel %vm3149, %v6467, %v5031
  %v6532 = vsel %vm3149, %v6468, %v5033
  %v6533 = vsel %vm3149, %v6469, %v5035
  %v6534 = vsel %vm3149, %v6470, %v5037
  %v6535 = vsel %vm3149, %v6471, %v5039
  %v6536 = vsel %vm3149, %v6472, %v5041
  %v6537 = vsel %vm3149, %v6473, %v5043
  %v6538 = vsel %vm3149, %v6474, %v5045
  %v6539 = vsel %vm3149, %v6475, %v5047
  %v6540 = vsel %vm3149, %v6476, %v5049
  %v6541 = vsel %vm3149, %v6477, %v5051
  %v6542 = vsel %vm3149, %v6478, %v5053
  %v6543 = vsel %vm3149, %v6479, %v5055
  %v6544 = vsel %vm3149, %v6480, %v5057
  %v6545 = vsel %vm3149, %v6481, %v5059
  %v6546 = vsel %vm3149, %v6482, %v5061
  %v6547 = vsel %vm3149, %v6483, %v5063
  %v6548 = vsel %vm3149, %v6484, %v5065
  %v6549 = vsel %vm3149, %v6485, %v5067
  %v6550 = vsel %vm3149, %v6486, %v5069
  %v6551 = vsel %vm3149, %v6487, %v5071
  %v6552 = vsel %vm3149, %v6488, %v5073
  %v6553 = vsel %vm3149, %v6489, %v5075
  %v6554 = vsel %vm3149, %v6490, %v5077
  %v6555 = vsel %vm3149, %v6491, %v5079
  %v6556 = vsel %vm3149, %v6492, %v5081
  %v6557 = vsel %vm3149, %v6493, %v5083
  %v6558 = vsel %vm3149, %v6494, %v5085
  %v6559 = vsel %vm3149, %v6495, %v5087
  %v6560 = vsel %vm3279, %v6496, %v5217
  %v6561 = vsel %vm3279, %v6497, %v5219
  %v6562 = vsel %vm3279, %v6498, %v5221
  %v6563 = vsel %vm3279, %v6499, %v5223
  %v6564 = vsel %vm3279, %v6500, %v5225
  %v6565 = vsel %vm3279, %v6501, %v5227
  %v6566 = vsel %vm3279, %v6502, %v5229
  %v6567 = vsel %vm3279, %v6503, %v5231
  %v6568 = vsel %vm3279, %v6504, %v5233
  %v6569 = vsel %vm3279, %v6505, %v5235
  %v6570 = vsel %vm3279, %v6506, %v5237
  %v6571 = vsel %vm3279, %v6507, %v5239
  %v6572 = vsel %vm3279, %v6508, %v5241
  %v6573 = vsel %vm3279, %v6509, %v5243
  %v6574 = vsel %vm3279, %v6510, %v5245
  %v6575 = vsel %vm3279, %v6511, %v5247
  %v6576 = vsel %vm3279, %v6512, %v5249
  %v6577 = vsel %vm3279, %v6513, %v5251
  %v6578 = vsel %vm3279, %v6514, %v5253
  %v6579 = vsel %vm3279, %v6515, %v5255
  %v6580 = vsel %vm3279, %v6516, %v5257
  %v6581 = vsel %vm3279, %v6517, %v5259
  %v6582 = vsel %vm3279, %v6518, %v5261
  %v6583 = vsel %vm3279, %v6519, %v5263
  %v6584 = vsel %vm3279, %v6520, %v5265
  %v6585 = vsel %vm3279, %v6521, %v5267
  %v6586 = vsel %vm3279, %v6522, %v5269
  %v6587 = vsel %vm3279, %v6523, %v5271
  %v6588 = vsel %vm3279, %v6524, %v5273
  %v6589 = vsel %vm3279, %v6525, %v5275
  %v6590 = vsel %vm3279, %v6526, %v5277
  %v6591 = vsel %vm3279, %v6527, %v5279
  %v6592 = vsel %vm3279, %v6528, %v5281
  %v6593 = vsel %vm3279, %v6529, %v5283
  %v6594 = vsel %vm3279, %v6530, %v5285
  %v6595 = vsel %vm3279, %v6531, %v5287
  %v6596 = vsel %vm3279, %v6532, %v5289
  %v6597 = vsel %vm3279, %v6533, %v5291
  %v6598 = vsel %vm3279, %v6534, %v5293
  %v6599 = vsel %vm3279, %v6535, %v5295
  %v6600 = vsel %vm3279, %v6536, %v5297
  %v6601 = vsel %vm3279, %v6537, %v5299
  %v6602 = vsel %vm3279, %v6538, %v5301
  %v6603 = vsel %vm3279, %v6539, %v5303
  %v6604 = vsel %vm3279, %v6540, %v5305
  %v6605 = vsel %vm3279, %v6541, %v5307
  %v6606 = vsel %vm3279, %v6542, %v5309
  %v6607 = vsel %vm3279, %v6543, %v5311
  %v6608 = vsel %vm3279, %v6544, %v5313
  %v6609 = vsel %vm3279, %v6545, %v5315
  %v6610 = vsel %vm3279, %v6546, %v5317
  %v6611 = vsel %vm3279, %v6547, %v5319
  %v6612 = vsel %vm3279, %v6548, %v5321
  %v6613 = vsel %vm3279, %v6549, %v5323
  %v6614 = vsel %vm3279, %v6550, %v5325
  %v6615 = vsel %vm3279, %v6551, %v5327
  %v6616 = vsel %vm3279, %v6552, %v5329
  %v6617 = vsel %vm3279, %v6553, %v5331
  %v6618 = vsel %vm3279, %v6554, %v5333
  %v6619 = vsel %vm3279, %v6555, %v5335
  %v6620 = vsel %vm3279, %v6556, %v5337
  %v6621 = vsel %vm3279, %v6557, %v5339
  %v6622 = vsel %vm3279, %v6558, %v5341
  %v6623 = vsel %vm3279, %v6559, %v5343
  %v6624 = vsel %vm3409, %v6560, %v5473
  %v6625 = vsel %vm3409, %v6561, %v5475
  %v6626 = vsel %vm3409, %v6562, %v5477
  %v6627 = vsel %vm3409, %v6563, %v5479
  %v6628 = vsel %vm3409, %v6564, %v5481
  %v6629 = vsel %vm3409, %v6565, %v5483
  %v6630 = vsel %vm3409, %v6566, %v5485
  %v6631 = vsel %vm3409, %v6567, %v5487
  %v6632 = vsel %vm3409, %v6568, %v5489
  %v6633 = vsel %vm3409, %v6569, %v5491
  %v6634 = vsel %vm3409, %v6570, %v5493
  %v6635 = vsel %vm3409, %v6571, %v5495
  %v6636 = vsel %vm3409, %v6572, %v5497
  %v6637 = vsel %vm3409, %v6573, %v5499
  %v6638 = vsel %vm3409, %v6574, %v5501
  %v6639 = vsel %vm3409, %v6575, %v5503
  %v6640 = vsel %vm3409, %v6576, %v5505
  %v6641 = vsel %vm3409, %v6577, %v5507
  %v6642 = vsel %vm3409, %v6578, %v5509
  %v6643 = vsel %vm3409, %v6579, %v5511
  %v6644 = vsel %vm3409, %v6580, %v5513
  %v6645 = vsel %vm3409, %v6581, %v5515
  %v6646 = vsel %vm3409, %v6582, %v5517
  %v6647 = vsel %vm3409, %v6583, %v5519
  %v6648 = vsel %vm3409, %v6584, %v5521
  %v6649 = vsel %vm3409, %v6585, %v5523
  %v6650 = vsel %vm3409, %v6586, %v5525
  %v6651 = vsel %vm3409, %v6587, %v5527
  %v6652 = vsel %vm3409, %v6588, %v5529
  %v6653 = vsel %vm3409, %v6589, %v5531
  %v6654 = vsel %vm3409, %v6590, %v5533
  %v6655 = vsel %vm3409, %v6591, %v5535
  %v6656 = vsel %vm3409, %v6592, %v5537
  %v6657 = vsel %vm3409, %v6593, %v5539
  %v6658 = vsel %vm3409, %v6594, %v5541
  %v6659 = vsel %vm3409, %v6595, %v5543
  %v6660 = vsel %vm3409, %v6596, %v5545
  %v6661 = vsel %vm3409, %v6597, %v5547
  %v6662 = vsel %vm3409, %v6598, %v5549
  %v6663 = vsel %vm3409, %v6599, %v5551
  %v6664 = vsel %vm3409, %v6600, %v5553
  %v6665 = vsel %vm3409, %v6601, %v5555
  %v6666 = vsel %vm3409, %v6602, %v5557
  %v6667 = vsel %vm3409, %v6603, %v5559
  %v6668 = vsel %vm3409, %v6604, %v5561
  %v6669 = vsel %vm3409, %v6605, %v5563
  %v6670 = vsel %vm3409, %v6606, %v5565
  %v6671 = vsel %vm3409, %v6607, %v5567
  %v6672 = vsel %vm3409, %v6608, %v5569
  %v6673 = vsel %vm3409, %v6609, %v5571
  %v6674 = vsel %vm3409, %v6610, %v5573
  %v6675 = vsel %vm3409, %v6611, %v5575
  %v6676 = vsel %vm3409, %v6612, %v5577
  %v6677 = vsel %vm3409, %v6613, %v5579
  %v6678 = vsel %vm3409, %v6614, %v5581
  %v6679 = vsel %vm3409, %v6615, %v5583
  %v6680 = vsel %vm3409, %v6616, %v5585
  %v6681 = vsel %vm3409, %v6617, %v5587
  %v6682 = vsel %vm3409, %v6618, %v5589
  %v6683 = vsel %vm3409, %v6619, %v5591
  %v6684 = vsel %vm3409, %v6620, %v5593
  %v6685 = vsel %vm3409, %v6621, %v5595
  %v6686 = vsel %vm3409, %v6622, %v5597
  %v6687 = vsel %vm3409, %v6623, %v5599
  %vm6688 = vcmask 654336
  %v6689 = vsel %vm6688, %v6624, %v5729
  %v6690 = vsel %vm6688, %v6625, %v5731
  %v6691 = vsel %vm6688, %v6626, %v5733
  %v6692 = vsel %vm6688, %v6627, %v5735
  %v6693 = vsel %vm6688, %v6628, %v5737
  %v6694 = vsel %vm6688, %v6629, %v5739
  %v6695 = vsel %vm6688, %v6630, %v5741
  %v6696 = vsel %vm6688, %v6631, %v5743
  %v6697 = vsel %vm6688, %v6632, %v5745
  %v6698 = vsel %vm6688, %v6633, %v5747
  %v6699 = vsel %vm6688, %v6634, %v5749
  %v6700 = vsel %vm6688, %v6635, %v5751
  %v6701 = vsel %vm6688, %v6636, %v5753
  %v6702 = vsel %vm6688, %v6637, %v5755
  %v6703 = vsel %vm6688, %v6638, %v5757
  %v6704 = vsel %vm6688, %v6639, %v5759
  %v6705 = vsel %vm6688, %v6640, %v5761
  %v6706 = vsel %vm6688, %v6641, %v5763
  %v6707 = vsel %vm6688, %v6642, %v5765
  %v6708 = vsel %vm6688, %v6643, %v5767
  %v6709 = vsel %vm6688, %v6644, %v5769
  %v6710 = vsel %vm6688, %v6645, %v5771
  %v6711 = vsel %vm6688, %v6646, %v5773
  %v6712 = vsel %vm6688, %v6647, %v5775
  %v6713 = vsel %vm6688, %v6648, %v5777
  %v6714 = vsel %vm6688, %v6649, %v5779
  %v6715 = vsel %vm6688, %v6650, %v5781
  %v6716 = vsel %vm6688, %v6651, %v5783
  %v6717 = vsel %vm6688, %v6652, %v5785
  %v6718 = vsel %vm6688, %v6653, %v5787
  %v6719 = vsel %vm6688, %v6654, %v5789
  %v6720 = vsel %vm6688, %v6655, %v5791
  %v6721 = vsel %vm6688, %v6656, %v5793
  %v6722 = vsel %vm6688, %v6657, %v5795
  %v6723 = vsel %vm6688, %v6658, %v5797
  %v6724 = vsel %vm6688, %v6659, %v5799
  %v6725 = vsel %vm6688, %v6660, %v5801
  %v6726 = vsel %vm6688, %v6661, %v5803
  %v6727 = vsel %vm6688, %v6662, %v5805
  %v6728 = vsel %vm6688, %v6663, %v5807
  %v6729 = vsel %vm6688, %v6664, %v5809
  %v6730 = vsel %vm6688, %v6665, %v5811
  %v6731 = vsel %vm6688, %v6666, %v5813
  %v6732 = vsel %vm6688, %v6667, %v5815
  %v6733 = vsel %vm6688, %v6668, %v5817
  %v6734 = vsel %vm6688, %v6669, %v5819
  %v6735 = vsel %vm6688, %v6670, %v5821
  %v6736 = vsel %vm6688, %v6671, %v5823
  %v6737 = vsel %vm6688, %v6672, %v5825
  %v6738 = vsel %vm6688, %v6673, %v5827
  %v6739 = vsel %vm6688, %v6674, %v5829
  %v6740 = vsel %vm6688, %v6675, %v5831
  %v6741 = vsel %vm6688, %v6676, %v5833
  %v6742 = vsel %vm6688, %v6677, %v5835
  %v6743 = vsel %vm6688, %v6678, %v5837
  %v6744 = vsel %vm6688, %v6679, %v5839
  %v6745 = vsel %vm6688, %v6680, %v5841
  %v6746 = vsel %vm6688, %v6681, %v5843
  %v6747 = vsel %vm6688, %v6682, %v5845
  %v6748 = vsel %vm6688, %v6683, %v5847
  %v6749 = vsel %vm6688, %v6684, %v5849
  %v6750 = vsel %vm6688, %v6685, %v5851
  %v6751 = vsel %vm6688, %v6686, %v5853
  %v6752 = vsel %vm6688, %v6687, %v5855
  %vm6753 = vcmask 785408
  %v6754 = vsel %vm6753, %v6689, %v5985
  %v6755 = vsel %vm6753, %v6690, %v5987
  %v6756 = vsel %vm6753, %v6691, %v5989
  %v6757 = vsel %vm6753, %v6692, %v5991
  %v6758 = vsel %vm6753, %v6693, %v5993
  %v6759 = vsel %vm6753, %v6694, %v5995
  %v6760 = vsel %vm6753, %v6695, %v5997
  %v6761 = vsel %vm6753, %v6696, %v5999
  %v6762 = vsel %vm6753, %v6697, %v6001
  %v6763 = vsel %vm6753, %v6698, %v6003
  %v6764 = vsel %vm6753, %v6699, %v6005
  %v6765 = vsel %vm6753, %v6700, %v6007
  %v6766 = vsel %vm6753, %v6701, %v6009
  %v6767 = vsel %vm6753, %v6702, %v6011
  %v6768 = vsel %vm6753, %v6703, %v6013
  %v6769 = vsel %vm6753, %v6704, %v6015
  %v6770 = vsel %vm6753, %v6705, %v6017
  %v6771 = vsel %vm6753, %v6706, %v6019
  %v6772 = vsel %vm6753, %v6707, %v6021
  %v6773 = vsel %vm6753, %v6708, %v6023
  %v6774 = vsel %vm6753, %v6709, %v6025
  %v6775 = vsel %vm6753, %v6710, %v6027
  %v6776 = vsel %vm6753, %v6711, %v6029
  %v6777 = vsel %vm6753, %v6712, %v6031
  %v6778 = vsel %vm6753, %v6713, %v6033
  %v6779 = vsel %vm6753, %v6714, %v6035
  %v6780 = vsel %vm6753, %v6715, %v6037
  %v6781 = vsel %vm6753, %v6716, %v6039
  %v6782 = vsel %vm6753, %v6717, %v6041
  %v6783 = vsel %vm6753, %v6718, %v6043
  %v6784 = vsel %vm6753, %v6719, %v6045
  %v6785 = vsel %vm6753, %v6720, %v6047
  %v6786 = vsel %vm6753, %v6721, %v6049
  %v6787 = vsel %vm6753, %v6722, %v6051
  %v6788 = vsel %vm6753, %v6723, %v6053
  %v6789 = vsel %vm6753, %v6724, %v6055
  %v6790 = vsel %vm6753, %v6725, %v6057
  %v6791 = vsel %vm6753, %v6726, %v6059
  %v6792 = vsel %vm6753, %v6727, %v6061
  %v6793 = vsel %vm6753, %v6728, %v6063
  %v6794 = vsel %vm6753, %v6729, %v6065
  %v6795 = vsel %vm6753, %v6730, %v6067
  %v6796 = vsel %vm6753, %v6731, %v6069
  %v6797 = vsel %vm6753, %v6732, %v6071
  %v6798 = vsel %vm6753, %v6733, %v6073
  %v6799 = vsel %vm6753, %v6734, %v6075
  %v6800 = vsel %vm6753, %v6735, %v6077
  %v6801 = vsel %vm6753, %v6736, %v6079
  %v6802 = vsel %vm6753, %v6737, %v6081
  %v6803 = vsel %vm6753, %v6738, %v6083
  %v6804 = vsel %vm6753, %v6739, %v6085
  %v6805 = vsel %vm6753, %v6740, %v6087
  %v6806 = vsel %vm6753, %v6741, %v6089
  %v6807 = vsel %vm6753, %v6742, %v6091
  %v6808 = vsel %vm6753, %v6743, %v6093
  %v6809 = vsel %vm6753, %v6744, %v6095
  %v6810 = vsel %vm6753, %v6745, %v6097
  %v6811 = vsel %vm6753, %v6746, %v6099
  %v6812 = vsel %vm6753, %v6747, %v6101
  %v6813 = vsel %vm6753, %v6748, %v6103
  %v6814 = vsel %vm6753, %v6749, %v6105
  %v6815 = vsel %vm6753, %v6750, %v6107
  %v6816 = vsel %vm6753, %v6751, %v6109
  %v6817 = vsel %vm6753, %v6752, %v6111
  %vm6818 = vcmask 916480
  %v6819 = vsel %vm6818, %v6754, %v6241
  %v6820 = vsel %vm6818, %v6755, %v6243
  %v6821 = vsel %vm6818, %v6756, %v6245
  %v6822 = vsel %vm6818, %v6757, %v6247
  %v6823 = vsel %vm6818, %v6758, %v6249
  %v6824 = vsel %vm6818, %v6759, %v6251
  %v6825 = vsel %vm6818, %v6760, %v6253
  %v6826 = vsel %vm6818, %v6761, %v6255
  %v6827 = vsel %vm6818, %v6762, %v6257
  %v6828 = vsel %vm6818, %v6763, %v6259
  %v6829 = vsel %vm6818, %v6764, %v6261
  %v6830 = vsel %vm6818, %v6765, %v6263
  %v6831 = vsel %vm6818, %v6766, %v6265
  %v6832 = vsel %vm6818, %v6767, %v6267
  %v6833 = vsel %vm6818, %v6768, %v6269
  %v6834 = vsel %vm6818, %v6769, %v6271
  %v6835 = vsel %vm6818, %v6770, %v6273
  %v6836 = vsel %vm6818, %v6771, %v6275
  %v6837 = vsel %vm6818, %v6772, %v6277
  %v6838 = vsel %vm6818, %v6773, %v6279
  %v6839 = vsel %vm6818, %v6774, %v6281
  %v6840 = vsel %vm6818, %v6775, %v6283
  %v6841 = vsel %vm6818, %v6776, %v6285
  %v6842 = vsel %vm6818, %v6777, %v6287
  %v6843 = vsel %vm6818, %v6778, %v6289
  %v6844 = vsel %vm6818, %v6779, %v6291
  %v6845 = vsel %vm6818, %v6780, %v6293
  %v6846 = vsel %vm6818, %v6781, %v6295
  %v6847 = vsel %vm6818, %v6782, %v6297
  %v6848 = vsel %vm6818, %v6783, %v6299
  %v6849 = vsel %vm6818, %v6784, %v6301
  %v6850 = vsel %vm6818, %v6785, %v6303
  %v6851 = vsel %vm6818, %v6786, %v6305
  %v6852 = vsel %vm6818, %v6787, %v6307
  %v6853 = vsel %vm6818, %v6788, %v6309
  %v6854 = vsel %vm6818, %v6789, %v6311
  %v6855 = vsel %vm6818, %v6790, %v6313
  %v6856 = vsel %vm6818, %v6791, %v6315
  %v6857 = vsel %vm6818, %v6792, %v6317
  %v6858 = vsel %vm6818, %v6793, %v6319
  %v6859 = vsel %vm6818, %v6794, %v6321
  %v6860 = vsel %vm6818, %v6795, %v6323
  %v6861 = vsel %vm6818, %v6796, %v6325
  %v6862 = vsel %vm6818, %v6797, %v6327
  %v6863 = vsel %vm6818, %v6798, %v6329
  %v6864 = vsel %vm6818, %v6799, %v6331
  %v6865 = vsel %vm6818, %v6800, %v6333
  %v6866 = vsel %vm6818, %v6801, %v6335
  %v6867 = vsel %vm6818, %v6802, %v6337
  %v6868 = vsel %vm6818, %v6803, %v6339
  %v6869 = vsel %vm6818, %v6804, %v6341
  %v6870 = vsel %vm6818, %v6805, %v6343
  %v6871 = vsel %vm6818, %v6806, %v6345
  %v6872 = vsel %vm6818, %v6807, %v6347
  %v6873 = vsel %vm6818, %v6808, %v6349
  %v6874 = vsel %vm6818, %v6809, %v6351
  %v6875 = vsel %vm6818, %v6810, %v6353
  %v6876 = vsel %vm6818, %v6811, %v6355
  %v6877 = vsel %vm6818, %v6812, %v6357
  %v6878 = vsel %vm6818, %v6813, %v6359
  %v6879 = vsel %vm6818, %v6814, %v6361
  %v6880 = vsel %vm6818, %v6815, %v6363
  %v6881 = vsel %vm6818, %v6816, %v6365
  %v6882 = vsel %vm6818, %v6817, %v6367
  %v6883 = vld [vmem:[%s3] sm:$0xff]
  %v6884 = vld [vmem:[%s3 + $0x8] sm:$0xff]
  %v6885 = vld [vmem:[%s3 + $0x10] sm:$0xff]
  %v6886 = vld [vmem:[%s3 + $0x18] sm:$0xff]
  %v6887 = vld [vmem:[%s3 + $0x20] sm:$0xff]
  %v6888 = vld [vmem:[%s3 + $0x28] sm:$0xff]
  %v6889 = vld [vmem:[%s3 + $0x30] sm:$0xff]
  %v6890 = vld [vmem:[%s3 + $0x38] sm:$0xff]
  %v6891 = vld [vmem:[%s3 + $0x40] sm:$0xff]
  %v6892 = vld [vmem:[%s3 + $0x48] sm:$0xff]
  %v6893 = vld [vmem:[%s3 + $0x50] sm:$0xff]
  %v6894 = vld [vmem:[%s3 + $0x58] sm:$0xff]
  %v6895 = vld [vmem:[%s3 + $0x60] sm:$0xff]
  %v6896 = vld [vmem:[%s3 + $0x68] sm:$0xff]
  %v6897 = vld [vmem:[%s3 + $0x70] sm:$0xff]
  %v6898 = vld [vmem:[%s3 + $0x78] sm:$0xff]
  %v6899 = vld [vmem:[%s3 + $0x80] sm:$0xff]
  %v6900 = vld [vmem:[%s3 + $0x88] sm:$0xff]
  %6901 = vxpose.xlu0.b32.start [1/16] %v6883, 128
  %6902 = vxpose.xlu0.b32.cont [2/16] %v6884, 128
  %6903 = vxpose.xlu0.b32.cont [3/16] %v6885, 128
  %6904 = vxpose.xlu0.b32.cont [4/16] %v6886, 128
  %6905 = vxpose.xlu0.b32.cont [5/16] %v6887, 128
  %6906 = vxpose.xlu0.b32.cont [6/16] %v6888, 128
  %6907 = vxpose.xlu0.b32.cont [7/16] %v6889, 128
  %6908 = vxpose.xlu0.b32.cont [8/16] %v6890, 128
  %6909 = vxpose.xlu0.b32.cont [9/16] %v6891, 128
  %6910 = vxpose.xlu0.b32.cont [10/16] %v6892, 128
  %6911 = vxpose.xlu0.b32.cont [11/16] %v6893, 128
  %6912 = vxpose.xlu0.b32.cont [12/16] %v6894, 128
  %6913 = vxpose.xlu0.b32.cont [13/16] %v6895, 128
  %6914 = vxpose.xlu0.b32.cont [14/16] %v6896, 128
  %6915 = vxpose.xlu0.b32.cont [15/16] %v6897, 128
  %6916 = vxpose.xlu0.b32.end [16/16] %v6898, 128
  %v6917 = vpop.trf.xlu0
  %v6918 = vpop.trf.xlu0
  %v6919 = vpop.trf.xlu0
  %v6920 = vpop.trf.xlu0
  %v6921 = vpop.trf.xlu0
  %v6922 = vpop.trf.xlu0
  %v6923 = vpop.trf.xlu0
  %v6924 = vpop.trf.xlu0
  %v6925 = vpop.trf.xlu0
  %v6926 = vpop.trf.xlu0
  %v6927 = vpop.trf.xlu0
  %v6928 = vpop.trf.xlu0
  %v6929 = vpop.trf.xlu0
  %v6930 = vpop.trf.xlu0
  %v6931 = vpop.trf.xlu0
  %v6932 = vpop.trf.xlu0
  %6933 = vxpose.xlu0.b32.start [1/16] %v6899, 128
  %6934 = vxpose.xlu0.b32.cont [2/16] %v6900, 128
  %6935 = vxpose.xlu0.b32.cont [3/16] 0.0, 128
  %6936 = vxpose.xlu0.b32.cont [4/16] 0.0, 128
  %6937 = vxpose.xlu0.b32.cont [5/16] 0.0, 128
  %6938 = vxpose.xlu0.b32.cont [6/16] 0.0, 128
  %6939 = vxpose.xlu0.b32.cont [7/16] 0.0, 128
  %6940 = vxpose.xlu0.b32.cont [8/16] 0.0, 128
  %6941 = vxpose.xlu0.b32.cont [9/16] 0.0, 128
  %6942 = vxpose.xlu0.b32.cont [10/16] 0.0, 128
  %6943 = vxpose.xlu0.b32.cont [11/16] 0.0, 128
  %6944 = vxpose.xlu0.b32.cont [12/16] 0.0, 128
  %6945 = vxpose.xlu0.b32.cont [13/16] 0.0, 128
  %6946 = vxpose.xlu0.b32.cont [14/16] 0.0, 128
  %6947 = vxpose.xlu0.b32.cont [15/16] 0.0, 128
  %6948 = vxpose.xlu0.b32.end [16/16] 0.0, 128
  %v6949 = vpop.trf.xlu0
  %v6950 = vpop.trf.xlu0
  %v6951 = vpop.trf.xlu0
  %v6952 = vpop.trf.xlu0
  %v6953 = vpop.trf.xlu0
  %v6954 = vpop.trf.xlu0
  %v6955 = vpop.trf.xlu0
  %v6956 = vpop.trf.xlu0
  %v6957 = vpop.trf.xlu0
  %v6958 = vpop.trf.xlu0
  %v6959 = vpop.trf.xlu0
  %v6960 = vpop.trf.xlu0
  %v6961 = vpop.trf.xlu0
  %v6962 = vpop.trf.xlu0
  %v6963 = vpop.trf.xlu0
  %v6964 = vpop.trf.xlu0
  %v6966 = vsel %vm3019, %v6949, 0
  %v6969 = vsel %vm3019, %v6950, 0
  %v6972 = vsel %vm3019, %v4576, 0
  %v6975 = vsel %vm3019, %v4577, 0
  %v6978 = vsel %vm3019, %v4578, 0
  %v6981 = vsel %vm3019, %v4579, 0
  %v6984 = vsel %vm3019, %v4580, 0
  %v6987 = vsel %vm3019, %v4581, 0
  %v6990 = vsel %vm3019, %v4582, 0
  %v6993 = vsel %vm3019, %v4583, 0
  %v6996 = vsel %vm3019, %v4584, 0
  %v6999 = vsel %vm3019, %v4585, 0
  %v7002 = vsel %vm3019, %v4586, 0
  %v7005 = vsel %vm3019, %v4587, 0
  %v7008 = vsel %vm3019, %v4588, 0
  %v7011 = vsel %vm3019, %v4589, 0
  %v7014 = vsel %vm3019, %v4590, 0
  %v7017 = vsel %vm3019, %v4591, 0
  %v7020 = vsel %vm3019, %v4592, 0
  %v7023 = vsel %vm3019, %v4593, 0
  %v7026 = vsel %vm3019, %v4594, 0
  %v7029 = vsel %vm3019, %v4595, 0
  %v7032 = vsel %vm3019, %v4596, 0
  %v7035 = vsel %vm3019, %v4597, 0
  %v7038 = vsel %vm3019, %v4598, 0
  %v7041 = vsel %vm3019, %v4599, 0
  %v7044 = vsel %vm3019, %v4600, 0
  %v7047 = vsel %vm3019, %v4601, 0
  %v7050 = vsel %vm3019, %v4602, 0
  %v7053 = vsel %vm3019, %v4603, 0
  %v7056 = vsel %vm3019, %v4604, 0
  %v7059 = vsel %vm3019, %v4605, 0
  %v7062 = vsel %vm3019, %v4606, 0
  %v7065 = vsel %vm3019, %v4607, 0
  %v7068 = vsel %vm3019, %v4608, 0
  %v7071 = vsel %vm3019, %v4609, 0
  %v7074 = vsel %vm3019, %v4610, 0
  %v7077 = vsel %vm3019, %v4611, 0
  %v7080 = vsel %vm3019, %v4612, 0
  %v7083 = vsel %vm3019, %v4613, 0
  %v7086 = vsel %vm3019, %v4614, 0
  %v7089 = vsel %vm3019, %v4615, 0
  %v7092 = vsel %vm3019, %v4616, 0
  %v7095 = vsel %vm3019, %v4617, 0
  %v7098 = vsel %vm3019, %v4618, 0
  %v7101 = vsel %vm3019, %v4619, 0
  %v7104 = vsel %vm3019, %v4620, 0
  %v7107 = vsel %vm3019, %v4621, 0
  %v7110 = vsel %vm3019, %v4622, 0
  %v7113 = vsel %vm3019, %v4623, 0
  %v7116 = vsel %vm3019, %v4624, 0
  %v7119 = vsel %vm3019, %v4625, 0
  %v7122 = vsel %vm3019, %v4626, 0
  %v7125 = vsel %vm3019, %v4627, 0
  %v7128 = vsel %vm3019, %v4628, 0
  %v7131 = vsel %vm3019, %v4629, 0
  %v7134 = vsel %vm3019, %v4630, 0
  %v7137 = vsel %vm3019, %v4631, 0
  %v7140 = vsel %vm3019, %v4632, 0
  %v7143 = vsel %vm3019, %v4633, 0
  %v7146 = vsel %vm3019, %v4634, 0
  %v7149 = vsel %vm3019, %v4635, 0
  %v7152 = vsel %vm3019, %v4636, 0
  %v7155 = vsel %vm3019, %v4637, 0
  %v7158 = vsel %vm3019, %v4638, 0
  %v7161 = vsel %vm3019, %v4639, 0
  %7163 = vmatpush.xpose.msra.mxu0 %v6834
  %7164 = vmatpush.xpose.msra.mxu0 %v6833
  %7165 = vmatpush.xpose.msra.mxu0 %v6832
  %7166 = vmatpush.xpose.msra.mxu0 %v6831
  %7167 = vmatpush.xpose.msra.mxu0 %v6830
  %7168 = vmatpush.xpose.msra.mxu0 %v6829
  %7169 = vmatpush.xpose.msra.mxu0 %v6828
  %7170 = vmatpush.xpose.msra.mxu0 %v6827
  %7171 = vmatpush.xpose.msra.mxu0 %v6826
  %7172 = vmatpush.xpose.msra.mxu0 %v6825
  %7173 = vmatpush.xpose.msra.mxu0 %v6824
  %7174 = vmatpush.xpose.msra.mxu0 %v6823
  %7175 = vmatpush.xpose.msra.mxu0 %v6822
  %7176 = vmatpush.xpose.msra.mxu0 %v6821
  %7177 = vmatpush.xpose.msra.mxu0 %v6820
  %7178 = vmatpush.xpose.msra.mxu0 %v6819
  %7179 = vmatmul.f32.gmra.mxu0 %v6917
  %v7180 = vpop.f32.mrf.mxu0
  %v7181 = vadd.f32 0.0, %v7180
  %7182 = vmatmul.f32.gmra.mxu0 %v6918
  %v7183 = vpop.f32.mrf.mxu0
  %v7184 = vadd.f32 0.0, %v7183
  %7185 = vdwg.mxu0
  %7186 = vmatpush.xpose.msra.mxu0 %v7017
  %7187 = vmatpush.xpose.msra.mxu0 %v7014
  %7188 = vmatpush.xpose.msra.mxu0 %v7011
  %7189 = vmatpush.xpose.msra.mxu0 %v7008
  %7190 = vmatpush.xpose.msra.mxu0 %v7005
  %7191 = vmatpush.xpose.msra.mxu0 %v7002
  %7192 = vmatpush.xpose.msra.mxu0 %v6999
  %7193 = vmatpush.xpose.msra.mxu0 %v6996
  %7194 = vmatpush.xpose.msra.mxu0 %v6993
  %7195 = vmatpush.xpose.msra.mxu0 %v6990
  %7196 = vmatpush.xpose.msra.mxu0 %v6987
  %7197 = vmatpush.xpose.msra.mxu0 %v6984
  %7198 = vmatpush.xpose.msra.mxu0 %v6981
  %7199 = vmatpush.xpose.msra.mxu0 %v6978
  %7200 = vmatpush.xpose.msra.mxu0 %v6975
  %7201 = vmatpush.xpose.msra.mxu0 %v6972
  %7202 = vmatmul.f32.gmra.mxu0 %v6966
  %v7203 = vpop.f32.mrf.mxu0
  %v7204 = vadd.f32 %v7181, %v7203
  %7205 = vmatmul.f32.gmra.mxu0 %v6969
  %v7206 = vpop.f32.mrf.mxu0
  %v7207 = vadd.f32 %v7184, %v7206
  %7208 = vdwg.mxu0
  %7209 = vmatpush.xpose.msra.mxu0 %v6850
  %7210 = vmatpush.xpose.msra.mxu0 %v6849
  %7211 = vmatpush.xpose.msra.mxu0 %v6848
  %7212 = vmatpush.xpose.msra.mxu0 %v6847
  %7213 = vmatpush.xpose.msra.mxu0 %v6846
  %7214 = vmatpush.xpose.msra.mxu0 %v6845
  %7215 = vmatpush.xpose.msra.mxu0 %v6844
  %7216 = vmatpush.xpose.msra.mxu0 %v6843
  %7217 = vmatpush.xpose.msra.mxu0 %v6842
  %7218 = vmatpush.xpose.msra.mxu0 %v6841
  %7219 = vmatpush.xpose.msra.mxu0 %v6840
  %7220 = vmatpush.xpose.msra.mxu0 %v6839
  %7221 = vmatpush.xpose.msra.mxu0 %v6838
  %7222 = vmatpush.xpose.msra.mxu0 %v6837
  %7223 = vmatpush.xpose.msra.mxu0 %v6836
  %7224 = vmatpush.xpose.msra.mxu0 %v6835
  %7225 = vmatmul.f32.gmra.mxu0 %v6917
  %v7226 = vpop.f32.mrf.mxu0
  %v7227 = vadd.f32 0.0, %v7226
  %7228 = vmatmul.f32.gmra.mxu0 %v6918
  %v7229 = vpop.f32.mrf.mxu0
  %v7230 = vadd.f32 0.0, %v7229
  %7231 = vdwg.mxu0
  %7232 = vmatpush.xpose.msra.mxu0 %v7065
  %7233 = vmatpush.xpose.msra.mxu0 %v7062
  %7234 = vmatpush.xpose.msra.mxu0 %v7059
  %7235 = vmatpush.xpose.msra.mxu0 %v7056
  %7236 = vmatpush.xpose.msra.mxu0 %v7053
  %7237 = vmatpush.xpose.msra.mxu0 %v7050
  %7238 = vmatpush.xpose.msra.mxu0 %v7047
  %7239 = vmatpush.xpose.msra.mxu0 %v7044
  %7240 = vmatpush.xpose.msra.mxu0 %v7041
  %7241 = vmatpush.xpose.msra.mxu0 %v7038
  %7242 = vmatpush.xpose.msra.mxu0 %v7035
  %7243 = vmatpush.xpose.msra.mxu0 %v7032
  %7244 = vmatpush.xpose.msra.mxu0 %v7029
  %7245 = vmatpush.xpose.msra.mxu0 %v7026
  %7246 = vmatpush.xpose.msra.mxu0 %v7023
  %7247 = vmatpush.xpose.msra.mxu0 %v7020
  %7248 = vmatmul.f32.gmra.mxu0 %v6966
  %v7249 = vpop.f32.mrf.mxu0
  %v7250 = vadd.f32 %v7227, %v7249
  %7251 = vmatmul.f32.gmra.mxu0 %v6969
  %v7252 = vpop.f32.mrf.mxu0
  %v7253 = vadd.f32 %v7230, %v7252
  %7254 = vdwg.mxu0
  %7255 = vmatpush.xpose.msra.mxu0 %v6866
  %7256 = vmatpush.xpose.msra.mxu0 %v6865
  %7257 = vmatpush.xpose.msra.mxu0 %v6864
  %7258 = vmatpush.xpose.msra.mxu0 %v6863
  %7259 = vmatpush.xpose.msra.mxu0 %v6862
  %7260 = vmatpush.xpose.msra.mxu0 %v6861
  %7261 = vmatpush.xpose.msra.mxu0 %v6860
  %7262 = vmatpush.xpose.msra.mxu0 %v6859
  %7263 = vmatpush.xpose.msra.mxu0 %v6858
  %7264 = vmatpush.xpose.msra.mxu0 %v6857
  %7265 = vmatpush.xpose.msra.mxu0 %v6856
  %7266 = vmatpush.xpose.msra.mxu0 %v6855
  %7267 = vmatpush.xpose.msra.mxu0 %v6854
  %7268 = vmatpush.xpose.msra.mxu0 %v6853
  %7269 = vmatpush.xpose.msra.mxu0 %v6852
  %7270 = vmatpush.xpose.msra.mxu0 %v6851
  %7271 = vmatmul.f32.gmra.mxu0 %v6917
  %v7272 = vpop.f32.mrf.mxu0
  %v7273 = vadd.f32 0.0, %v7272
  %7274 = vmatmul.f32.gmra.mxu0 %v6918
  %v7275 = vpop.f32.mrf.mxu0
  %v7276 = vadd.f32 0.0, %v7275
  %7277 = vdwg.mxu0
  %7278 = vmatpush.xpose.msra.mxu0 %v7113
  %7279 = vmatpush.xpose.msra.mxu0 %v7110
  %7280 = vmatpush.xpose.msra.mxu0 %v7107
  %7281 = vmatpush.xpose.msra.mxu0 %v7104
  %7282 = vmatpush.xpose.msra.mxu0 %v7101
  %7283 = vmatpush.xpose.msra.mxu0 %v7098
  %7284 = vmatpush.xpose.msra.mxu0 %v7095
  %7285 = vmatpush.xpose.msra.mxu0 %v7092
  %7286 = vmatpush.xpose.msra.mxu0 %v7089
  %7287 = vmatpush.xpose.msra.mxu0 %v7086
  %7288 = vmatpush.xpose.msra.mxu0 %v7083
  %7289 = vmatpush.xpose.msra.mxu0 %v7080
  %7290 = vmatpush.xpose.msra.mxu0 %v7077
  %7291 = vmatpush.xpose.msra.mxu0 %v7074
  %7292 = vmatpush.xpose.msra.mxu0 %v7071
  %7293 = vmatpush.xpose.msra.mxu0 %v7068
  %7294 = vmatmul.f32.gmra.mxu0 %v6966
  %v7295 = vpop.f32.mrf.mxu0
  %v7296 = vadd.f32 %v7273, %v7295
  %7297 = vmatmul.f32.gmra.mxu0 %v6969
  %v7298 = vpop.f32.mrf.mxu0
  %v7299 = vadd.f32 %v7276, %v7298
  %7300 = vdwg.mxu0
  %7301 = vmatpush.xpose.msra.mxu0 %v6882
  %7302 = vmatpush.xpose.msra.mxu0 %v6881
  %7303 = vmatpush.xpose.msra.mxu0 %v6880
  %7304 = vmatpush.xpose.msra.mxu0 %v6879
  %7305 = vmatpush.xpose.msra.mxu0 %v6878
  %7306 = vmatpush.xpose.msra.mxu0 %v6877
  %7307 = vmatpush.xpose.msra.mxu0 %v6876
  %7308 = vmatpush.xpose.msra.mxu0 %v6875
  %7309 = vmatpush.xpose.msra.mxu0 %v6874
  %7310 = vmatpush.xpose.msra.mxu0 %v6873
  %7311 = vmatpush.xpose.msra.mxu0 %v6872
  %7312 = vmatpush.xpose.msra.mxu0 %v6871
  %7313 = vmatpush.xpose.msra.mxu0 %v6870
  %7314 = vmatpush.xpose.msra.mxu0 %v6869
  %7315 = vmatpush.xpose.msra.mxu0 %v6868
  %7316 = vmatpush.xpose.msra.mxu0 %v6867
  %7317 = vmatmul.f32.gmra.mxu0 %v6917
  %v7318 = vpop.f32.mrf.mxu0
  %v7319 = vadd.f32 0.0, %v7318
  %7320 = vmatmul.f32.gmra.mxu0 %v6918
  %v7321 = vpop.f32.mrf.mxu0
  %v7322 = vadd.f32 0.0, %v7321
  %7323 = vdwg.mxu0
  %7324 = vmatpush.xpose.msra.mxu0 %v7161
  %7325 = vmatpush.xpose.msra.mxu0 %v7158
  %7326 = vmatpush.xpose.msra.mxu0 %v7155
  %7327 = vmatpush.xpose.msra.mxu0 %v7152
  %7328 = vmatpush.xpose.msra.mxu0 %v7149
  %7329 = vmatpush.xpose.msra.mxu0 %v7146
  %7330 = vmatpush.xpose.msra.mxu0 %v7143
  %7331 = vmatpush.xpose.msra.mxu0 %v7140
  %7332 = vmatpush.xpose.msra.mxu0 %v7137
  %7333 = vmatpush.xpose.msra.mxu0 %v7134
  %7334 = vmatpush.xpose.msra.mxu0 %v7131
  %7335 = vmatpush.xpose.msra.mxu0 %v7128
  %7336 = vmatpush.xpose.msra.mxu0 %v7125
  %7337 = vmatpush.xpose.msra.mxu0 %v7122
  %7338 = vmatpush.xpose.msra.mxu0 %v7119
  %7339 = vmatpush.xpose.msra.mxu0 %v7116
  %7340 = vmatmul.f32.gmra.mxu0 %v6966
  %v7341 = vpop.f32.mrf.mxu0
  %v7342 = vadd.f32 %v7319, %v7341
  %7343 = vmatmul.f32.gmra.mxu0 %v6969
  %v7344 = vpop.f32.mrf.mxu0
  %v7345 = vadd.f32 %v7322, %v7344
  %7346 = vdwg.mxu0
  %v7347 = vadd.f32 %v7204, %v7250
  %v7348 = vadd.f32 %v7347, %v7296
  %v7349 = vadd.f32 %v7348, %v7342
  %7350 = vadd.xlane.f32.xlu0 %v7349
  %v7351 = vpop.xlane.xlu0 %7350
  %v7352 = vadd.f32 %v7207, %v7253
  %v7353 = vadd.f32 %v7352, %v7299
  %v7354 = vadd.f32 %v7353, %v7345
  %7355 = vadd.xlane.f32.xlu0 %v7354
  %v7356 = vpop.xlane.xlu0 %7355
  %v7357 = vrcp.pop 512.0
  %v7358 = vmul.f32 512.0, %v7357
  %v7359 = vsub.f32 1.0, %v7358
  %v7360 = vmul.f32 %v7357, %v7359
  %v7361 = vadd.f32 %v7357, %v7360
  %vm7362 = vweird.f32 %v7357
  %v7363 = vsel %vm7362, %v7357, %v7361
  %v7364 = vmul.f32 %v7351, %v7363
  %v7365 = vmul.f32 %v7356, %v7363
  %v7366 = vsub.f32 %v7204, %v7364
  %v7367 = vsub.f32 %v7250, %v7364
  %v7368 = vsub.f32 %v7296, %v7364
  %v7369 = vsub.f32 %v7342, %v7364
  %v7370 = vsub.f32 %v7207, %v7365
  %v7371 = vsub.f32 %v7253, %v7365
  %v7372 = vsub.f32 %v7299, %v7365
  %v7373 = vsub.f32 %v7345, %v7365
  %v7374 = vmul.f32 %v7366, %v7366
  %v7375 = vmul.f32 %v7367, %v7367
  %v7376 = vmul.f32 %v7368, %v7368
  %v7377 = vmul.f32 %v7369, %v7369
  %v7378 = vmul.f32 %v7370, %v7370
  %v7379 = vmul.f32 %v7371, %v7371
  %v7380 = vmul.f32 %v7372, %v7372
  %v7381 = vmul.f32 %v7373, %v7373
  %v7382 = vadd.f32 %v7374, %v7375
  %v7383 = vadd.f32 %v7382, %v7376
  %v7384 = vadd.f32 %v7383, %v7377
  %7385 = vadd.xlane.f32.xlu0 %v7384
  %v7386 = vpop.xlane.xlu0 %7385
  %v7387 = vadd.f32 %v7378, %v7379
  %v7388 = vadd.f32 %v7387, %v7380
  %v7389 = vadd.f32 %v7388, %v7381
  %7390 = vadd.xlane.f32.xlu0 %v7389
  %v7391 = vpop.xlane.xlu0 %7390
  %v7392 = vmul.f32 %v7386, %v7363
  %v7393 = vmul.f32 %v7391, %v7363
  %v7394 = vadd.f32 %v7392, 1e-05
  %v7395 = vadd.f32 %v7393, 1e-05
  %v7396 = vrsqrt.pop %v7394
  %v7397 = vmul.f32 %v7396, %v7394
  %v7398 = vmul.f32 %v7397, %v7396
  %v7399 = vmul.f32 0.5, %v7398
  %v7400 = vsub.f32 1.5, %v7399
  %v7401 = vmul.f32 %v7396, %v7400
  %vm7402 = vweird.f32 %v7394
  %vm7403 = vweird.f32 %v7396
  %vm7404 = vmor %vm7402, %vm7403
  %v7405 = vsel %vm7404, %v7396, %v7401
  %v7406 = vrsqrt.pop %v7395
  %v7407 = vmul.f32 %v7406, %v7395
  %v7408 = vmul.f32 %v7407, %v7406
  %v7409 = vmul.f32 0.5, %v7408
  %v7410 = vsub.f32 1.5, %v7409
  %v7411 = vmul.f32 %v7406, %v7410
  %vm7412 = vweird.f32 %v7395
  %vm7413 = vweird.f32 %v7406
  %vm7414 = vmor %vm7412, %vm7413
  %v7415 = vsel %vm7414, %v7406, %v7411
  %v7416 = vld [vmem:[%s4] sm:$0xff]
  %v7417 = vld [vmem:[%s4 + $0x8] sm:$0xff]
  %v7418 = vmul.f32 %v7405, %v7416
  %v7419 = vmul.f32 %v7415, %v7417
  %7421 = vset.pattern.permute.xlu0 0
  %7422 = vperm.xlu0 %7421, %v7418
  %v7423 = vpop.permute.xlu0 %7422
  %7426 = vset.pattern.permute.xlu0 0
  %7427 = vperm.xlu0 %7426, %v7419
  %v7428 = vpop.permute.xlu0 %7427
  %v7430 = vmul.f32 %v7366, %v7423
  %v7431 = vmul.f32 %v7367, %v7423
  %v7432 = vmul.f32 %v7368, %v7423
  %v7433 = vmul.f32 %v7369, %v7423
  %v7434 = vmul.f32 %v7370, %v7428
  %v7435 = vmul.f32 %v7371, %v7428
  %v7436 = vmul.f32 %v7372, %v7428
  %v7437 = vmul.f32 %v7373, %v7428
  %v7438 = vld [vmem:[%s5] sm:$0xff]
  %v7439 = vld [vmem:[%s5 + $0x8] sm:$0xff]
  %7441 = vset.pattern.permute.xlu0 0
  %7442 = vperm.xlu0 %7441, %v7438
  %v7443 = vpop.permute.xlu0 %7442
  %7446 = vset.pattern.permute.xlu0 0
  %7447 = vperm.xlu0 %7446, %v7439
  %v7448 = vpop.permute.xlu0 %7447
  %v7450 = vadd.f32 %v7430, %v7443
  %v7451 = vadd.f32 %v7431, %v7443
  %v7452 = vadd.f32 %v7432, %v7443
  %v7453 = vadd.f32 %v7433, %v7443
  %v7454 = vadd.f32 %v7434, %v7448
  %v7455 = vadd.f32 %v7435, %v7448
  %v7456 = vadd.f32 %v7436, %v7448
  %v7457 = vadd.f32 %v7437, %v7448
  %7458 = vst [vmem:[%s6] sm:$0xff] %v7450
  %7459 = vst [vmem:[%s6 + $0x8] sm:$0xff] %v7451
  %7460 = vst [vmem:[%s6 + $0x10] sm:$0xff] %v7454
  %7461 = vst [vmem:[%s6 + $0x18] sm:$0xff] %v7455
  %7462 = vst [vmem:[%s6 + $0x20] sm:$0xff] %v7452
  %7463 = vst [vmem:[%s6 + $0x28] sm:$0xff] %v7453
  %7464 = vst [vmem:[%s6 + $0x30] sm:$0xff] %v7456
  %7465 = vst [vmem:[%s6 + $0x38] sm:$0xff] %v7457
  // Predicated region
  $region26: #{bottle_forward.1} parent=0 // pred_check
    _
  $region27: #{bottle_forward.1} parent=0 // pred_check_branch
    %7467 = sbr.rel (0) target = $region29
  $region28: #{bottle_forward.1} parent=0 // pred_region
    _
  $region29: #{bottle_forward.1} parent=0 // pred_fallthru
    _
  // Predicated region
  $region30: #{bottle_forward.1} parent=0 // pred_check
    _
  $region31: #{bottle_forward.1} parent=0 // pred_check_branch
    %7469 = sbr.rel (0) target = $region33
  $region32: #{bottle_forward.1} parent=0 // pred_region
    _
  $region33: #{bottle_forward.1} parent=0 // pred_fallthru
    _

</llo_original>
